<compile_context>
chip_gen: v5e
topology: v5e:2x2
jax: 0.10.0
libtpu: 0.0.40
codegen_flags: <defaults>
</compile_context>

<pallas_src>
import functools

import jax
import jax.numpy as jnp
from jax import lax
from jax.experimental import pallas as pl
from jax.experimental.pallas import tpu as pltpu


VMEM_LIMIT_BYTES = 48 * 1024 * 1024  # explicit scoped-VMEM cap (> 16/32 MiB defaults)


def _round_up(x, m):
    return ((x + m - 1) // m) * m


# ---------------------------------------------------------------------------
# Generic tiled matmul + bias (hoisted, time-independent layer-0 projection).
# ---------------------------------------------------------------------------
def _matmul_bias_kernel(x_ref, w_ref, b_ref, o_ref):
    o_ref[...] = (
        jnp.dot(x_ref[...], w_ref[...], preferred_element_type=jnp.float32)
        + b_ref[...]
    )


def pallas_matmul_bias(x, w, b, *, tm_max=512, tn_max=512):
    """y = x @ w + b, (8,128)-aligned, larger operand streamed from HBM once."""
    M, K = x.shape
    K2, N = w.shape
    assert K == K2
    tm = min(tm_max, _round_up(M, 8))
    tn = min(tn_max, _round_up(N, 128))
    Mp = _round_up(M, tm)
    Np = _round_up(N, tn)
    Kp = _round_up(K, 128)  # contraction dim kept whole per block (E/H are small)

    x_p = jnp.pad(x, ((0, Mp - M), (0, Kp - K)))
    w_p = jnp.pad(w, ((0, Kp - K), (0, Np - N)))
    b_p = jnp.pad(b.reshape(1, N), ((0, 0), (0, Np - N)))

    n_m, n_n = Mp // tm, Np // tn
    # Put the larger operand on the OUTER grid axis so its blocks are fetched
    # exactly once; the smaller operand gets re-streamed instead.
    stream_x_once = (Mp * Kp) >= (Kp * Np)
    if stream_x_once:
        grid = (n_m, n_n)
        x_map = lambda i, j: (i, 0)
        w_map = lambda i, j: (0, j)
        b_map = lambda i, j: (0, j)
        o_map = lambda i, j: (i, j)
    else:
        grid = (n_n, n_m)
        x_map = lambda j, i: (i, 0)
        w_map = lambda j, i: (0, j)
        b_map = lambda j, i: (0, j)
        o_map = lambda j, i: (i, j)

    out = pl.pallas_call(
        _matmul_bias_kernel,
        out_shape=jax.ShapeDtypeStruct((Mp, Np), jnp.float32),
        grid_spec=pltpu.PrefetchScalarGridSpec(
            num_scalar_prefetch=0,
            grid=grid,
            in_specs=[
                pl.BlockSpec((tm, Kp), x_map),
                pl.BlockSpec((Kp, tn), w_map),
                pl.BlockSpec((1, tn), b_map),
            ],
            out_specs=pl.BlockSpec((tm, tn), o_map),
        ),
        compiler_params=pltpu.CompilerParams(
            dimension_semantics=("parallel", "parallel"),
            vmem_limit_bytes=VMEM_LIMIT_BYTES,
        ),
    )(x_p, w_p, b_p)
    return out[:M, :N]


# ---------------------------------------------------------------------------
# Vocab projection that writes batch-major output directly (no final transpose).
# ---------------------------------------------------------------------------
def _vocab_proj_kernel(h_ref, w_ref, b_ref, o_ref):
    o_ref[...] = (
        jnp.dot(h_ref[...], w_ref[...], preferred_element_type=jnp.float32)
        + b_ref[...]
    )


def vocab_projection_batch_major(h_tbh, w, b, *, tn_max=512):
    """h_tbh: (T, Bp, Hp); w: (Hp, V); b: (1, V)  ->  logits (Bp, T, V)."""
    T, Bp, Hp = h_tbh.shape
    _, V = w.shape
    tn = min(tn_max, _round_up(V, 128))
    Np = _round_up(V, tn)
    n_n = Np // tn

    h2 = h_tbh.reshape(T * Bp, Hp)                    # contiguous, free reshape
    w_p = jnp.pad(w, ((0, 0), (0, Np - V)))
    b_p = jnp.pad(b.reshape(1, V), ((0, 0), (0, Np - V)))

    out = pl.pallas_call(
        _vocab_proj_kernel,
        out_shape=jax.ShapeDtypeStruct((Bp, T * Np), jnp.float32),
        grid_spec=pltpu.PrefetchScalarGridSpec(
            num_scalar_prefetch=0,
            # N outer: each (Hp, tn) weight block is fetched from HBM once,
            # then reused for every time step (the inner axis).
            grid=(n_n, T),
            in_specs=[
                pl.BlockSpec((Bp, Hp), lambda j, t: (t, 0)),
                pl.BlockSpec((Hp, tn), lambda j, t: (0, j)),
                pl.BlockSpec((1, tn), lambda j, t: (0, j)),
            ],
            # batch-major write: time t, vocab block j land at column block t*n_n+j
            out_specs=pl.BlockSpec((Bp, tn), lambda j, t: (0, t * n_n + j)),
        ),
        compiler_params=pltpu.CompilerParams(
            dimension_semantics=("parallel", "arbitrary"),
            vmem_limit_bytes=VMEM_LIMIT_BYTES,
        ),
    )(h2, w_p, b_p)
    return out.reshape(Bp, T, Np)[:, :, :V]           # (Bp, T, V), already batch-major


# ---------------------------------------------------------------------------
# Serial 2-layer LSTM recurrence: streamed over time chunks, carries in scratch.
# ---------------------------------------------------------------------------
def _lstm_recurrence_kernel(xp_ref, wf_ref, b1_ref, h_out_ref,
                            rec0_sc, c0_sc, h1_sc, c1_sc, *, Tc, Hp):
    # xp_ref:    (Tc, Bc, 4Hp)  precomputed  x_t @ W_ih0 + b_ih0 + b_hh0 (gates i,f,o,g)
    # wf_ref:    (2Hp, 8Hp)     fused [[W_hh0, W_ih1], [0, W_hh1]]
    # b1_ref:    (1, 4Hp)       pre-summed layer-1 bias
    # h_out_ref: (Tc, Bc, Hp)   layer-1 hidden states for this chunk
    # scratch:   rec0 = h0 @ W_hh0 for the next step, plus c0 / h1 / c1 carries
    @pl.when(pl.program_id(1) == 0)
    def _():
        rec0_sc[...] = jnp.zeros_like(rec0_sc)
        c0_sc[...] = jnp.zeros_like(c0_sc)
        h1_sc[...] = jnp.zeros_like(h1_sc)
        c1_sc[...] = jnp.zeros_like(c1_sc)

    wf = wf_ref[...]
    Bc = c0_sc.shape[0]
    H3 = 3 * Hp
    H4 = 4 * Hp
    # Hoisted bias broadcast (JAX does not CSE broadcast_in_dim inside the loop).
    b1 = jnp.broadcast_to(b1_ref[...], (Bc, H4))

    def act(gates, c):
        # gate column order is (i, f, o, g): ONE sigmoid over (Bc,3Hp), ONE tanh.
        sig = jax.nn.sigmoid(gates[:, :H3])
        g = jnp.tanh(gates[:, H3:])
        i = sig[:, :Hp]
        f = sig[:, Hp:2 * Hp]
        o = sig[:, 2 * Hp:H3]
        c_new = f * c + i * g
        return o * jnp.tanh(c_new), c_new

    def step(s, carry):
        rec0, c0, h1, c1 = carry
        # Layer 0: recurrent matmul already done by the previous step's fused dot.
        h0, c0 = act(xp_ref[s] + rec0, c0)
        # SINGLE MXU push on the critical path:
        #   [h0(t), h1(t-1)] @ [[W_hh0, W_ih1], [0, W_hh1]]
        #     -> [ layer-0 recurrent gates for t+1 | layer-1 gates for t ]
        fused = jnp.dot(jnp.concatenate([h0, h1], axis=1), wf,
                        preferred_element_type=jnp.float32)
        rec0 = fused[:, :H4]
        h1, c1 = act(fused[:, H4:] + b1, c1)
        h_out_ref[s] = h1
        return (rec0, c0, h1, c1)

    carry = (rec0_sc[...], c0_sc[...], h1_sc[...], c1_sc[...])
    # Tc is small and static -> fully unroll so the scheduler can interleave steps.
    rec0, c0, h1, c1 = lax.fori_loop(0, Tc, step, carry, unroll=True)
    rec0_sc[...] = rec0
    c0_sc[...] = c0
    h1_sc[...] = h1
    c1_sc[...] = c1


def lstm_recurrence(xp, w_fused, b1, Hp, *, t_chunk=16):
    """xp: (T, Bp, 4Hp) pre-activations -> layer-1 hidden states (T, Bp, Hp)."""
    T, Bp, _ = xp.shape
    Tc = min(t_chunk, T)
    Tp = _round_up(T, Tc)
    if Tp != T:
        xp = jnp.pad(xp, ((0, Tp - T), (0, 0), (0, 0)))
    n_t = Tp // Tc

    # Batch-split for v7x megacore (each core runs the full time loop on half
    # the batch); single chunk on small batches / single-TC chips.
    n_b = 2 if (Bp >= 16 and Bp % 16 == 0) else 1
    Bc = Bp // n_b

    kernel = functools.partial(_lstm_recurrence_kernel, Tc=Tc, Hp=Hp)
    h_all = pl.pallas_call(
        kernel,
        out_shape=jax.ShapeDtypeStruct((Tp, Bp, Hp), jnp.float32),
        grid_spec=pltpu.PrefetchScalarGridSpec(
            num_scalar_prefetch=0,
            grid=(n_b, n_t),
            in_specs=[
                pl.BlockSpec((Tc, Bc, 4 * Hp), lambda b, t: (t, b, 0)),
                pl.BlockSpec((2 * Hp, 8 * Hp), lambda b, t: (0, 0)),
                pl.BlockSpec((1, 4 * Hp), lambda b, t: (0, 0)),
            ],
            out_specs=pl.BlockSpec((Tc, Bc, Hp), lambda b, t: (t, b, 0)),
            scratch_shapes=[
                pltpu.VMEM((Bc, 4 * Hp), jnp.float32),   # rec0 carry (h0 @ W_hh0)
                pltpu.VMEM((Bc, Hp), jnp.float32),       # c0
                pltpu.VMEM((Bc, Hp), jnp.float32),       # h1
                pltpu.VMEM((Bc, Hp), jnp.float32),       # c1
            ],
        ),
        compiler_params=pltpu.CompilerParams(
            dimension_semantics=("parallel", "arbitrary"),
            vmem_limit_bytes=VMEM_LIMIT_BYTES,
        ),
    )(xp, w_fused, b1)
    return h_all[:T]


# ---------------------------------------------------------------------------
# Weight prep: reorder PyTorch gates (i,f,g,o) -> (i,f,o,g), pad H -> Hp.
# ---------------------------------------------------------------------------
def _prep_lstm_weight(w, H, Hp, in_pad):
    """w: (in_dim, 4H) with PyTorch gate order (i,f,g,o) along columns."""
    i, f, g, o = (w[:, k * H:(k + 1) * H] for k in range(4))
    blocks = [jnp.pad(blk, ((0, in_pad), (0, Hp - H))) for blk in (i, f, o, g)]
    return jnp.concatenate(blocks, axis=1)


# ---------------------------------------------------------------------------
# Full DecoderRNN.forward
# ---------------------------------------------------------------------------
def decoder_rnn_forward(features, captions, params, hidden_size, vocab_size):
    """Matches DecoderRNN.forward: features (B,E), captions (B,L) -> (B, L, V)."""
    B, E = features.shape
    H, V = hidden_size, vocab_size
    Hp = _round_up(H, 128)

    caps = captions[:, :-1]                                    # (B, L-1)
    emb = jnp.take(params["embed"], caps, axis=0)              # embedding gather (plain JAX)
    x = jnp.concatenate([features[:, None, :], emb], axis=1)   # (B, T, E)
    T = x.shape[1]

    Bp = _round_up(B, 8)                                       # sublane alignment
    if Bp != B:
        x = jnp.pad(x, ((0, Bp - B), (0, 0), (0, 0)))
    x_tbe = jnp.transpose(x, (1, 0, 2))                        # time-major (T, Bp, E)

    # Gate-reordered (i,f,o,g), Hp-padded weights / biases.
    w_ih0_p = _prep_lstm_weight(params["w_ih0"], H, Hp, 0)                 # (E, 4Hp)
    b0_p = _prep_lstm_weight(params["b_ih0"] + params["b_hh0"], H, Hp, 0)  # (1, 4Hp)
    w_hh0_p = _prep_lstm_weight(params["w_hh0"], H, Hp, Hp - H)            # (Hp, 4Hp)
    w_ih1_p = _prep_lstm_weight(params["w_ih1"], H, Hp, Hp - H)            # (Hp, 4Hp)
    w_hh1_p = _prep_lstm_weight(params["w_hh1"], H, Hp, Hp - H)            # (Hp, 4Hp)
    b1_p = _prep_lstm_weight(params["b_ih1"] + params["b_hh1"], H, Hp, 0)  # (1, 4Hp)
    w_fused = jnp.concatenate(
        [jnp.concatenate([w_hh0_p, w_ih1_p], axis=1),
         jnp.concatenate([jnp.zeros((Hp, 4 * Hp), jnp.float32), w_hh1_p], axis=1)],
        axis=0)                                                            # (2Hp, 8Hp)
    w_lin_p = jnp.pad(params["w_lin"], ((0, Hp - H), (0, 0)))              # (Hp, V)

    # 1) Hoisted layer-0 input projection: one big (T*Bp, E) x (E, 4Hp) matmul.
    xp = pallas_matmul_bias(x_tbe.reshape(T * Bp, E), w_ih0_p, b0_p)
    xp = xp.reshape(T, Bp, 4 * Hp)

    # 2) Serial recurrence (the only part that truly has to iterate over time).
    h1_all = lstm_recurrence(xp, w_fused, b1_p, Hp)            # (T, Bp, Hp)

    # 3) Hoisted vocab projection, written batch-major (no output transpose).
    logits = vocab_projection_batch_major(h1_all, w_lin_p, params["b_lin"])  # (Bp, T, V)
    return logits[:B]                                          # (B, T, V)


# ---------------------------------------------------------------------------
# Pure-JAX reference (lax.scan) for correctness checking.
# ---------------------------------------------------------------------------
def _reference_forward(features, captions, params, hidden_size, vocab_size):
    H = hidden_size
    caps = captions[:, :-1]
    emb = jnp.take(params["embed"], caps, axis=0)
    x = jnp.concatenate([features[:, None, :], emb], axis=1)
    x_tbe = jnp.transpose(x, (1, 0, 2))
    B = x.shape[0]

    def cell(x_t, h, c, w_ih, w_hh, b_ih, b_hh):
        gates = x_t @ w_ih + h @ w_hh + b_ih + b_hh
        i = jax.nn.sigmoid(gates[:, 0 * H:1 * H])
        f = jax.nn.sigmoid(gates[:, 1 * H:2 * H])
        g = jnp.tanh(gates[:, 2 * H:3 * H])
        o = jax.nn.sigmoid(gates[:, 3 * H:4 * H])
        c_new = f * c + i * g
        return o * jnp.tanh(c_new), c_new

    def step(carry, x_t):
        h0, c0, h1, c1 = carry
        h0, c0 = cell(x_t, h0, c0, params["w_ih0"], params["w_hh0"],
                      params["b_ih0"], params["b_hh0"])
        h1, c1 = cell(h0, h1, c1, params["w_ih1"], params["w_hh1"],
                      params["b_ih1"], params["b_hh1"])
        logits = h1 @ params["w_lin"] + params["b_lin"]
        return (h0, c0, h1, c1), logits

    z = jnp.zeros((B, H), jnp.float32)
    _, out = lax.scan(step, (z, z, z, z), x_tbe)
    return jnp.transpose(out, (1, 0, 2))


def init_params(key, embed_size, hidden_size, vocab_size):
    E, H, V = embed_size, hidden_size, vocab_size
    ks = jax.random.split(key, 11)
    u = lambda k, shape, s: jax.random.uniform(k, shape, jnp.float32, -s, s)
    bound = 1.0 / jnp.sqrt(H)
    # Weights stored pre-transposed (in_features, out_features) for x @ W.
    return {
        "embed": jax.random.normal(ks[0], (V, E), jnp.float32) * 0.1,
        "w_ih0": u(ks[1], (E, 4 * H), bound),
        "w_hh0": u(ks[2], (H, 4 * H), bound),
        "b_ih0": u(ks[3], (1, 4 * H), bound),
        "b_hh0": u(ks[4], (1, 4 * H), bound),
        "w_ih1": u(ks[5], (H, 4 * H), bound),
        "w_hh1": u(ks[6], (H, 4 * H), bound),
        "b_ih1": u(ks[7], (1, 4 * H), bound),
        "b_hh1": u(ks[8], (1, 4 * H), bound),
        "w_lin": u(ks[9], (H, V), bound),
        "b_lin": u(ks[10], (1, V), bound),
    }


if __name__ == "__main__":
    embed_size, hidden_size, vocab_size = 32, 32, 64
    B, L = 2, 8  # captions length 8 -> seq len after feature concat = 8

    key = jax.random.PRNGKey(0)
    kp, kf, kc = jax.random.split(key, 3)
    params = init_params(kp, embed_size, hidden_size, vocab_size)
    features = jax.random.normal(kf, (B, embed_size), jnp.float32)
    captions = jax.random.randint(kc, (B, L), 0, vocab_size, dtype=jnp.int32)

    fwd = jax.jit(functools.partial(decoder_rnn_forward,
                                    hidden_size=hidden_size,
                                    vocab_size=vocab_size))
    out = fwd(features, captions, params)
    out = jax.block_until_ready(out)

    ref = _reference_forward(features, captions, params, hidden_size, vocab_size)
    assert out.shape == (B, L, vocab_size)
    assert jnp.allclose(out, ref, atol=1e-4, rtol=1e-4)

    # TODO(synk): DecoderRNN.sample() (greedy decode loop) is host-side control
    # flow and is not part of forward(); not implemented here.
    print("KERNEL_OK")
</pallas_src>

<mosaic_0001>
module attributes {stable_mosaic.version = 11 : i64} {
  func.func @_matmul_bias_kernel(%arg0: i32, %arg1: i32, %arg2: memref<64x128xf32, #tpu.memory_space<vmem>>, %arg3: memref<128x512xf32, #tpu.memory_space<vmem>>, %arg4: memref<1x512xf32, #tpu.memory_space<vmem>>, %arg5: memref<64x512xf32, #tpu.memory_space<vmem>>) attributes {dimension_semantics = [#tpu.dimension_semantics<parallel>, #tpu.dimension_semantics<parallel>], iteration_bounds = array<i64: 1, 1>, scalar_prefetch = 0 : i64, scratch_operands = 0 : i64, tpu.core_type = #tpu.core_type<tc>, window_params = [{transform_indices = @transform_0, window_bounds = array<i64: 64, 128>}, {transform_indices = @transform_1, window_bounds = array<i64: 128, 512>}, {transform_indices = @transform_2, window_bounds = array<i64: 1, 512>}, {transform_indices = @transform_3, window_bounds = array<i64: 64, 512>}]} {
    %c0 = arith.constant 0 : index
    %c0_0 = arith.constant 0 : index
    %0 = vector.load %arg2[%c0, %c0_0] : memref<64x128xf32, #tpu.memory_space<vmem>>, vector<64x128xf32>
    %c0_1 = arith.constant 0 : index
    %c0_2 = arith.constant 0 : index
    %1 = vector.load %arg3[%c0_1, %c0_2] : memref<128x512xf32, #tpu.memory_space<vmem>>, vector<128x512xf32>
    %cst = arith.constant dense<0.000000e+00> : vector<64x512xf32>
    %2 = tpu.matmul %0, %1, %cst {dimension_numbers = #tpu.dot_dimension_numbers<[1], [0], [0], [1], [0, 0, 1, 1], [], []>} : vector<64x128xf32>, vector<128x512xf32>, vector<64x512xf32> -> vector<64x512xf32>
    %c0_3 = arith.constant 0 : index
    %c0_4 = arith.constant 0 : index
    %3 = vector.load %arg4[%c0_3, %c0_4] : memref<1x512xf32, #tpu.memory_space<vmem>>, vector<1x512xf32>
    %4 = vector.broadcast %3 : vector<1x512xf32> to vector<64x512xf32>
    %5 = arith.addf %2, %4 : vector<64x512xf32>
    %c0_5 = arith.constant 0 : index
    %c0_6 = arith.constant 0 : index
    %6 = vector.load %arg5[%c0_5, %c0_6] : memref<64x512xf32, #tpu.memory_space<vmem>>, vector<64x512xf32>
    tpu.vector_store %arg5[%c0_5, %c0_6], %5 {strides = array<i32>} : memref<64x512xf32, #tpu.memory_space<vmem>>, vector<64x512xf32>,
    return
  }
  func.func @transform_0(%arg0: i32, %arg1: i32) -> (i32, i32) {
    %c0_i32 = arith.constant 0 : i32
    %c0_i32_0 = arith.constant 0 : i32
    return %arg1, %c0_i32 : i32, i32
  }
  func.func @transform_1(%arg0: i32, %arg1: i32) -> (i32, i32) {
    %c0_i32 = arith.constant 0 : i32
    %c0_i32_0 = arith.constant 0 : i32
    return %c0_i32, %arg0 : i32, i32
  }
  func.func @transform_2(%arg0: i32, %arg1: i32) -> (i32, i32) {
    %c0_i32 = arith.constant 0 : i32
    %c0_i32_0 = arith.constant 0 : i32
    return %c0_i32, %arg0 : i32, i32
  }
  func.func @transform_3(%arg0: i32, %arg1: i32) -> (i32, i32) {
    %c0_i32 = arith.constant 0 : i32
    return %arg1, %arg0 : i32, i32
  }
}

module attributes {stable_mosaic.version = 11 : i64} {
  func.func @_lstm_recurrence_kernel(%arg0: i32, %arg1: i32, %arg2: memref<8x8x512xf32, #tpu.memory_space<vmem>>, %arg3: memref<256x1024xf32, #tpu.memory_space<vmem>>, %arg4: memref<1x512xf32, #tpu.memory_space<vmem>>, %arg5: memref<8x8x128xf32, #tpu.memory_space<vmem>>, %arg6: memref<8x512xf32, #tpu.memory_space<vmem>>, %arg7: memref<8x128xf32, #tpu.memory_space<vmem>>, %arg8: memref<8x128xf32, #tpu.memory_space<vmem>>, %arg9: memref<8x128xf32, #tpu.memory_space<vmem>>) attributes {dimension_semantics = [#tpu.dimension_semantics<parallel>, #tpu.dimension_semantics<arbitrary>], iteration_bounds = array<i64: 1, 1>, scalar_prefetch = 0 : i64, scratch_operands = 4 : i64, tpu.core_type = #tpu.core_type<tc>, window_params = [{transform_indices = @transform_0, window_bounds = array<i64: 8, 8, 512>}, {pipeline_mode = #tpu.pipeline_mode<synchronous>, transform_indices = @transform_1, window_bounds = array<i64: 256, 1024>}, {pipeline_mode = #tpu.pipeline_mode<synchronous>, transform_indices = @transform_2, window_bounds = array<i64: 1, 512>}, {transform_indices = @transform_3, window_bounds = array<i64: 8, 8, 128>}]} {
    %c0_i32 = arith.constant 0 : i32
    %0 = arith.cmpi eq, %arg1, %c0_i32 : i32
    %1 = arith.extui %0 : i1 to i32
    %c0_i32_0 = arith.constant 0 : i32
    %2 = arith.cmpi ne, %1, %c0_i32_0 : i32
    scf.if %2 {
      %cst_76 = arith.constant 0.000000e+00 : f32
      %375 = vector.broadcast %cst_76 : f32 to vector<8x512xf32>
      %c0_77 = arith.constant 0 : index
      %c0_78 = arith.constant 0 : index
      %376 = vector.load %arg6[%c0_77, %c0_78] : memref<8x512xf32, #tpu.memory_space<vmem>>, vector<8x512xf32>
      tpu.vector_store %arg6[%c0_77, %c0_78], %375 {strides = array<i32>} : memref<8x512xf32, #tpu.memory_space<vmem>>, vector<8x512xf32>,
      %cst_79 = arith.constant 0.000000e+00 : f32
      %377 = vector.broadcast %cst_79 : f32 to vector<8x128xf32>
      %c0_80 = arith.constant 0 : index
      %c0_81 = arith.constant 0 : index
      %378 = vector.load %arg7[%c0_80, %c0_81] : memref<8x128xf32, #tpu.memory_space<vmem>>, vector<8x128xf32>
      tpu.vector_store %arg7[%c0_80, %c0_81], %377 {strides = array<i32>} : memref<8x128xf32, #tpu.memory_space<vmem>>, vector<8x128xf32>,
      %cst_82 = arith.constant 0.000000e+00 : f32
      %379 = vector.broadcast %cst_82 : f32 to vector<8x128xf32>
      %c0_83 = arith.constant 0 : index
      %c0_84 = arith.constant 0 : index
      %380 = vector.load %arg8[%c0_83, %c0_84] : memref<8x128xf32, #tpu.memory_space<vmem>>, vector<8x128xf32>
      tpu.vector_store %arg8[%c0_83, %c0_84], %379 {strides = array<i32>} : memref<8x128xf32, #tpu.memory_space<vmem>>, vector<8x128xf32>,
      %cst_85 = arith.constant 0.000000e+00 : f32
      %381 = vector.broadcast %cst_85 : f32 to vector<8x128xf32>
      %c0_86 = arith.constant 0 : index
      %c0_87 = arith.constant 0 : index
      %382 = vector.load %arg9[%c0_86, %c0_87] : memref<8x128xf32, #tpu.memory_space<vmem>>, vector<8x128xf32>
      tpu.vector_store %arg9[%c0_86, %c0_87], %381 {strides = array<i32>} : memref<8x128xf32, #tpu.memory_space<vmem>>, vector<8x128xf32>,
    } else {
    }
    %c0 = arith.constant 0 : index
    %c0_1 = arith.constant 0 : index
    %3 = vector.load %arg3[%c0, %c0_1] : memref<256x1024xf32, #tpu.memory_space<vmem>>, vector<256x1024xf32>
    %c0_2 = arith.constant 0 : index
    %c0_3 = arith.constant 0 : index
    %4 = vector.load %arg4[%c0_2, %c0_3] : memref<1x512xf32, #tpu.memory_space<vmem>>, vector<1x512xf32>
    %5 = vector.shape_cast %4 : vector<1x512xf32> to vector<1x512xf32>
    %6 = vector.broadcast %5 : vector<1x512xf32> to vector<8x512xf32>
    %c0_4 = arith.constant 0 : index
    %c0_5 = arith.constant 0 : index
    %7 = vector.load %arg6[%c0_4, %c0_5] : memref<8x512xf32, #tpu.memory_space<vmem>>, vector<8x512xf32>
    %c0_6 = arith.constant 0 : index
    %c0_7 = arith.constant 0 : index
    %8 = vector.load %arg7[%c0_6, %c0_7] : memref<8x128xf32, #tpu.memory_space<vmem>>, vector<8x128xf32>
    %c0_8 = arith.constant 0 : index
    %c0_9 = arith.constant 0 : index
    %9 = vector.load %arg8[%c0_8, %c0_9] : memref<8x128xf32, #tpu.memory_space<vmem>>, vector<8x128xf32>
    %c0_10 = arith.constant 0 : index
    %c0_11 = arith.constant 0 : index
    %10 = vector.load %arg9[%c0_10, %c0_11] : memref<8x128xf32, #tpu.memory_space<vmem>>, vector<8x128xf32>
    %c0_i32_12 = arith.constant 0 : i32
    %11 = arith.index_cast %c0_i32_12 : i32 to index
    %c0_13 = arith.constant 0 : index
    %c0_14 = arith.constant 0 : index
    %12 = vector.load %arg2[%11, %c0_13, %c0_14] : memref<8x8x512xf32, #tpu.memory_space<vmem>>, vector<1x8x512xf32>
    %13 = vector.shape_cast %12 : vector<1x8x512xf32> to vector<8x512xf32>
    %14 = arith.addf %13, %7 : vector<8x512xf32>
    %15 = vector.extract_strided_slice %14 {offsets = [0, 0], sizes = [8, 384], strides = [1, 1]} : vector<8x512xf32> to vector<8x384xf32>
    %16 = arith.negf %15 : vector<8x384xf32>
    %17 = math.exp %16 : vector<8x384xf32>
    %cst = arith.constant 1.000000e+00 : f32
    %18 = vector.broadcast %cst : f32 to vector<8x384xf32>
    %19 = arith.addf %18, %17 : vector<8x384xf32>
    %20 = arith.divf %18, %19 : vector<8x384xf32>
    %21 = vector.extract_strided_slice %14 {offsets = [0, 384], sizes = [8, 128], strides = [1, 1]} : vector<8x512xf32> to vector<8x128xf32>
    %22 = math.tanh %21 : vector<8x128xf32>
    %23 = vector.extract_strided_slice %20 {offsets = [0, 0], sizes = [8, 128], strides = [1, 1]} : vector<8x384xf32> to vector<8x128xf32>
    %24 = vector.extract_strided_slice %20 {offsets = [0, 128], sizes = [8, 128], strides = [1, 1]} : vector<8x384xf32> to vector<8x128xf32>
    %25 = vector.extract_strided_slice %20 {offsets = [0, 256], sizes = [8, 128], strides = [1, 1]} : vector<8x384xf32> to vector<8x128xf32>
    %26 = arith.mulf %24, %8 : vector<8x128xf32>
    %27 = arith.mulf %23, %22 : vector<8x128xf32>
    %28 = arith.addf %26, %27 : vector<8x128xf32>
    %29 = math.tanh %28 : vector<8x128xf32>
    %30 = arith.mulf %25, %29 : vector<8x128xf32>
    %31 = tpu.concatenate %30, %9 in 1 : vector<8x128xf32>, vector<8x128xf32> -> vector<8x256xf32>
    %cst_15 = arith.constant dense<0.000000e+00> : vector<8x1024xf32>
    %32 = tpu.matmul %31, %3, %cst_15 {dimension_numbers = #tpu.dot_dimension_numbers<[1], [0], [0], [1], [0, 0, 1, 1], [], []>} : vector<8x256xf32>, vector<256x1024xf32>, vector<8x1024xf32> -> vector<8x1024xf32>
    %33 = vector.extract_strided_slice %32 {offsets = [0, 0], sizes = [8, 512], strides = [1, 1]} : vector<8x1024xf32> to vector<8x512xf32>
    %34 = vector.extract_strided_slice %32 {offsets = [0, 512], sizes = [8, 512], strides = [1, 1]} : vector<8x1024xf32> to vector<8x512xf32>
    %35 = arith.addf %34, %6 : vector<8x512xf32>
    %36 = vector.extract_strided_slice %35 {offsets = [0, 0], sizes = [8, 384], strides = [1, 1]} : vector<8x512xf32> to vector<8x384xf32>
    %37 = arith.negf %36 : vector<8x384xf32>
    %38 = math.exp %37 : vector<8x384xf32>
    %cst_16 = arith.constant 1.000000e+00 : f32
    %39 = vector.broadcast %cst_16 : f32 to vector<8x384xf32>
    %40 = arith.addf %39, %38 : vector<8x384xf32>
    %41 = arith.divf %39, %40 : vector<8x384xf32>
    %42 = vector.extract_strided_slice %35 {offsets = [0, 384], sizes = [8, 128], strides = [1, 1]} : vector<8x512xf32> to vector<8x128xf32>
    %43 = math.tanh %42 : vector<8x128xf32>
    %44 = vector.extract_strided_slice %41 {offsets = [0, 0], sizes = [8, 128], strides = [1, 1]} : vector<8x384xf32> to vector<8x128xf32>
    %45 = vector.extract_strided_slice %41 {offsets = [0, 128], sizes = [8, 128], strides = [1, 1]} : vector<8x384xf32> to vector<8x128xf32>
    %46 = vector.extract_strided_slice %41 {offsets = [0, 256], sizes = [8, 128], strides = [1, 1]} : vector<8x384xf32> to vector<8x128xf32>
    %47 = arith.mulf %45, %10 : vector<8x128xf32>
    %48 = arith.mulf %44, %43 : vector<8x128xf32>
    %49 = arith.addf %47, %48 : vector<8x128xf32>
    %50 = math.tanh %49 : vector<8x128xf32>
    %51 = arith.mulf %46, %50 : vector<8x128xf32>
    %52 = arith.index_cast %c0_i32_12 : i32 to index
    %c0_17 = arith.constant 0 : index
    %c0_18 = arith.constant 0 : index
    %53 = vector.load %arg5[%52, %c0_17, %c0_18] : memref<8x8x128xf32, #tpu.memory_space<vmem>>, vector<1x8x128xf32>
    %54 = vector.shape_cast %53 : vector<1x8x128xf32> to vector<8x128xf32>
    %55 = vector.shape_cast %51 : vector<8x128xf32> to vector<1x8x128xf32>
    tpu.vector_store %arg5[%52, %c0_17, %c0_18], %55 {strides = array<i32>} : memref<8x8x128xf32, #tpu.memory_space<vmem>>, vector<1x8x128xf32>,
    %c1_i32 = arith.constant 1 : i32
    %56 = arith.index_cast %c1_i32 : i32 to index
    %c0_19 = arith.constant 0 : index
    %c0_20 = arith.constant 0 : index
    %57 = vector.load %arg2[%56, %c0_19, %c0_20] : memref<8x8x512xf32, #tpu.memory_space<vmem>>, vector<1x8x512xf32>
    %58 = vector.shape_cast %57 : vector<1x8x512xf32> to vector<8x512xf32>
    %59 = arith.addf %58, %33 : vector<8x512xf32>
    %60 = vector.extract_strided_slice %59 {offsets = [0, 0], sizes = [8, 384], strides = [1, 1]} : vector<8x512xf32> to vector<8x384xf32>
    %61 = arith.negf %60 : vector<8x384xf32>
    %62 = math.exp %61 : vector<8x384xf32>
    %cst_21 = arith.constant 1.000000e+00 : f32
    %63 = vector.broadcast %cst_21 : f32 to vector<8x384xf32>
    %64 = arith.addf %63, %62 : vector<8x384xf32>
    %65 = arith.divf %63, %64 : vector<8x384xf32>
    %66 = vector.extract_strided_slice %59 {offsets = [0, 384], sizes = [8, 128], strides = [1, 1]} : vector<8x512xf32> to vector<8x128xf32>
    %67 = math.tanh %66 : vector<8x128xf32>
    %68 = vector.extract_strided_slice %65 {offsets = [0, 0], sizes = [8, 128], strides = [1, 1]} : vector<8x384xf32> to vector<8x128xf32>
    %69 = vector.extract_strided_slice %65 {offsets = [0, 128], sizes = [8, 128], strides = [1, 1]} : vector<8x384xf32> to vector<8x128xf32>
    %70 = vector.extract_strided_slice %65 {offsets = [0, 256], sizes = [8, 128], strides = [1, 1]} : vector<8x384xf32> to vector<8x128xf32>
    %71 = arith.mulf %69, %28 : vector<8x128xf32>
    %72 = arith.mulf %68, %67 : vector<8x128xf32>
    %73 = arith.addf %71, %72 : vector<8x128xf32>
    %74 = math.tanh %73 : vector<8x128xf32>
    %75 = arith.mulf %70, %74 : vector<8x128xf32>
    %76 = tpu.concatenate %75, %51 in 1 : vector<8x128xf32>, vector<8x128xf32> -> vector<8x256xf32>
    %cst_22 = arith.constant dense<0.000000e+00> : vector<8x1024xf32>
    %77 = tpu.matmul %76, %3, %cst_22 {dimension_numbers = #tpu.dot_dimension_numbers<[1], [0], [0], [1], [0, 0, 1, 1], [], []>} : vector<8x256xf32>, vector<256x1024xf32>, vector<8x1024xf32> -> vector<8x1024xf32>
    %78 = vector.extract_strided_slice %77 {offsets = [0, 0], sizes = [8, 512], strides = [1, 1]} : vector<8x1024xf32> to vector<8x512xf32>
    %79 = vector.extract_strided_slice %77 {offsets = [0, 512], sizes = [8, 512], strides = [1, 1]} : vector<8x1024xf32> to vector<8x512xf32>
    %80 = arith.addf %79, %6 : vector<8x512xf32>
    %81 = vector.extract_strided_slice %80 {offsets = [0, 0], sizes = [8, 384], strides = [1, 1]} : vector<8x512xf32> to vector<8x384xf32>
    %82 = arith.negf %81 : vector<8x384xf32>
    %83 = math.exp %82 : vector<8x384xf32>
    %cst_23 = arith.constant 1.000000e+00 : f32
    %84 = vector.broadcast %cst_23 : f32 to vector<8x384xf32>
    %85 = arith.addf %84, %83 : vector<8x384xf32>
    %86 = arith.divf %84, %85 : vector<8x384xf32>
    %87 = vector.extract_strided_slice %80 {offsets = [0, 384], sizes = [8, 128], strides = [1, 1]} : vector<8x512xf32> to vector<8x128xf32>
    %88 = math.tanh %87 : vector<8x128xf32>
    %89 = vector.extract_strided_slice %86 {offsets = [0, 0], sizes = [8, 128], strides = [1, 1]} : vector<8x384xf32> to vector<8x128xf32>
    %90 = vector.extract_strided_slice %86 {offsets = [0, 128], sizes = [8, 128], strides = [1, 1]} : vector<8x384xf32> to vector<8x128xf32>
    %91 = vector.extract_strided_slice %86 {offsets = [0, 256], sizes = [8, 128], strides = [1, 1]} : vector<8x384xf32> to vector<8x128xf32>
    %92 = arith.mulf %90, %49 : vector<8x128xf32>
    %93 = arith.mulf %89, %88 : vector<8x128xf32>
    %94 = arith.addf %92, %93 : vector<8x128xf32>
    %95 = math.tanh %94 : vector<8x128xf32>
    %96 = arith.mulf %91, %95 : vector<8x128xf32>
    %97 = arith.index_cast %c1_i32 : i32 to index
    %c0_24 = arith.constant 0 : index
    %c0_25 = arith.constant 0 : index
    %98 = vector.load %arg5[%97, %c0_24, %c0_25] : memref<8x8x128xf32, #tpu.memory_space<vmem>>, vector<1x8x128xf32>
    %99 = vector.shape_cast %98 : vector<1x8x128xf32> to vector<8x128xf32>
    %100 = vector.shape_cast %96 : vector<8x128xf32> to vector<1x8x128xf32>
    tpu.vector_store %arg5[%97, %c0_24, %c0_25], %100 {strides = array<i32>} : memref<8x8x128xf32, #tpu.memory_space<vmem>>, vector<1x8x128xf32>,
    %c2_i32 = arith.constant 2 : i32
    %101 = arith.index_cast %c2_i32 : i32 to index
    %c0_26 = arith.constant 0 : index
    %c0_27 = arith.constant 0 : index
    %102 = vector.load %arg2[%101, %c0_26, %c0_27] : memref<8x8x512xf32, #tpu.memory_space<vmem>>, vector<1x8x512xf32>
    %103 = vector.shape_cast %102 : vector<1x8x512xf32> to vector<8x512xf32>
    %104 = arith.addf %103, %78 : vector<8x512xf32>
    %105 = vector.extract_strided_slice %104 {offsets = [0, 0], sizes = [8, 384], strides = [1, 1]} : vector<8x512xf32> to vector<8x384xf32>
    %106 = arith.negf %105 : vector<8x384xf32>
    %107 = math.exp %106 : vector<8x384xf32>
    %cst_28 = arith.constant 1.000000e+00 : f32
    %108 = vector.broadcast %cst_28 : f32 to vector<8x384xf32>
    %109 = arith.addf %108, %107 : vector<8x384xf32>
    %110 = arith.divf %108, %109 : vector<8x384xf32>
    %111 = vector.extract_strided_slice %104 {offsets = [0, 384], sizes = [8, 128], strides = [1, 1]} : vector<8x512xf32> to vector<8x128xf32>
    %112 = math.tanh %111 : vector<8x128xf32>
    %113 = vector.extract_strided_slice %110 {offsets = [0, 0], sizes = [8, 128], strides = [1, 1]} : vector<8x384xf32> to vector<8x128xf32>
    %114 = vector.extract_strided_slice %110 {offsets = [0, 128], sizes = [8, 128], strides = [1, 1]} : vector<8x384xf32> to vector<8x128xf32>
    %115 = vector.extract_strided_slice %110 {offsets = [0, 256], sizes = [8, 128], strides = [1, 1]} : vector<8x384xf32> to vector<8x128xf32>
    %116 = arith.mulf %114, %73 : vector<8x128xf32>
    %117 = arith.mulf %113, %112 : vector<8x128xf32>
    %118 = arith.addf %116, %117 : vector<8x128xf32>
    %119 = math.tanh %118 : vector<8x128xf32>
    %120 = arith.mulf %115, %119 : vector<8x128xf32>
    %121 = tpu.concatenate %120, %96 in 1 : vector<8x128xf32>, vector<8x128xf32> -> vector<8x256xf32>
    %cst_29 = arith.constant dense<0.000000e+00> : vector<8x1024xf32>
    %122 = tpu.matmul %121, %3, %cst_29 {dimension_numbers = #tpu.dot_dimension_numbers<[1], [0], [0], [1], [0, 0, 1, 1], [], []>} : vector<8x256xf32>, vector<256x1024xf32>, vector<8x1024xf32> -> vector<8x1024xf32>
    %123 = vector.extract_strided_slice %122 {offsets = [0, 0], sizes = [8, 512], strides = [1, 1]} : vector<8x1024xf32> to vector<8x512xf32>
    %124 = vector.extract_strided_slice %122 {offsets = [0, 512], sizes = [8, 512], strides = [1, 1]} : vector<8x1024xf32> to vector<8x512xf32>
    %125 = arith.addf %124, %6 : vector<8x512xf32>
    %126 = vector.extract_strided_slice %125 {offsets = [0, 0], sizes = [8, 384], strides = [1, 1]} : vector<8x512xf32> to vector<8x384xf32>
    %127 = arith.negf %126 : vector<8x384xf32>
    %128 = math.exp %127 : vector<8x384xf32>
    %cst_30 = arith.constant 1.000000e+00 : f32
    %129 = vector.broadcast %cst_30 : f32 to vector<8x384xf32>
    %130 = arith.addf %129, %128 : vector<8x384xf32>
    %131 = arith.divf %129, %130 : vector<8x384xf32>
    %132 = vector.extract_strided_slice %125 {offsets = [0, 384], sizes = [8, 128], strides = [1, 1]} : vector<8x512xf32> to vector<8x128xf32>
    %133 = math.tanh %132 : vector<8x128xf32>
    %134 = vector.extract_strided_slice %131 {offsets = [0, 0], sizes = [8, 128], strides = [1, 1]} : vector<8x384xf32> to vector<8x128xf32>
    %135 = vector.extract_strided_slice %131 {offsets = [0, 128], sizes = [8, 128], strides = [1, 1]} : vector<8x384xf32> to vector<8x128xf32>
    %136 = vector.extract_strided_slice %131 {offsets = [0, 256], sizes = [8, 128], strides = [1, 1]} : vector<8x384xf32> to vector<8x128xf32>
    %137 = arith.mulf %135, %94 : vector<8x128xf32>
    %138 = arith.mulf %134, %133 : vector<8x128xf32>
    %139 = arith.addf %137, %138 : vector<8x128xf32>
    %140 = math.tanh %139 : vector<8x128xf32>
    %141 = arith.mulf %136, %140 : vector<8x128xf32>
    %142 = arith.index_cast %c2_i32 : i32 to index
    %c0_31 = arith.constant 0 : index
    %c0_32 = arith.constant 0 : index
    %143 = vector.load %arg5[%142, %c0_31, %c0_32] : memref<8x8x128xf32, #tpu.memory_space<vmem>>, vector<1x8x128xf32>
    %144 = vector.shape_cast %143 : vector<1x8x128xf32> to vector<8x128xf32>
    %145 = vector.shape_cast %141 : vector<8x128xf32> to vector<1x8x128xf32>
    tpu.vector_store %arg5[%142, %c0_31, %c0_32], %145 {strides = array<i32>} : memref<8x8x128xf32, #tpu.memory_space<vmem>>, vector<1x8x128xf32>,
    %c3_i32 = arith.constant 3 : i32
    %146 = arith.index_cast %c3_i32 : i32 to index
    %c0_33 = arith.constant 0 : index
    %c0_34 = arith.constant 0 : index
    %147 = vector.load %arg2[%146, %c0_33, %c0_34] : memref<8x8x512xf32, #tpu.memory_space<vmem>>, vector<1x8x512xf32>
    %148 = vector.shape_cast %147 : vector<1x8x512xf32> to vector<8x512xf32>
    %149 = arith.addf %148, %123 : vector<8x512xf32>
    %150 = vector.extract_strided_slice %149 {offsets = [0, 0], sizes = [8, 384], strides = [1, 1]} : vector<8x512xf32> to vector<8x384xf32>
    %151 = arith.negf %150 : vector<8x384xf32>
    %152 = math.exp %151 : vector<8x384xf32>
    %cst_35 = arith.constant 1.000000e+00 : f32
    %153 = vector.broadcast %cst_35 : f32 to vector<8x384xf32>
    %154 = arith.addf %153, %152 : vector<8x384xf32>
    %155 = arith.divf %153, %154 : vector<8x384xf32>
    %156 = vector.extract_strided_slice %149 {offsets = [0, 384], sizes = [8, 128], strides = [1, 1]} : vector<8x512xf32> to vector<8x128xf32>
    %157 = math.tanh %156 : vector<8x128xf32>
    %158 = vector.extract_strided_slice %155 {offsets = [0, 0], sizes = [8, 128], strides = [1, 1]} : vector<8x384xf32> to vector<8x128xf32>
    %159 = vector.extract_strided_slice %155 {offsets = [0, 128], sizes = [8, 128], strides = [1, 1]} : vector<8x384xf32> to vector<8x128xf32>
    %160 = vector.extract_strided_slice %155 {offsets = [0, 256], sizes = [8, 128], strides = [1, 1]} : vector<8x384xf32> to vector<8x128xf32>
    %161 = arith.mulf %159, %118 : vector<8x128xf32>
    %162 = arith.mulf %158, %157 : vector<8x128xf32>
    %163 = arith.addf %161, %162 : vector<8x128xf32>
    %164 = math.tanh %163 : vector<8x128xf32>
    %165 = arith.mulf %160, %164 : vector<8x128xf32>
    %166 = tpu.concatenate %165, %141 in 1 : vector<8x128xf32>, vector<8x128xf32> -> vector<8x256xf32>
    %cst_36 = arith.constant dense<0.000000e+00> : vector<8x1024xf32>
    %167 = tpu.matmul %166, %3, %cst_36 {dimension_numbers = #tpu.dot_dimension_numbers<[1], [0], [0], [1], [0, 0, 1, 1], [], []>} : vector<8x256xf32>, vector<256x1024xf32>, vector<8x1024xf32> -> vector<8x1024xf32>
    %168 = vector.extract_strided_slice %167 {offsets = [0, 0], sizes = [8, 512], strides = [1, 1]} : vector<8x1024xf32> to vector<8x512xf32>
    %169 = vector.extract_strided_slice %167 {offsets = [0, 512], sizes = [8, 512], strides = [1, 1]} : vector<8x1024xf32> to vector<8x512xf32>
    %170 = arith.addf %169, %6 : vector<8x512xf32>
    %171 = vector.extract_strided_slice %170 {offsets = [0, 0], sizes = [8, 384], strides = [1, 1]} : vector<8x512xf32> to vector<8x384xf32>
    %172 = arith.negf %171 : vector<8x384xf32>
    %173 = math.exp %172 : vector<8x384xf32>
    %cst_37 = arith.constant 1.000000e+00 : f32
    %174 = vector.broadcast %cst_37 : f32 to vector<8x384xf32>
    %175 = arith.addf %174, %173 : vector<8x384xf32>
    %176 = arith.divf %174, %175 : vector<8x384xf32>
    %177 = vector.extract_strided_slice %170 {offsets = [0, 384], sizes = [8, 128], strides = [1, 1]} : vector<8x512xf32> to vector<8x128xf32>
    %178 = math.tanh %177 : vector<8x128xf32>
    %179 = vector.extract_strided_slice %176 {offsets = [0, 0], sizes = [8, 128], strides = [1, 1]} : vector<8x384xf32> to vector<8x128xf32>
    %180 = vector.extract_strided_slice %176 {offsets = [0, 128], sizes = [8, 128], strides = [1, 1]} : vector<8x384xf32> to vector<8x128xf32>
    %181 = vector.extract_strided_slice %176 {offsets = [0, 256], sizes = [8, 128], strides = [1, 1]} : vector<8x384xf32> to vector<8x128xf32>
    %182 = arith.mulf %180, %139 : vector<8x128xf32>
    %183 = arith.mulf %179, %178 : vector<8x128xf32>
    %184 = arith.addf %182, %183 : vector<8x128xf32>
    %185 = math.tanh %184 : vector<8x128xf32>
    %186 = arith.mulf %181, %185 : vector<8x128xf32>
    %187 = arith.index_cast %c3_i32 : i32 to index
    %c0_38 = arith.constant 0 : index
    %c0_39 = arith.constant 0 : index
    %188 = vector.load %arg5[%187, %c0_38, %c0_39] : memref<8x8x128xf32, #tpu.memory_space<vmem>>, vector<1x8x128xf32>
    %189 = vector.shape_cast %188 : vector<1x8x128xf32> to vector<8x128xf32>
    %190 = vector.shape_cast %186 : vector<8x128xf32> to vector<1x8x128xf32>
    tpu.vector_store %arg5[%187, %c0_38, %c0_39], %190 {strides = array<i32>} : memref<8x8x128xf32, #tpu.memory_space<vmem>>, vector<1x8x128xf32>,
    %c4_i32 = arith.constant 4 : i32
    %191 = arith.index_cast %c4_i32 : i32 to index
    %c0_40 = arith.constant 0 : index
    %c0_41 = arith.constant 0 : index
    %192 = vector.load %arg2[%191, %c0_40, %c0_41] : memref<8x8x512xf32, #tpu.memory_space<vmem>>, vector<1x8x512xf32>
    %193 = vector.shape_cast %192 : vector<1x8x512xf32> to vector<8x512xf32>
    %194 = arith.addf %193, %168 : vector<8x512xf32>
    %195 = vector.extract_strided_slice %194 {offsets = [0, 0], sizes = [8, 384], strides = [1, 1]} : vector<8x512xf32> to vector<8x384xf32>
    %196 = arith.negf %195 : vector<8x384xf32>
    %197 = math.exp %196 : vector<8x384xf32>
    %cst_42 = arith.constant 1.000000e+00 : f32
    %198 = vector.broadcast %cst_42 : f32 to vector<8x384xf32>
    %199 = arith.addf %198, %197 : vector<8x384xf32>
    %200 = arith.divf %198, %199 : vector<8x384xf32>
    %201 = vector.extract_strided_slice %194 {offsets = [0, 384], sizes = [8, 128], strides = [1, 1]} : vector<8x512xf32> to vector<8x128xf32>
    %202 = math.tanh %201 : vector<8x128xf32>
    %203 = vector.extract_strided_slice %200 {offsets = [0, 0], sizes = [8, 128], strides = [1, 1]} : vector<8x384xf32> to vector<8x128xf32>
    %204 = vector.extract_strided_slice %200 {offsets = [0, 128], sizes = [8, 128], strides = [1, 1]} : vector<8x384xf32> to vector<8x128xf32>
    %205 = vector.extract_strided_slice %200 {offsets = [0, 256], sizes = [8, 128], strides = [1, 1]} : vector<8x384xf32> to vector<8x128xf32>
    %206 = arith.mulf %204, %163 : vector<8x128xf32>
    %207 = arith.mulf %203, %202 : vector<8x128xf32>
    %208 = arith.addf %206, %207 : vector<8x128xf32>
    %209 = math.tanh %208 : vector<8x128xf32>
    %210 = arith.mulf %205, %209 : vector<8x128xf32>
    %211 = tpu.concatenate %210, %186 in 1 : vector<8x128xf32>, vector<8x128xf32> -> vector<8x256xf32>
    %cst_43 = arith.constant dense<0.000000e+00> : vector<8x1024xf32>
    %212 = tpu.matmul %211, %3, %cst_43 {dimension_numbers = #tpu.dot_dimension_numbers<[1], [0], [0], [1], [0, 0, 1, 1], [], []>} : vector<8x256xf32>, vector<256x1024xf32>, vector<8x1024xf32> -> vector<8x1024xf32>
    %213 = vector.extract_strided_slice %212 {offsets = [0, 0], sizes = [8, 512], strides = [1, 1]} : vector<8x1024xf32> to vector<8x512xf32>
    %214 = vector.extract_strided_slice %212 {offsets = [0, 512], sizes = [8, 512], strides = [1, 1]} : vector<8x1024xf32> to vector<8x512xf32>
    %215 = arith.addf %214, %6 : vector<8x512xf32>
    %216 = vector.extract_strided_slice %215 {offsets = [0, 0], sizes = [8, 384], strides = [1, 1]} : vector<8x512xf32> to vector<8x384xf32>
    %217 = arith.negf %216 : vector<8x384xf32>
    %218 = math.exp %217 : vector<8x384xf32>
    %cst_44 = arith.constant 1.000000e+00 : f32
    %219 = vector.broadcast %cst_44 : f32 to vector<8x384xf32>
    %220 = arith.addf %219, %218 : vector<8x384xf32>
    %221 = arith.divf %219, %220 : vector<8x384xf32>
    %222 = vector.extract_strided_slice %215 {offsets = [0, 384], sizes = [8, 128], strides = [1, 1]} : vector<8x512xf32> to vector<8x128xf32>
    %223 = math.tanh %222 : vector<8x128xf32>
    %224 = vector.extract_strided_slice %221 {offsets = [0, 0], sizes = [8, 128], strides = [1, 1]} : vector<8x384xf32> to vector<8x128xf32>
    %225 = vector.extract_strided_slice %221 {offsets = [0, 128], sizes = [8, 128], strides = [1, 1]} : vector<8x384xf32> to vector<8x128xf32>
    %226 = vector.extract_strided_slice %221 {offsets = [0, 256], sizes = [8, 128], strides = [1, 1]} : vector<8x384xf32> to vector<8x128xf32>
    %227 = arith.mulf %225, %184 : vector<8x128xf32>
    %228 = arith.mulf %224, %223 : vector<8x128xf32>
    %229 = arith.addf %227, %228 : vector<8x128xf32>
    %230 = math.tanh %229 : vector<8x128xf32>
    %231 = arith.mulf %226, %230 : vector<8x128xf32>
    %232 = arith.index_cast %c4_i32 : i32 to index
    %c0_45 = arith.constant 0 : index
    %c0_46 = arith.constant 0 : index
    %233 = vector.load %arg5[%232, %c0_45, %c0_46] : memref<8x8x128xf32, #tpu.memory_space<vmem>>, vector<1x8x128xf32>
    %234 = vector.shape_cast %233 : vector<1x8x128xf32> to vector<8x128xf32>
    %235 = vector.shape_cast %231 : vector<8x128xf32> to vector<1x8x128xf32>
    tpu.vector_store %arg5[%232, %c0_45, %c0_46], %235 {strides = array<i32>} : memref<8x8x128xf32, #tpu.memory_space<vmem>>, vector<1x8x128xf32>,
    %c5_i32 = arith.constant 5 : i32
    %236 = arith.index_cast %c5_i32 : i32 to index
    %c0_47 = arith.constant 0 : index
    %c0_48 = arith.constant 0 : index
    %237 = vector.load %arg2[%236, %c0_47, %c0_48] : memref<8x8x512xf32, #tpu.memory_space<vmem>>, vector<1x8x512xf32>
    %238 = vector.shape_cast %237 : vector<1x8x512xf32> to vector<8x512xf32>
    %239 = arith.addf %238, %213 : vector<8x512xf32>
    %240 = vector.extract_strided_slice %239 {offsets = [0, 0], sizes = [8, 384], strides = [1, 1]} : vector<8x512xf32> to vector<8x384xf32>
    %241 = arith.negf %240 : vector<8x384xf32>
    %242 = math.exp %241 : vector<8x384xf32>
    %cst_49 = arith.constant 1.000000e+00 : f32
    %243 = vector.broadcast %cst_49 : f32 to vector<8x384xf32>
    %244 = arith.addf %243, %242 : vector<8x384xf32>
    %245 = arith.divf %243, %244 : vector<8x384xf32>
    %246 = vector.extract_strided_slice %239 {offsets = [0, 384], sizes = [8, 128], strides = [1, 1]} : vector<8x512xf32> to vector<8x128xf32>
    %247 = math.tanh %246 : vector<8x128xf32>
    %248 = vector.extract_strided_slice %245 {offsets = [0, 0], sizes = [8, 128], strides = [1, 1]} : vector<8x384xf32> to vector<8x128xf32>
    %249 = vector.extract_strided_slice %245 {offsets = [0, 128], sizes = [8, 128], strides = [1, 1]} : vector<8x384xf32> to vector<8x128xf32>
    %250 = vector.extract_strided_slice %245 {offsets = [0, 256], sizes = [8, 128], strides = [1, 1]} : vector<8x384xf32> to vector<8x128xf32>
    %251 = arith.mulf %249, %208 : vector<8x128xf32>
    %252 = arith.mulf %248, %247 : vector<8x128xf32>
    %253 = arith.addf %251, %252 : vector<8x128xf32>
    %254 = math.tanh %253 : vector<8x128xf32>
    %255 = arith.mulf %250, %254 : vector<8x128xf32>
    %256 = tpu.concatenate %255, %231 in 1 : vector<8x128xf32>, vector<8x128xf32> -> vector<8x256xf32>
    %cst_50 = arith.constant dense<0.000000e+00> : vector<8x1024xf32>
    %257 = tpu.matmul %256, %3, %cst_50 {dimension_numbers = #tpu.dot_dimension_numbers<[1], [0], [0], [1], [0, 0, 1, 1], [], []>} : vector<8x256xf32>, vector<256x1024xf32>, vector<8x1024xf32> -> vector<8x1024xf32>
    %258 = vector.extract_strided_slice %257 {offsets = [0, 0], sizes = [8, 512], strides = [1, 1]} : vector<8x1024xf32> to vector<8x512xf32>
    %259 = vector.extract_strided_slice %257 {offsets = [0, 512], sizes = [8, 512], strides = [1, 1]} : vector<8x1024xf32> to vector<8x512xf32>
    %260 = arith.addf %259, %6 : vector<8x512xf32>
    %261 = vector.extract_strided_slice %260 {offsets = [0, 0], sizes = [8, 384], strides = [1, 1]} : vector<8x512xf32> to vector<8x384xf32>
    %262 = arith.negf %261 : vector<8x384xf32>
    %263 = math.exp %262 : vector<8x384xf32>
    %cst_51 = arith.constant 1.000000e+00 : f32
    %264 = vector.broadcast %cst_51 : f32 to vector<8x384xf32>
    %265 = arith.addf %264, %263 : vector<8x384xf32>
    %266 = arith.divf %264, %265 : vector<8x384xf32>
    %267 = vector.extract_strided_slice %260 {offsets = [0, 384], sizes = [8, 128], strides = [1, 1]} : vector<8x512xf32> to vector<8x128xf32>
    %268 = math.tanh %267 : vector<8x128xf32>
    %269 = vector.extract_strided_slice %266 {offsets = [0, 0], sizes = [8, 128], strides = [1, 1]} : vector<8x384xf32> to vector<8x128xf32>
    %270 = vector.extract_strided_slice %266 {offsets = [0, 128], sizes = [8, 128], strides = [1, 1]} : vector<8x384xf32> to vector<8x128xf32>
    %271 = vector.extract_strided_slice %266 {offsets = [0, 256], sizes = [8, 128], strides = [1, 1]} : vector<8x384xf32> to vector<8x128xf32>
    %272 = arith.mulf %270, %229 : vector<8x128xf32>
    %273 = arith.mulf %269, %268 : vector<8x128xf32>
    %274 = arith.addf %272, %273 : vector<8x128xf32>
    %275 = math.tanh %274 : vector<8x128xf32>
    %276 = arith.mulf %271, %275 : vector<8x128xf32>
    %277 = arith.index_cast %c5_i32 : i32 to index
    %c0_52 = arith.constant 0 : index
    %c0_53 = arith.constant 0 : index
    %278 = vector.load %arg5[%277, %c0_52, %c0_53] : memref<8x8x128xf32, #tpu.memory_space<vmem>>, vector<1x8x128xf32>
    %279 = vector.shape_cast %278 : vector<1x8x128xf32> to vector<8x128xf32>
    %280 = vector.shape_cast %276 : vector<8x128xf32> to vector<1x8x128xf32>
    tpu.vector_store %arg5[%277, %c0_52, %c0_53], %280 {strides = array<i32>} : memref<8x8x128xf32, #tpu.memory_space<vmem>>, vector<1x8x128xf32>,
    %c6_i32 = arith.constant 6 : i32
    %281 = arith.index_cast %c6_i32 : i32 to index
    %c0_54 = arith.constant 0 : index
    %c0_55 = arith.constant 0 : index
    %282 = vector.load %arg2[%281, %c0_54, %c0_55] : memref<8x8x512xf32, #tpu.memory_space<vmem>>, vector<1x8x512xf32>
    %283 = vector.shape_cast %282 : vector<1x8x512xf32> to vector<8x512xf32>
    %284 = arith.addf %283, %258 : vector<8x512xf32>
    %285 = vector.extract_strided_slice %284 {offsets = [0, 0], sizes = [8, 384], strides = [1, 1]} : vector<8x512xf32> to vector<8x384xf32>
    %286 = arith.negf %285 : vector<8x384xf32>
    %287 = math.exp %286 : vector<8x384xf32>
    %cst_56 = arith.constant 1.000000e+00 : f32
    %288 = vector.broadcast %cst_56 : f32 to vector<8x384xf32>
    %289 = arith.addf %288, %287 : vector<8x384xf32>
    %290 = arith.divf %288, %289 : vector<8x384xf32>
    %291 = vector.extract_strided_slice %284 {offsets = [0, 384], sizes = [8, 128], strides = [1, 1]} : vector<8x512xf32> to vector<8x128xf32>
    %292 = math.tanh %291 : vector<8x128xf32>
    %293 = vector.extract_strided_slice %290 {offsets = [0, 0], sizes = [8, 128], strides = [1, 1]} : vector<8x384xf32> to vector<8x128xf32>
    %294 = vector.extract_strided_slice %290 {offsets = [0, 128], sizes = [8, 128], strides = [1, 1]} : vector<8x384xf32> to vector<8x128xf32>
    %295 = vector.extract_strided_slice %290 {offsets = [0, 256], sizes = [8, 128], strides = [1, 1]} : vector<8x384xf32> to vector<8x128xf32>
    %296 = arith.mulf %294, %253 : vector<8x128xf32>
    %297 = arith.mulf %293, %292 : vector<8x128xf32>
    %298 = arith.addf %296, %297 : vector<8x128xf32>
    %299 = math.tanh %298 : vector<8x128xf32>
    %300 = arith.mulf %295, %299 : vector<8x128xf32>
    %301 = tpu.concatenate %300, %276 in 1 : vector<8x128xf32>, vector<8x128xf32> -> vector<8x256xf32>
    %cst_57 = arith.constant dense<0.000000e+00> : vector<8x1024xf32>
    %302 = tpu.matmul %301, %3, %cst_57 {dimension_numbers = #tpu.dot_dimension_numbers<[1], [0], [0], [1], [0, 0, 1, 1], [], []>} : vector<8x256xf32>, vector<256x1024xf32>, vector<8x1024xf32> -> vector<8x1024xf32>
    %303 = vector.extract_strided_slice %302 {offsets = [0, 0], sizes = [8, 512], strides = [1, 1]} : vector<8x1024xf32> to vector<8x512xf32>
    %304 = vector.extract_strided_slice %302 {offsets = [0, 512], sizes = [8, 512], strides = [1, 1]} : vector<8x1024xf32> to vector<8x512xf32>
    %305 = arith.addf %304, %6 : vector<8x512xf32>
    %306 = vector.extract_strided_slice %305 {offsets = [0, 0], sizes = [8, 384], strides = [1, 1]} : vector<8x512xf32> to vector<8x384xf32>
    %307 = arith.negf %306 : vector<8x384xf32>
    %308 = math.exp %307 : vector<8x384xf32>
    %cst_58 = arith.constant 1.000000e+00 : f32
    %309 = vector.broadcast %cst_58 : f32 to vector<8x384xf32>
    %310 = arith.addf %309, %308 : vector<8x384xf32>
    %311 = arith.divf %309, %310 : vector<8x384xf32>
    %312 = vector.extract_strided_slice %305 {offsets = [0, 384], sizes = [8, 128], strides = [1, 1]} : vector<8x512xf32> to vector<8x128xf32>
    %313 = math.tanh %312 : vector<8x128xf32>
    %314 = vector.extract_strided_slice %311 {offsets = [0, 0], sizes = [8, 128], strides = [1, 1]} : vector<8x384xf32> to vector<8x128xf32>
    %315 = vector.extract_strided_slice %311 {offsets = [0, 128], sizes = [8, 128], strides = [1, 1]} : vector<8x384xf32> to vector<8x128xf32>
    %316 = vector.extract_strided_slice %311 {offsets = [0, 256], sizes = [8, 128], strides = [1, 1]} : vector<8x384xf32> to vector<8x128xf32>
    %317 = arith.mulf %315, %274 : vector<8x128xf32>
    %318 = arith.mulf %314, %313 : vector<8x128xf32>
    %319 = arith.addf %317, %318 : vector<8x128xf32>
    %320 = math.tanh %319 : vector<8x128xf32>
    %321 = arith.mulf %316, %320 : vector<8x128xf32>
    %322 = arith.index_cast %c6_i32 : i32 to index
    %c0_59 = arith.constant 0 : index
    %c0_60 = arith.constant 0 : index
    %323 = vector.load %arg5[%322, %c0_59, %c0_60] : memref<8x8x128xf32, #tpu.memory_space<vmem>>, vector<1x8x128xf32>
    %324 = vector.shape_cast %323 : vector<1x8x128xf32> to vector<8x128xf32>
    %325 = vector.shape_cast %321 : vector<8x128xf32> to vector<1x8x128xf32>
    tpu.vector_store %arg5[%322, %c0_59, %c0_60], %325 {strides = array<i32>} : memref<8x8x128xf32, #tpu.memory_space<vmem>>, vector<1x8x128xf32>,
    %c7_i32 = arith.constant 7 : i32
    %326 = arith.index_cast %c7_i32 : i32 to index
    %c0_61 = arith.constant 0 : index
    %c0_62 = arith.constant 0 : index
    %327 = vector.load %arg2[%326, %c0_61, %c0_62] : memref<8x8x512xf32, #tpu.memory_space<vmem>>, vector<1x8x512xf32>
    %328 = vector.shape_cast %327 : vector<1x8x512xf32> to vector<8x512xf32>
    %329 = arith.addf %328, %303 : vector<8x512xf32>
    %330 = vector.extract_strided_slice %329 {offsets = [0, 0], sizes = [8, 384], strides = [1, 1]} : vector<8x512xf32> to vector<8x384xf32>
    %331 = arith.negf %330 : vector<8x384xf32>
    %332 = math.exp %331 : vector<8x384xf32>
    %cst_63 = arith.constant 1.000000e+00 : f32
    %333 = vector.broadcast %cst_63 : f32 to vector<8x384xf32>
    %334 = arith.addf %333, %332 : vector<8x384xf32>
    %335 = arith.divf %333, %334 : vector<8x384xf32>
    %336 = vector.extract_strided_slice %329 {offsets = [0, 384], sizes = [8, 128], strides = [1, 1]} : vector<8x512xf32> to vector<8x128xf32>
    %337 = math.tanh %336 : vector<8x128xf32>
    %338 = vector.extract_strided_slice %335 {offsets = [0, 0], sizes = [8, 128], strides = [1, 1]} : vector<8x384xf32> to vector<8x128xf32>
    %339 = vector.extract_strided_slice %335 {offsets = [0, 128], sizes = [8, 128], strides = [1, 1]} : vector<8x384xf32> to vector<8x128xf32>
    %340 = vector.extract_strided_slice %335 {offsets = [0, 256], sizes = [8, 128], strides = [1, 1]} : vector<8x384xf32> to vector<8x128xf32>
    %341 = arith.mulf %339, %298 : vector<8x128xf32>
    %342 = arith.mulf %338, %337 : vector<8x128xf32>
    %343 = arith.addf %341, %342 : vector<8x128xf32>
    %344 = math.tanh %343 : vector<8x128xf32>
    %345 = arith.mulf %340, %344 : vector<8x128xf32>
    %346 = tpu.concatenate %345, %321 in 1 : vector<8x128xf32>, vector<8x128xf32> -> vector<8x256xf32>
    %cst_64 = arith.constant dense<0.000000e+00> : vector<8x1024xf32>
    %347 = tpu.matmul %346, %3, %cst_64 {dimension_numbers = #tpu.dot_dimension_numbers<[1], [0], [0], [1], [0, 0, 1, 1], [], []>} : vector<8x256xf32>, vector<256x1024xf32>, vector<8x1024xf32> -> vector<8x1024xf32>
    %348 = vector.extract_strided_slice %347 {offsets = [0, 0], sizes = [8, 512], strides = [1, 1]} : vector<8x1024xf32> to vector<8x512xf32>
    %349 = vector.extract_strided_slice %347 {offsets = [0, 512], sizes = [8, 512], strides = [1, 1]} : vector<8x1024xf32> to vector<8x512xf32>
    %350 = arith.addf %349, %6 : vector<8x512xf32>
    %351 = vector.extract_strided_slice %350 {offsets = [0, 0], sizes = [8, 384], strides = [1, 1]} : vector<8x512xf32> to vector<8x384xf32>
    %352 = arith.negf %351 : vector<8x384xf32>
    %353 = math.exp %352 : vector<8x384xf32>
    %cst_65 = arith.constant 1.000000e+00 : f32
    %354 = vector.broadcast %cst_65 : f32 to vector<8x384xf32>
    %355 = arith.addf %354, %353 : vector<8x384xf32>
    %356 = arith.divf %354, %355 : vector<8x384xf32>
    %357 = vector.extract_strided_slice %350 {offsets = [0, 384], sizes = [8, 128], strides = [1, 1]} : vector<8x512xf32> to vector<8x128xf32>
    %358 = math.tanh %357 : vector<8x128xf32>
    %359 = vector.extract_strided_slice %356 {offsets = [0, 0], sizes = [8, 128], strides = [1, 1]} : vector<8x384xf32> to vector<8x128xf32>
    %360 = vector.extract_strided_slice %356 {offsets = [0, 128], sizes = [8, 128], strides = [1, 1]} : vector<8x384xf32> to vector<8x128xf32>
    %361 = vector.extract_strided_slice %356 {offsets = [0, 256], sizes = [8, 128], strides = [1, 1]} : vector<8x384xf32> to vector<8x128xf32>
    %362 = arith.mulf %360, %319 : vector<8x128xf32>
    %363 = arith.mulf %359, %358 : vector<8x128xf32>
    %364 = arith.addf %362, %363 : vector<8x128xf32>
    %365 = math.tanh %364 : vector<8x128xf32>
    %366 = arith.mulf %361, %365 : vector<8x128xf32>
    %367 = arith.index_cast %c7_i32 : i32 to index
    %c0_66 = arith.constant 0 : index
    %c0_67 = arith.constant 0 : index
    %368 = vector.load %arg5[%367, %c0_66, %c0_67] : memref<8x8x128xf32, #tpu.memory_space<vmem>>, vector<1x8x128xf32>
    %369 = vector.shape_cast %368 : vector<1x8x128xf32> to vector<8x128xf32>
    %370 = vector.shape_cast %366 : vector<8x128xf32> to vector<1x8x128xf32>
    tpu.vector_store %arg5[%367, %c0_66, %c0_67], %370 {strides = array<i32>} : memref<8x8x128xf32, #tpu.memory_space<vmem>>, vector<1x8x128xf32>,
    %c8_i32 = arith.constant 8 : i32
    %c0_68 = arith.constant 0 : index
    %c0_69 = arith.constant 0 : index
    %371 = vector.load %arg6[%c0_68, %c0_69] : memref<8x512xf32, #tpu.memory_space<vmem>>, vector<8x512xf32>
    tpu.vector_store %arg6[%c0_68, %c0_69], %348 {strides = array<i32>} : memref<8x512xf32, #tpu.memory_space<vmem>>, vector<8x512xf32>,
    %c0_70 = arith.constant 0 : index
    %c0_71 = arith.constant 0 : index
    %372 = vector.load %arg7[%c0_70, %c0_71] : memref<8x128xf32, #tpu.memory_space<vmem>>, vector<8x128xf32>
    tpu.vector_store %arg7[%c0_70, %c0_71], %343 {strides = array<i32>} : memref<8x128xf32, #tpu.memory_space<vmem>>, vector<8x128xf32>,
    %c0_72 = arith.constant 0 : index
    %c0_73 = arith.constant 0 : index
    %373 = vector.load %arg8[%c0_72, %c0_73] : memref<8x128xf32, #tpu.memory_space<vmem>>, vector<8x128xf32>
    tpu.vector_store %arg8[%c0_72, %c0_73], %366 {strides = array<i32>} : memref<8x128xf32, #tpu.memory_space<vmem>>, vector<8x128xf32>,
    %c0_74 = arith.constant 0 : index
    %c0_75 = arith.constant 0 : index
    %374 = vector.load %arg9[%c0_74, %c0_75] : memref<8x128xf32, #tpu.memory_space<vmem>>, vector<8x128xf32>
    tpu.vector_store %arg9[%c0_74, %c0_75], %364 {strides = array<i32>} : memref<8x128xf32, #tpu.memory_space<vmem>>, vector<8x128xf32>,
    return
  }
  func.func @transform_0(%arg0: i32, %arg1: i32) -> (i32, i32, i32) {
    %c0_i32 = arith.constant 0 : i32
    %c0_i32_0 = arith.constant 0 : i32
    return %arg1, %arg0, %c0_i32 : i32, i32, i32
  }
  func.func @transform_1(%arg0: i32, %arg1: i32) -> (i32, i32) {
    %c0_i32 = arith.constant 0 : i32
    %c0_i32_0 = arith.constant 0 : i32
    %c0_i32_1 = arith.constant 0 : i32
    return %c0_i32, %c0_i32_0 : i32, i32
  }
  func.func @transform_2(%arg0: i32, %arg1: i32) -> (i32, i32) {
    %c0_i32 = arith.constant 0 : i32
    %c0_i32_0 = arith.constant 0 : i32
    %c0_i32_1 = arith.constant 0 : i32
    return %c0_i32, %c0_i32_0 : i32, i32
  }
  func.func @transform_3(%arg0: i32, %arg1: i32) -> (i32, i32, i32) {
    %c0_i32 = arith.constant 0 : i32
    %c0_i32_0 = arith.constant 0 : i32
    return %arg1, %arg0, %c0_i32 : i32, i32, i32
  }
}

module attributes {stable_mosaic.version = 11 : i64} {
  func.func @_vocab_proj_kernel(%arg0: i32, %arg1: i32, %arg2: memref<8x128xf32, #tpu.memory_space<vmem>>, %arg3: memref<128x128xf32, #tpu.memory_space<vmem>>, %arg4: memref<1x128xf32, #tpu.memory_space<vmem>>, %arg5: memref<8x128xf32, #tpu.memory_space<vmem>>) attributes {dimension_semantics = [#tpu.dimension_semantics<parallel>, #tpu.dimension_semantics<arbitrary>], iteration_bounds = array<i64: 1, 8>, scalar_prefetch = 0 : i64, scratch_operands = 0 : i64, tpu.core_type = #tpu.core_type<tc>, window_params = [{transform_indices = @transform_0, window_bounds = array<i64: 8, 128>}, {transform_indices = @transform_1, window_bounds = array<i64: 128, 128>}, {transform_indices = @transform_2, window_bounds = array<i64: 1, 128>}, {transform_indices = @transform_3, window_bounds = array<i64: 8, 128>}]} {
    %c0 = arith.constant 0 : index
    %c0_0 = arith.constant 0 : index
    %0 = vector.load %arg2[%c0, %c0_0] : memref<8x128xf32, #tpu.memory_space<vmem>>, vector<8x128xf32>
    %c0_1 = arith.constant 0 : index
    %c0_2 = arith.constant 0 : index
    %1 = vector.load %arg3[%c0_1, %c0_2] : memref<128x128xf32, #tpu.memory_space<vmem>>, vector<128x128xf32>
    %cst = arith.constant dense<0.000000e+00> : vector<8x128xf32>
    %2 = tpu.matmul %0, %1, %cst {dimension_numbers = #tpu.dot_dimension_numbers<[1], [0], [0], [1], [0, 0, 1, 1], [], []>} : vector<8x128xf32>, vector<128x128xf32>, vector<8x128xf32> -> vector<8x128xf32>
    %c0_3 = arith.constant 0 : index
    %c0_4 = arith.constant 0 : index
    %3 = vector.load %arg4[%c0_3, %c0_4] : memref<1x128xf32, #tpu.memory_space<vmem>>, vector<1x128xf32>
    %4 = vector.broadcast %3 : vector<1x128xf32> to vector<8x128xf32>
    %5 = arith.addf %2, %4 : vector<8x128xf32>
    %c0_5 = arith.constant 0 : index
    %c0_6 = arith.constant 0 : index
    %6 = vector.load %arg5[%c0_5, %c0_6] : memref<8x128xf32, #tpu.memory_space<vmem>>, vector<8x128xf32>
    tpu.vector_store %arg5[%c0_5, %c0_6], %5 {strides = array<i32>} : memref<8x128xf32, #tpu.memory_space<vmem>>, vector<8x128xf32>,
    return
  }
  func.func @transform_0(%arg0: i32, %arg1: i32) -> (i32, i32) {
    %c0_i32 = arith.constant 0 : i32
    %c0_i32_0 = arith.constant 0 : i32
    return %arg1, %c0_i32 : i32, i32
  }
  func.func @transform_1(%arg0: i32, %arg1: i32) -> (i32, i32) {
    %c0_i32 = arith.constant 0 : i32
    %c0_i32_0 = arith.constant 0 : i32
    return %c0_i32, %arg0 : i32, i32
  }
  func.func @transform_2(%arg0: i32, %arg1: i32) -> (i32, i32) {
    %c0_i32 = arith.constant 0 : i32
    %c0_i32_0 = arith.constant 0 : i32
    return %c0_i32, %arg0 : i32, i32
  }
  func.func @transform_3(%arg0: i32, %arg1: i32) -> (i32, i32) {
    %c1_i32 = arith.constant 1 : i32
    %0 = arith.muli %arg1, %c1_i32 : i32
    %1 = arith.addi %0, %arg0 : i32
    %c0_i32 = arith.constant 0 : i32
    %c0_i32_0 = arith.constant 0 : i32
    return %c0_i32, %1 : i32, i32
  }
}

</mosaic_0001>

<llo_original>
// kernel: decoder_rnn_forward.5
$region0: #{decoder_rnn_forward.5}
  #allocation0 [shape = 'u32[]', space=smem, size = 0x4, offset = 0x4, fixed_abs, tag = 'smem constant byte address 0x4 - core index']
  #allocation1 [shape = 'u32[72,128]{1,0:T(1,128)}', space=vmem, size = 0x9000, scoped, tag = 'internal scratch']
  %s0 = inlined_call_operand.vmem [shape: f32[64,128], index: 0, kind: input, shape index: {}]
  %s1 = inlined_call_operand.vmem [shape: f32[128,128], index: 1, kind: input, shape index: {}]
  %s2 = inlined_call_operand.vmem [shape: f32[1,128], index: 2, kind: input, shape index: {}]
  %s3 = inlined_call_operand.vmem [shape: f32[8,1024], index: 3, kind: output, shape index: {}]
  %s4 = sld [smem:[#allocation0]]
  $region45: #{decoder_rnn_forward.5} parent=0
    _
  %s6 = ssub.s32 1, %s4
  %s7 = scalar_select 0, %s6, %s4
  loop: start=0, step=1, limit=10
  $region2: #{decoder_rnn_forward.5} parent=0 // loop_pre_header
    _
  $region3: #{decoder_rnn_forward.5} parent=0 // loop_header
    %s9 = sphi 0, %s13
    %p10 = scmp.ge.s32.totalorder %s9, 10
    %s16 = sphi 0, %s28
    %s17 = sphi 0, %s24
    %s18 = sphi 0, %s16
    %s19 = sphi 0, %s17
    %s20 = sphi 0, %s18
    %s21 = sphi 0, %s19
    %s31 = sphi 0, %s33
    %s34 = sphi 0, %s31
    %s35 = sphi 0, %s34
    %s51 = sphi 0, %s35
    %s57 = sphi 0, %s59
    %s60 = sphi 0, %s57
    %s61 = sphi 0, %s60
    %s77 = sphi 0, %s61
    %s83 = sphi 0, %s85
    %s86 = sphi 0, %s83
    %s87 = sphi 0, %s86
    %s103 = sphi 0, %s87
    %s111 = sphi 0, %s113
    %s114 = sphi 0, %s111
    %s115 = sphi 0, %s114
    %s131 = sphi 0, %s115
  $region4: #{decoder_rnn_forward.5} parent=0 // loop_header_branch
    %12 = sbr.rel (%p10) target = $region8
  $region5: #{decoder_rnn_forward.5} parent=0 // loop_body
    %s14 = ssub.s32 %s9, 1
    %s15 = ssub.s32 %s9, 2
    %s22 = sadd.s32 1, %s17
    %p23 = scmp.ge.s32.totalorder %s22, 8
    %s24 = scalar_select %p23, 0, %s22
    %s25 = sadd.s32 1, %s16
    %s26 = scalar_select %p23, %s25, %s16
    %p27 = scmp.ge.s32.totalorder %s26, 1
    %s28 = scalar_select %p27, 0, %s26
    %s29 = ssub.s32 %s17, %s24
    %p30 = scmp.eq.s32.totalorder %s29, 0
    %s32 = sadd.s32 %s31, 1
    %s33 = scalar_select %p30, %s31, %s32
    %p36 = pneg %p30
    %p37 = scmp.eq.s32.totalorder %s9, 7
    %p38 = por %p36, %p37
    %p39 = scmp.ne.s32.totalorder %s31, %s34
    %p40 = scmp.eq.s32.totalorder %s9, 0
    %p41 = por %p39, %p40
    %p42 = scmp.ne.s32.totalorder %s31, %s34
    %p43 = scmp.eq.s32.totalorder %s14, 7
    %p44 = por %p42, %p43
    %p45 = scmp.ne.s32.totalorder %s34, %s35
    %p46 = scmp.eq.s32.totalorder %s14, 0
    %p47 = por %p45, %p46
    %p48 = scmp.ne.s32.totalorder %s34, %s35
    %p49 = scmp.eq.s32.totalorder %s15, 7
    %p50 = por %p48, %p49
    %p52 = scmp.ne.s32.totalorder %s35, %s51
    %p53 = scmp.eq.s32.totalorder %s15, 0
    %p54 = por %p52, %p53
    %s55 = ssub.s32 %s16, %s28
    %p56 = scmp.eq.s32.totalorder %s55, 0
    %s58 = sadd.s32 %s57, 1
    %s59 = scalar_select %p56, %s57, %s58
    %p62 = pneg %p56
    %p63 = scmp.eq.s32.totalorder %s9, 7
    %p64 = por %p62, %p63
    %p65 = scmp.ne.s32.totalorder %s57, %s60
    %p66 = scmp.eq.s32.totalorder %s9, 0
    %p67 = por %p65, %p66
    %p68 = scmp.ne.s32.totalorder %s57, %s60
    %p69 = scmp.eq.s32.totalorder %s14, 7
    %p70 = por %p68, %p69
    %p71 = scmp.ne.s32.totalorder %s60, %s61
    %p72 = scmp.eq.s32.totalorder %s14, 0
    %p73 = por %p71, %p72
    %p74 = scmp.ne.s32.totalorder %s60, %s61
    %p75 = scmp.eq.s32.totalorder %s15, 7
    %p76 = por %p74, %p75
    %p78 = scmp.ne.s32.totalorder %s61, %s77
    %p79 = scmp.eq.s32.totalorder %s15, 0
    %p80 = por %p78, %p79
    %s81 = ssub.s32 %s16, %s28
    %p82 = scmp.eq.s32.totalorder %s81, 0
    %s84 = sadd.s32 %s83, 1
    %s85 = scalar_select %p82, %s83, %s84
    %p88 = pneg %p82
    %p89 = scmp.eq.s32.totalorder %s9, 7
    %p90 = por %p88, %p89
    %p91 = scmp.ne.s32.totalorder %s83, %s86
    %p92 = scmp.eq.s32.totalorder %s9, 0
    %p93 = por %p91, %p92
    %p94 = scmp.ne.s32.totalorder %s83, %s86
    %p95 = scmp.eq.s32.totalorder %s14, 7
    %p96 = por %p94, %p95
    %p97 = scmp.ne.s32.totalorder %s86, %s87
    %p98 = scmp.eq.s32.totalorder %s14, 0
    %p99 = por %p97, %p98
    %p100 = scmp.ne.s32.totalorder %s86, %s87
    %p101 = scmp.eq.s32.totalorder %s15, 7
    %p102 = por %p100, %p101
    %p104 = scmp.ne.s32.totalorder %s87, %s103
    %p105 = scmp.eq.s32.totalorder %s15, 0
    %p106 = por %p104, %p105
    %s107 = sadd.s32 %s17, %s16
    %s108 = sadd.s32 %s24, %s28
    %s109 = ssub.s32 %s107, %s108
    %p110 = scmp.eq.s32.totalorder %s109, 0
    %s112 = sadd.s32 %s111, 1
    %s113 = scalar_select %p110, %s111, %s112
    %p116 = pneg %p110
    %p117 = scmp.eq.s32.totalorder %s9, 7
    %p118 = por %p116, %p117
    %p119 = scmp.ne.s32.totalorder %s111, %s114
    %p120 = scmp.eq.s32.totalorder %s9, 0
    %p121 = por %p119, %p120
    %p122 = scmp.ne.s32.totalorder %s111, %s114
    %p123 = scmp.eq.s32.totalorder %s14, 7
    %p124 = por %p122, %p123
    %p125 = scmp.ne.s32.totalorder %s114, %s115
    %p126 = scmp.eq.s32.totalorder %s14, 0
    %p127 = por %p125, %p126
    %p128 = scmp.ne.s32.totalorder %s114, %s115
    %p129 = scmp.eq.s32.totalorder %s15, 7
    %p130 = por %p128, %p129
    %p132 = scmp.ne.s32.totalorder %s115, %s131
    %p133 = scmp.eq.s32.totalorder %s15, 0
    %p134 = por %p132, %p133
    %p135 = scmp.le.s32.totalorder 1, %s9
    %p136 = scmp.lt.s32.totalorder %s9, 9
    %p137 = pnand %p135, %p136
    %p138 = pneg %p137
    // Predicated region
    $region9: #{decoder_rnn_forward.5} parent=5 // pred_check
      _
    $region10: #{decoder_rnn_forward.5} parent=5 // pred_check_branch
      %140 = sbr.rel (%p137) target = $region12
    $region11: #{decoder_rnn_forward.5} parent=5 // pred_region
      %s141 = ssub.s32 %s9, 1
      // Predicated region
      $region13: #{decoder_rnn_forward.5} parent=11 // pred_check
        %p142 = pneg %p73
      $region14: #{decoder_rnn_forward.5} parent=11 // pred_check_branch
        %144 = sbr.rel (%p142) target = $region16
      $region15: #{decoder_rnn_forward.5} parent=11 // pred_region
        %p145 = scmp.lt.s32.totalorder %s18, 0
        %s146 = scalar_select %p145, %s18, 0
        %s147 = smul.addr %s146, 8
        %s148 = scalar_lea.vmem %s1, %s147
      $region16: #{decoder_rnn_forward.5} parent=11 // pred_fallthru
        _
      // Predicated region
      $region17: #{decoder_rnn_forward.5} parent=11 // pred_check
        %p149 = pneg %p99
      $region18: #{decoder_rnn_forward.5} parent=11 // pred_check_branch
        %151 = sbr.rel (%p149) target = $region20
      $region19: #{decoder_rnn_forward.5} parent=11 // pred_region
        %p152 = scmp.lt.s32.totalorder %s18, 0
        %s153 = scalar_select %p152, %s18, 0
        %s154 = scalar_lea.vmem %s2, %s153
      $region20: #{decoder_rnn_forward.5} parent=11 // pred_fallthru
        _
    $region12: #{decoder_rnn_forward.5} parent=5 // pred_fallthru
      _
    %p155 = scmp.lt.s32.totalorder %s9, 8
    // Predicated region
    $region21: #{decoder_rnn_forward.5} parent=5 // pred_check
      %p156 = pneg %p155
    $region22: #{decoder_rnn_forward.5} parent=5 // pred_check_branch
      %158 = sbr.rel (%p156) target = $region24
    $region23: #{decoder_rnn_forward.5} parent=5 // pred_region
      // Predicated region
      $region25: #{decoder_rnn_forward.5} parent=23 // pred_check
        %p159 = pneg %p41
      $region26: #{decoder_rnn_forward.5} parent=23 // pred_check_branch
        %161 = sbr.rel (%p159) target = $region28
      $region27: #{decoder_rnn_forward.5} parent=23 // pred_region
        %p162 = scmp.lt.s32.totalorder %s17, 7
        %s163 = scalar_select %p162, %s17, 7
        %s164 = smul.addr %s163, 8
        %s165 = scalar_lea.vmem %s0, %s164
      $region28: #{decoder_rnn_forward.5} parent=23 // pred_fallthru
        _
    $region24: #{decoder_rnn_forward.5} parent=5 // pred_fallthru
      _
    %p166 = scmp.le.s32.totalorder 1, %s9
    %p167 = scmp.lt.s32.totalorder %s9, 9
    %p168 = pnand %p166, %p167
    %p169 = pneg %p168
    // Predicated region
    $region29: #{decoder_rnn_forward.5} parent=5 // pred_check
      _
    $region30: #{decoder_rnn_forward.5} parent=5 // pred_check_branch
      %171 = sbr.rel (%p168) target = $region32
    $region31: #{decoder_rnn_forward.5} parent=5 // pred_region
      %s172 = ssub.s32 %s9, 1
      %p173 = scmp.lt.s32.totalorder %s19, 7
      %s174 = scalar_select %p173, %s19, 7
      %s175 = smul.addr %s174, 8
      %s176 = scalar_lea.vmem %s0, %s175
      %p177 = pneg %p47
      %p178 = pneg %p44
      %p179 = scmp.lt.s32.totalorder %s18, 0
      %s180 = scalar_select %p179, %s18, 0
      %s181 = smul.addr %s180, 8
      %s182 = scalar_lea.vmem %s1, %s181
      %p183 = pneg %p73
      %p184 = pneg %p70
      %p185 = scmp.lt.s32.totalorder %s18, 0
      %s186 = scalar_select %p185, %s18, 0
      %s187 = scalar_lea.vmem %s2, %s186
      %p188 = pneg %p99
      %p189 = pneg %p96
      %p190 = pneg %p127
      %p191 = pneg %p124
      %s192 = sadd.s32 %s19, %s18
      %p193 = scmp.lt.s32.totalorder %s192, 7
      %s194 = scalar_select %p193, %s192, 7
      %s195 = smul.addr %s194, 8
      %s196 = scalar_lea.vmem %s3, %s195
      %p197 = scmp.lt.s32.totalorder %s19, 7
      %s198 = scalar_select %p197, %s19, 7
      %s199 = smul.addr %s198, 8
      %s200 = scalar_lea.vmem %s0, %s199
      %p201 = scmp.lt.s32.totalorder %s18, 0
      %s202 = scalar_select %p201, %s18, 0
      %s203 = smul.addr %s202, 8
      %s204 = scalar_lea.vmem %s1, %s203
      %p205 = scmp.lt.s32.totalorder %s18, 0
      %s206 = scalar_select %p205, %s18, 0
      %s207 = scalar_lea.vmem %s2, %s206
      %s208 = sadd.s32 %s19, %s18
      %p209 = scmp.lt.s32.totalorder %s208, 7
      %s210 = scalar_select %p209, %s208, 7
      %s211 = smul.addr %s210, 8
      %s212 = scalar_lea.vmem %s3, %s211
      %s213 = sadd.s32 %s19, %s18
      %v214 = vld [vmem:[%s200] sm:$0xff]
      %v215 = vld [vmem:[%s204] sm:$0xff]
      %v216 = vld [vmem:[%s204 + $0x8] sm:$0xff]
      %v217 = vld [vmem:[%s204 + $0x10] sm:$0xff]
      %v218 = vld [vmem:[%s204 + $0x18] sm:$0xff]
      %v219 = vld [vmem:[%s204 + $0x20] sm:$0xff]
      %v220 = vld [vmem:[%s204 + $0x28] sm:$0xff]
      %v221 = vld [vmem:[%s204 + $0x30] sm:$0xff]
      %v222 = vld [vmem:[%s204 + $0x38] sm:$0xff]
      %v223 = vld [vmem:[%s204 + $0x40] sm:$0xff]
      %v224 = vld [vmem:[%s204 + $0x48] sm:$0xff]
      %v225 = vld [vmem:[%s204 + $0x50] sm:$0xff]
      %v226 = vld [vmem:[%s204 + $0x58] sm:$0xff]
      %v227 = vld [vmem:[%s204 + $0x60] sm:$0xff]
      %v228 = vld [vmem:[%s204 + $0x68] sm:$0xff]
      %v229 = vld [vmem:[%s204 + $0x70] sm:$0xff]
      %v230 = vld [vmem:[%s204 + $0x78] sm:$0xff]
      %v231 = vld [vmem:[%s207] sm:$0x1]
      %v233 = vperm.slane %v231, 0
      %235 = vmatpush.msra.mxu0 %v230
      %236 = vmatpush.msra.mxu0 %v229
      %237 = vmatpush.msra.mxu0 %v228
      %238 = vmatpush.msra.mxu0 %v227
      %239 = vmatpush.msra.mxu0 %v226
      %240 = vmatpush.msra.mxu0 %v225
      %241 = vmatpush.msra.mxu0 %v224
      %242 = vmatpush.msra.mxu0 %v223
      %243 = vmatpush.msra.mxu0 %v222
      %244 = vmatpush.msra.mxu0 %v221
      %245 = vmatpush.msra.mxu0 %v220
      %246 = vmatpush.msra.mxu0 %v219
      %247 = vmatpush.msra.mxu0 %v218
      %248 = vmatpush.msra.mxu0 %v217
      %249 = vmatpush.msra.mxu0 %v216
      %250 = vmatpush.msra.mxu0 %v215
      %251 = vmatmul.f32.gmra.mxu0 %v214
      %v252 = vpop.f32.mrf.mxu0
      %v253 = vadd.f32 %v233, %v252
      %254 = vdwg.mxu0
      %255 = vst [vmem:[%s212] sm:$0xff] %v253
      %s256 = sadd.s32 %s19, %s18
      %p257 = scmp.lt.s32.totalorder %s256, 7
      %s258 = scalar_select %p257, %s256, 7
      %s259 = smul.addr %s258, 8
      %s260 = scalar_lea.vmem %s3, %s259
      // Predicated region
      $region33: #{decoder_rnn_forward.5} parent=31 // pred_check
        %p261 = pneg %p124
      $region34: #{decoder_rnn_forward.5} parent=31 // pred_check_branch
        %263 = sbr.rel (%p261) target = $region36
      $region35: #{decoder_rnn_forward.5} parent=31 // pred_region
        %s264 = sadd.s32 %s19, %s18
      $region36: #{decoder_rnn_forward.5} parent=31 // pred_fallthru
        _
    $region32: #{decoder_rnn_forward.5} parent=5 // pred_fallthru
      _
    %p265 = scmp.le.s32.totalorder 2, %s9
    // Predicated region
    $region37: #{decoder_rnn_forward.5} parent=5 // pred_check
      %p266 = pneg %p265
    $region38: #{decoder_rnn_forward.5} parent=5 // pred_check_branch
      %268 = sbr.rel (%p266) target = $region40
    $region39: #{decoder_rnn_forward.5} parent=5 // pred_region
      %s269 = ssub.s32 %s9, 2
      // Predicated region
      $region41: #{decoder_rnn_forward.5} parent=39 // pred_check
        %p270 = pneg %p130
      $region42: #{decoder_rnn_forward.5} parent=39 // pred_check_branch
        %272 = sbr.rel (%p270) target = $region44
      $region43: #{decoder_rnn_forward.5} parent=39 // pred_region
        %s273 = sadd.s32 %s21, %s20
        %p274 = scmp.lt.s32.totalorder %s273, 7
        %s275 = scalar_select %p274, %s273, 7
        %s276 = smul.addr %s275, 8
        %s277 = scalar_lea.vmem %s3, %s276
      $region44: #{decoder_rnn_forward.5} parent=39 // pred_fallthru
        _
    $region40: #{decoder_rnn_forward.5} parent=5 // pred_fallthru
      _
  $region6: #{decoder_rnn_forward.5} parent=0 // loop_footer
    %s13 = sadd.s32 1, %s9
  $region7: #{decoder_rnn_forward.5} parent=0 // loop_footer_branch
    %8 = sbr.rel target = $region3
  $region8: #{decoder_rnn_forward.5} parent=0 // loop_exit
    _

// kernel: decoder_rnn_forward.3
$region0: #{decoder_rnn_forward.3}
  #allocation0 [shape = 'u32[]', space=smem, size = 0x4, offset = 0x4, fixed_abs, tag = 'smem constant byte address 0x4 - core index']
  #allocation1 [shape = 'u32[72,128]{1,0:T(1,128)}', space=vmem, size = 0x9000, scoped, tag = 'internal scratch']
  %s0 = inlined_call_operand.vmem [shape: f32[64,128], index: 0, kind: input, shape index: {}]
  %s1 = inlined_call_operand.vmem [shape: f32[128,512], index: 1, kind: input, shape index: {}]
  %s2 = inlined_call_operand.vmem [shape: f32[1,512], index: 2, kind: input, shape index: {}]
  %s3 = inlined_call_operand.vmem [shape: f32[64,512], index: 3, kind: output, shape index: {}]
  %s4 = sld [smem:[#allocation0]]
  $region22: #{decoder_rnn_forward.3} parent=0
    _
  %s6 = ssub.s32 1, %s4
  %s7 = scalar_select 0, %s6, %s4
  // Predicated region
  $region2: #{decoder_rnn_forward.3} parent=0 // pred_check
    _
  $region3: #{decoder_rnn_forward.3} parent=0 // pred_check_branch
    %9 = sbr.rel (0) target = $region5
  $region4: #{decoder_rnn_forward.3} parent=0 // pred_region
    _
  $region5: #{decoder_rnn_forward.3} parent=0 // pred_fallthru
    _
  // Predicated region
  $region6: #{decoder_rnn_forward.3} parent=0 // pred_check
    _
  $region7: #{decoder_rnn_forward.3} parent=0 // pred_check_branch
    %11 = sbr.rel (0) target = $region9
  $region8: #{decoder_rnn_forward.3} parent=0 // pred_region
    _
  $region9: #{decoder_rnn_forward.3} parent=0 // pred_fallthru
    _
  // Predicated region
  $region10: #{decoder_rnn_forward.3} parent=0 // pred_check
    _
  $region11: #{decoder_rnn_forward.3} parent=0 // pred_check_branch
    %13 = sbr.rel (0) target = $region13
  $region12: #{decoder_rnn_forward.3} parent=0 // pred_region
    _
  $region13: #{decoder_rnn_forward.3} parent=0 // pred_fallthru
    _
  %v14 = vld [vmem:[%s0] sm:$0xff]
  %v15 = vld [vmem:[%s0 + $0x8] sm:$0xff]
  %v16 = vld [vmem:[%s0 + $0x10] sm:$0xff]
  %v17 = vld [vmem:[%s0 + $0x18] sm:$0xff]
  %v18 = vld [vmem:[%s0 + $0x20] sm:$0xff]
  %v19 = vld [vmem:[%s0 + $0x28] sm:$0xff]
  %v20 = vld [vmem:[%s0 + $0x30] sm:$0xff]
  %v21 = vld [vmem:[%s0 + $0x38] sm:$0xff]
  %v22 = vld [vmem:[%s1] sm:$0xff]
  %v23 = vld [vmem:[%s1 + $0x8] sm:$0xff]
  %v24 = vld [vmem:[%s1 + $0x10] sm:$0xff]
  %v25 = vld [vmem:[%s1 + $0x18] sm:$0xff]
  %v26 = vld [vmem:[%s1 + $0x20] sm:$0xff]
  %v27 = vld [vmem:[%s1 + $0x28] sm:$0xff]
  %v28 = vld [vmem:[%s1 + $0x30] sm:$0xff]
  %v29 = vld [vmem:[%s1 + $0x38] sm:$0xff]
  %v30 = vld [vmem:[%s1 + $0x40] sm:$0xff]
  %v31 = vld [vmem:[%s1 + $0x48] sm:$0xff]
  %v32 = vld [vmem:[%s1 + $0x50] sm:$0xff]
  %v33 = vld [vmem:[%s1 + $0x58] sm:$0xff]
  %v34 = vld [vmem:[%s1 + $0x60] sm:$0xff]
  %v35 = vld [vmem:[%s1 + $0x68] sm:$0xff]
  %v36 = vld [vmem:[%s1 + $0x70] sm:$0xff]
  %v37 = vld [vmem:[%s1 + $0x78] sm:$0xff]
  %v38 = vld [vmem:[%s1 + $0x80] sm:$0xff]
  %v39 = vld [vmem:[%s1 + $0x88] sm:$0xff]
  %v40 = vld [vmem:[%s1 + $0x90] sm:$0xff]
  %v41 = vld [vmem:[%s1 + $0x98] sm:$0xff]
  %v42 = vld [vmem:[%s1 + $0xa0] sm:$0xff]
  %v43 = vld [vmem:[%s1 + $0xa8] sm:$0xff]
  %v44 = vld [vmem:[%s1 + $0xb0] sm:$0xff]
  %v45 = vld [vmem:[%s1 + $0xb8] sm:$0xff]
  %v46 = vld [vmem:[%s1 + $0xc0] sm:$0xff]
  %v47 = vld [vmem:[%s1 + $0xc8] sm:$0xff]
  %v48 = vld [vmem:[%s1 + $0xd0] sm:$0xff]
  %v49 = vld [vmem:[%s1 + $0xd8] sm:$0xff]
  %v50 = vld [vmem:[%s1 + $0xe0] sm:$0xff]
  %v51 = vld [vmem:[%s1 + $0xe8] sm:$0xff]
  %v52 = vld [vmem:[%s1 + $0xf0] sm:$0xff]
  %v53 = vld [vmem:[%s1 + $0xf8] sm:$0xff]
  %v54 = vld [vmem:[%s1 + $0x100] sm:$0xff]
  %v55 = vld [vmem:[%s1 + $0x108] sm:$0xff]
  %v56 = vld [vmem:[%s1 + $0x110] sm:$0xff]
  %v57 = vld [vmem:[%s1 + $0x118] sm:$0xff]
  %v58 = vld [vmem:[%s1 + $0x120] sm:$0xff]
  %v59 = vld [vmem:[%s1 + $0x128] sm:$0xff]
  %v60 = vld [vmem:[%s1 + $0x130] sm:$0xff]
  %v61 = vld [vmem:[%s1 + $0x138] sm:$0xff]
  %v62 = vld [vmem:[%s1 + $0x140] sm:$0xff]
  %v63 = vld [vmem:[%s1 + $0x148] sm:$0xff]
  %v64 = vld [vmem:[%s1 + $0x150] sm:$0xff]
  %v65 = vld [vmem:[%s1 + $0x158] sm:$0xff]
  %v66 = vld [vmem:[%s1 + $0x160] sm:$0xff]
  %v67 = vld [vmem:[%s1 + $0x168] sm:$0xff]
  %v68 = vld [vmem:[%s1 + $0x170] sm:$0xff]
  %v69 = vld [vmem:[%s1 + $0x178] sm:$0xff]
  %v70 = vld [vmem:[%s1 + $0x180] sm:$0xff]
  %v71 = vld [vmem:[%s1 + $0x188] sm:$0xff]
  %v72 = vld [vmem:[%s1 + $0x190] sm:$0xff]
  %v73 = vld [vmem:[%s1 + $0x198] sm:$0xff]
  %v74 = vld [vmem:[%s1 + $0x1a0] sm:$0xff]
  %v75 = vld [vmem:[%s1 + $0x1a8] sm:$0xff]
  %v76 = vld [vmem:[%s1 + $0x1b0] sm:$0xff]
  %v77 = vld [vmem:[%s1 + $0x1b8] sm:$0xff]
  %v78 = vld [vmem:[%s1 + $0x1c0] sm:$0xff]
  %v79 = vld [vmem:[%s1 + $0x1c8] sm:$0xff]
  %v80 = vld [vmem:[%s1 + $0x1d0] sm:$0xff]
  %v81 = vld [vmem:[%s1 + $0x1d8] sm:$0xff]
  %v82 = vld [vmem:[%s1 + $0x1e0] sm:$0xff]
  %v83 = vld [vmem:[%s1 + $0x1e8] sm:$0xff]
  %v84 = vld [vmem:[%s1 + $0x1f0] sm:$0xff]
  %v85 = vld [vmem:[%s1 + $0x1f8] sm:$0xff]
  %v86 = vld [vmem:[%s2] sm:$0xf]
  %v88 = vperm.slane %v86, 0
  %v89 = vperm.slane %v86, 1
  %v90 = vperm.slane %v86, 2
  %v91 = vperm.slane %v86, 3
  %96 = vmatpush.msra.mxu0 %v82
  %97 = vmatpush.msra.mxu0 %v78
  %98 = vmatpush.msra.mxu0 %v74
  %99 = vmatpush.msra.mxu0 %v70
  %100 = vmatpush.msra.mxu0 %v66
  %101 = vmatpush.msra.mxu0 %v62
  %102 = vmatpush.msra.mxu0 %v58
  %103 = vmatpush.msra.mxu0 %v54
  %104 = vmatpush.msra.mxu0 %v50
  %105 = vmatpush.msra.mxu0 %v46
  %106 = vmatpush.msra.mxu0 %v42
  %107 = vmatpush.msra.mxu0 %v38
  %108 = vmatpush.msra.mxu0 %v34
  %109 = vmatpush.msra.mxu0 %v30
  %110 = vmatpush.msra.mxu0 %v26
  %111 = vmatpush.msra.mxu0 %v22
  %112 = vmatmul.f32.gmra.mxu0 %v14
  %v113 = vpop.f32.mrf.mxu0
  %v114 = vadd.f32 %v88, %v113
  %115 = vmatmul.f32.gmra.mxu0 %v15
  %v116 = vpop.f32.mrf.mxu0
  %v117 = vadd.f32 %v88, %v116
  %118 = vmatmul.f32.gmra.mxu0 %v16
  %v119 = vpop.f32.mrf.mxu0
  %v120 = vadd.f32 %v88, %v119
  %121 = vmatmul.f32.gmra.mxu0 %v17
  %v122 = vpop.f32.mrf.mxu0
  %v123 = vadd.f32 %v88, %v122
  %124 = vmatmul.f32.gmra.mxu0 %v18
  %v125 = vpop.f32.mrf.mxu0
  %v126 = vadd.f32 %v88, %v125
  %127 = vmatmul.f32.gmra.mxu0 %v19
  %v128 = vpop.f32.mrf.mxu0
  %v129 = vadd.f32 %v88, %v128
  %130 = vmatmul.f32.gmra.mxu0 %v20
  %v131 = vpop.f32.mrf.mxu0
  %v132 = vadd.f32 %v88, %v131
  %133 = vmatmul.f32.gmra.mxu0 %v21
  %v134 = vpop.f32.mrf.mxu0
  %v135 = vadd.f32 %v88, %v134
  %136 = vdwg.mxu0
  %137 = vmatpush.msra.mxu0 %v83
  %138 = vmatpush.msra.mxu0 %v79
  %139 = vmatpush.msra.mxu0 %v75
  %140 = vmatpush.msra.mxu0 %v71
  %141 = vmatpush.msra.mxu0 %v67
  %142 = vmatpush.msra.mxu0 %v63
  %143 = vmatpush.msra.mxu0 %v59
  %144 = vmatpush.msra.mxu0 %v55
  %145 = vmatpush.msra.mxu0 %v51
  %146 = vmatpush.msra.mxu0 %v47
  %147 = vmatpush.msra.mxu0 %v43
  %148 = vmatpush.msra.mxu0 %v39
  %149 = vmatpush.msra.mxu0 %v35
  %150 = vmatpush.msra.mxu0 %v31
  %151 = vmatpush.msra.mxu0 %v27
  %152 = vmatpush.msra.mxu0 %v23
  %153 = vmatmul.f32.gmra.mxu0 %v14
  %v154 = vpop.f32.mrf.mxu0
  %v155 = vadd.f32 %v89, %v154
  %156 = vmatmul.f32.gmra.mxu0 %v15
  %v157 = vpop.f32.mrf.mxu0
  %v158 = vadd.f32 %v89, %v157
  %159 = vmatmul.f32.gmra.mxu0 %v16
  %v160 = vpop.f32.mrf.mxu0
  %v161 = vadd.f32 %v89, %v160
  %162 = vmatmul.f32.gmra.mxu0 %v17
  %v163 = vpop.f32.mrf.mxu0
  %v164 = vadd.f32 %v89, %v163
  %165 = vmatmul.f32.gmra.mxu0 %v18
  %v166 = vpop.f32.mrf.mxu0
  %v167 = vadd.f32 %v89, %v166
  %168 = vmatmul.f32.gmra.mxu0 %v19
  %v169 = vpop.f32.mrf.mxu0
  %v170 = vadd.f32 %v89, %v169
  %171 = vmatmul.f32.gmra.mxu0 %v20
  %v172 = vpop.f32.mrf.mxu0
  %v173 = vadd.f32 %v89, %v172
  %174 = vmatmul.f32.gmra.mxu0 %v21
  %v175 = vpop.f32.mrf.mxu0
  %v176 = vadd.f32 %v89, %v175
  %177 = vdwg.mxu0
  %178 = vmatpush.msra.mxu0 %v84
  %179 = vmatpush.msra.mxu0 %v80
  %180 = vmatpush.msra.mxu0 %v76
  %181 = vmatpush.msra.mxu0 %v72
  %182 = vmatpush.msra.mxu0 %v68
  %183 = vmatpush.msra.mxu0 %v64
  %184 = vmatpush.msra.mxu0 %v60
  %185 = vmatpush.msra.mxu0 %v56
  %186 = vmatpush.msra.mxu0 %v52
  %187 = vmatpush.msra.mxu0 %v48
  %188 = vmatpush.msra.mxu0 %v44
  %189 = vmatpush.msra.mxu0 %v40
  %190 = vmatpush.msra.mxu0 %v36
  %191 = vmatpush.msra.mxu0 %v32
  %192 = vmatpush.msra.mxu0 %v28
  %193 = vmatpush.msra.mxu0 %v24
  %194 = vmatmul.f32.gmra.mxu0 %v14
  %v195 = vpop.f32.mrf.mxu0
  %v196 = vadd.f32 %v90, %v195
  %197 = vmatmul.f32.gmra.mxu0 %v15
  %v198 = vpop.f32.mrf.mxu0
  %v199 = vadd.f32 %v90, %v198
  %200 = vmatmul.f32.gmra.mxu0 %v16
  %v201 = vpop.f32.mrf.mxu0
  %v202 = vadd.f32 %v90, %v201
  %203 = vmatmul.f32.gmra.mxu0 %v17
  %v204 = vpop.f32.mrf.mxu0
  %v205 = vadd.f32 %v90, %v204
  %206 = vmatmul.f32.gmra.mxu0 %v18
  %v207 = vpop.f32.mrf.mxu0
  %v208 = vadd.f32 %v90, %v207
  %209 = vmatmul.f32.gmra.mxu0 %v19
  %v210 = vpop.f32.mrf.mxu0
  %v211 = vadd.f32 %v90, %v210
  %212 = vmatmul.f32.gmra.mxu0 %v20
  %v213 = vpop.f32.mrf.mxu0
  %v214 = vadd.f32 %v90, %v213
  %215 = vmatmul.f32.gmra.mxu0 %v21
  %v216 = vpop.f32.mrf.mxu0
  %v217 = vadd.f32 %v90, %v216
  %218 = vdwg.mxu0
  %219 = vmatpush.msra.mxu0 %v85
  %220 = vmatpush.msra.mxu0 %v81
  %221 = vmatpush.msra.mxu0 %v77
  %222 = vmatpush.msra.mxu0 %v73
  %223 = vmatpush.msra.mxu0 %v69
  %224 = vmatpush.msra.mxu0 %v65
  %225 = vmatpush.msra.mxu0 %v61
  %226 = vmatpush.msra.mxu0 %v57
  %227 = vmatpush.msra.mxu0 %v53
  %228 = vmatpush.msra.mxu0 %v49
  %229 = vmatpush.msra.mxu0 %v45
  %230 = vmatpush.msra.mxu0 %v41
  %231 = vmatpush.msra.mxu0 %v37
  %232 = vmatpush.msra.mxu0 %v33
  %233 = vmatpush.msra.mxu0 %v29
  %234 = vmatpush.msra.mxu0 %v25
  %235 = vmatmul.f32.gmra.mxu0 %v14
  %v236 = vpop.f32.mrf.mxu0
  %v237 = vadd.f32 %v91, %v236
  %238 = vmatmul.f32.gmra.mxu0 %v15
  %v239 = vpop.f32.mrf.mxu0
  %v240 = vadd.f32 %v91, %v239
  %241 = vmatmul.f32.gmra.mxu0 %v16
  %v242 = vpop.f32.mrf.mxu0
  %v243 = vadd.f32 %v91, %v242
  %244 = vmatmul.f32.gmra.mxu0 %v17
  %v245 = vpop.f32.mrf.mxu0
  %v246 = vadd.f32 %v91, %v245
  %247 = vmatmul.f32.gmra.mxu0 %v18
  %v248 = vpop.f32.mrf.mxu0
  %v249 = vadd.f32 %v91, %v248
  %250 = vmatmul.f32.gmra.mxu0 %v19
  %v251 = vpop.f32.mrf.mxu0
  %v252 = vadd.f32 %v91, %v251
  %253 = vmatmul.f32.gmra.mxu0 %v20
  %v254 = vpop.f32.mrf.mxu0
  %v255 = vadd.f32 %v91, %v254
  %256 = vmatmul.f32.gmra.mxu0 %v21
  %v257 = vpop.f32.mrf.mxu0
  %v258 = vadd.f32 %v91, %v257
  %259 = vdwg.mxu0
  %260 = vst [vmem:[%s3] sm:$0xff] %v114
  %261 = vst [vmem:[%s3 + $0x8] sm:$0xff] %v155
  %262 = vst [vmem:[%s3 + $0x10] sm:$0xff] %v196
  %263 = vst [vmem:[%s3 + $0x18] sm:$0xff] %v237
  %264 = vst [vmem:[%s3 + $0x20] sm:$0xff] %v117
  %265 = vst [vmem:[%s3 + $0x28] sm:$0xff] %v158
  %266 = vst [vmem:[%s3 + $0x30] sm:$0xff] %v199
  %267 = vst [vmem:[%s3 + $0x38] sm:$0xff] %v240
  %268 = vst [vmem:[%s3 + $0x40] sm:$0xff] %v120
  %269 = vst [vmem:[%s3 + $0x48] sm:$0xff] %v161
  %270 = vst [vmem:[%s3 + $0x50] sm:$0xff] %v202
  %271 = vst [vmem:[%s3 + $0x58] sm:$0xff] %v243
  %272 = vst [vmem:[%s3 + $0x60] sm:$0xff] %v123
  %273 = vst [vmem:[%s3 + $0x68] sm:$0xff] %v164
  %274 = vst [vmem:[%s3 + $0x70] sm:$0xff] %v205
  %275 = vst [vmem:[%s3 + $0x78] sm:$0xff] %v246
  %276 = vst [vmem:[%s3 + $0x80] sm:$0xff] %v126
  %277 = vst [vmem:[%s3 + $0x88] sm:$0xff] %v167
  %278 = vst [vmem:[%s3 + $0x90] sm:$0xff] %v208
  %279 = vst [vmem:[%s3 + $0x98] sm:$0xff] %v249
  %280 = vst [vmem:[%s3 + $0xa0] sm:$0xff] %v129
  %281 = vst [vmem:[%s3 + $0xa8] sm:$0xff] %v170
  %282 = vst [vmem:[%s3 + $0xb0] sm:$0xff] %v211
  %283 = vst [vmem:[%s3 + $0xb8] sm:$0xff] %v252
  %284 = vst [vmem:[%s3 + $0xc0] sm:$0xff] %v132
  %285 = vst [vmem:[%s3 + $0xc8] sm:$0xff] %v173
  %286 = vst [vmem:[%s3 + $0xd0] sm:$0xff] %v214
  %287 = vst [vmem:[%s3 + $0xd8] sm:$0xff] %v255
  %288 = vst [vmem:[%s3 + $0xe0] sm:$0xff] %v135
  %289 = vst [vmem:[%s3 + $0xe8] sm:$0xff] %v176
  %290 = vst [vmem:[%s3 + $0xf0] sm:$0xff] %v217
  %291 = vst [vmem:[%s3 + $0xf8] sm:$0xff] %v258
  // Predicated region
  $region14: #{decoder_rnn_forward.3} parent=0 // pred_check
    _
  $region15: #{decoder_rnn_forward.3} parent=0 // pred_check_branch
    %293 = sbr.rel (0) target = $region17
  $region16: #{decoder_rnn_forward.3} parent=0 // pred_region
    _
  $region17: #{decoder_rnn_forward.3} parent=0 // pred_fallthru
    _
  // Predicated region
  $region18: #{decoder_rnn_forward.3} parent=0 // pred_check
    _
  $region19: #{decoder_rnn_forward.3} parent=0 // pred_check_branch
    %295 = sbr.rel (0) target = $region21
  $region20: #{decoder_rnn_forward.3} parent=0 // pred_region
    _
  $region21: #{decoder_rnn_forward.3} parent=0 // pred_fallthru
    _

// kernel: decoder_rnn_forward.4
$region0: #{decoder_rnn_forward.4}
  #allocation0 [shape = 'u32[]', space=smem, size = 0x4, offset = 0x4, fixed_abs, tag = 'smem constant byte address 0x4 - core index']
  #allocation1 [shape = 'u32[72,128]{1,0:T(1,128)}', space=vmem, size = 0x9000, scoped, tag = 'internal scratch']
  #allocation2 [shape = 'f32[8,512]{1,0:T(8,128)}', space=vmem, size = 0x4000, scoped, tag = 'scratch operand']
  #allocation3 [shape = 'f32[8,128]{1,0:T(8,128)}', space=vmem, size = 0x1000, scoped, tag = 'scratch operand']
  #allocation4 [shape = 'f32[8,128]{1,0:T(8,128)}', space=vmem, size = 0x1000, scoped, tag = 'scratch operand']
  #allocation5 [shape = 'f32[8,128]{1,0:T(8,128)}', space=vmem, size = 0x1000, scoped, tag = 'scratch operand']
  %s0 = inlined_call_operand.vmem [shape: f32[8,8,512], index: 0, kind: input, shape index: {}]
  %s1 = inlined_call_operand.vmem [shape: f32[256,1024], index: 1, kind: input, shape index: {}]
  %s2 = inlined_call_operand.vmem [shape: f32[1,512], index: 2, kind: input, shape index: {}]
  %s3 = inlined_call_operand.vmem [shape: f32[8,8,128], index: 3, kind: output, shape index: {}]
  %s4 = sld [smem:[#allocation0]]
  $region26: #{decoder_rnn_forward.4} parent=0
    _
  %s6 = ssub.s32 1, %s4
  %s7 = scalar_select 0, %s6, %s4
  // Predicated region
  $region2: #{decoder_rnn_forward.4} parent=0 // pred_check
    _
  $region3: #{decoder_rnn_forward.4} parent=0 // pred_check_branch
    %9 = sbr.rel (0) target = $region5
  $region4: #{decoder_rnn_forward.4} parent=0 // pred_region
    _
  $region5: #{decoder_rnn_forward.4} parent=0 // pred_fallthru
    _
  // Predicated region
  $region6: #{decoder_rnn_forward.4} parent=0 // pred_check
    _
  $region7: #{decoder_rnn_forward.4} parent=0 // pred_check_branch
    %11 = sbr.rel (0) target = $region9
  $region8: #{decoder_rnn_forward.4} parent=0 // pred_region
    _
  $region9: #{decoder_rnn_forward.4} parent=0 // pred_fallthru
    _
  // Predicated region
  $region10: #{decoder_rnn_forward.4} parent=0 // pred_check
    _
  $region11: #{decoder_rnn_forward.4} parent=0 // pred_check_branch
    %13 = sbr.rel (0) target = $region13
  $region12: #{decoder_rnn_forward.4} parent=0 // pred_region
    _
  $region13: #{decoder_rnn_forward.4} parent=0 // pred_fallthru
    _
  %p14 = scmp.eq.s32.totalorder 0, 0
  // Predicated region
  $region14: #{decoder_rnn_forward.4} parent=0 // pred_check
    %p15 = pneg %p14
  $region15: #{decoder_rnn_forward.4} parent=0 // pred_check_branch
    %17 = sbr.rel (%p15) target = $region17
  $region16: #{decoder_rnn_forward.4} parent=0 // pred_region
    %18 = vst [vmem:[#allocation2] sm:$0xff] 0.0
    %19 = vst [vmem:[#allocation2 + $0x8] sm:$0xff] 0.0
    %20 = vst [vmem:[#allocation2 + $0x10] sm:$0xff] 0.0
    %21 = vst [vmem:[#allocation2 + $0x18] sm:$0xff] 0.0
    %22 = vst [vmem:[#allocation3] sm:$0xff] 0.0
    %23 = vst [vmem:[#allocation4] sm:$0xff] 0.0
    %24 = vst [vmem:[#allocation5] sm:$0xff] 0.0
  $region17: #{decoder_rnn_forward.4} parent=0 // pred_fallthru
    _
  %v25 = vld [vmem:[%s1] sm:$0xff]
  %v26 = vld [vmem:[%s1 + $0x8] sm:$0xff]
  %v27 = vld [vmem:[%s1 + $0x10] sm:$0xff]
  %v28 = vld [vmem:[%s1 + $0x18] sm:$0xff]
  %v29 = vld [vmem:[%s1 + $0x20] sm:$0xff]
  %v30 = vld [vmem:[%s1 + $0x28] sm:$0xff]
  %v31 = vld [vmem:[%s1 + $0x30] sm:$0xff]
  %v32 = vld [vmem:[%s1 + $0x38] sm:$0xff]
  %v33 = vld [vmem:[%s1 + $0x40] sm:$0xff]
  %v34 = vld [vmem:[%s1 + $0x48] sm:$0xff]
  %v35 = vld [vmem:[%s1 + $0x50] sm:$0xff]
  %v36 = vld [vmem:[%s1 + $0x58] sm:$0xff]
  %v37 = vld [vmem:[%s1 + $0x60] sm:$0xff]
  %v38 = vld [vmem:[%s1 + $0x68] sm:$0xff]
  %v39 = vld [vmem:[%s1 + $0x70] sm:$0xff]
  %v40 = vld [vmem:[%s1 + $0x78] sm:$0xff]
  %v41 = vld [vmem:[%s1 + $0x80] sm:$0xff]
  %v42 = vld [vmem:[%s1 + $0x88] sm:$0xff]
  %v43 = vld [vmem:[%s1 + $0x90] sm:$0xff]
  %v44 = vld [vmem:[%s1 + $0x98] sm:$0xff]
  %v45 = vld [vmem:[%s1 + $0xa0] sm:$0xff]
  %v46 = vld [vmem:[%s1 + $0xa8] sm:$0xff]
  %v47 = vld [vmem:[%s1 + $0xb0] sm:$0xff]
  %v48 = vld [vmem:[%s1 + $0xb8] sm:$0xff]
  %v49 = vld [vmem:[%s1 + $0xc0] sm:$0xff]
  %v50 = vld [vmem:[%s1 + $0xc8] sm:$0xff]
  %v51 = vld [vmem:[%s1 + $0xd0] sm:$0xff]
  %v52 = vld [vmem:[%s1 + $0xd8] sm:$0xff]
  %v53 = vld [vmem:[%s1 + $0xe0] sm:$0xff]
  %v54 = vld [vmem:[%s1 + $0xe8] sm:$0xff]
  %v55 = vld [vmem:[%s1 + $0xf0] sm:$0xff]
  %v56 = vld [vmem:[%s1 + $0xf8] sm:$0xff]
  %v57 = vld [vmem:[%s1 + $0x100] sm:$0xff]
  %v58 = vld [vmem:[%s1 + $0x108] sm:$0xff]
  %v59 = vld [vmem:[%s1 + $0x110] sm:$0xff]
  %v60 = vld [vmem:[%s1 + $0x118] sm:$0xff]
  %v61 = vld [vmem:[%s1 + $0x120] sm:$0xff]
  %v62 = vld [vmem:[%s1 + $0x128] sm:$0xff]
  %v63 = vld [vmem:[%s1 + $0x130] sm:$0xff]
  %v64 = vld [vmem:[%s1 + $0x138] sm:$0xff]
  %v65 = vld [vmem:[%s1 + $0x140] sm:$0xff]
  %v66 = vld [vmem:[%s1 + $0x148] sm:$0xff]
  %v67 = vld [vmem:[%s1 + $0x150] sm:$0xff]
  %v68 = vld [vmem:[%s1 + $0x158] sm:$0xff]
  %v69 = vld [vmem:[%s1 + $0x160] sm:$0xff]
  %v70 = vld [vmem:[%s1 + $0x168] sm:$0xff]
  %v71 = vld [vmem:[%s1 + $0x170] sm:$0xff]
  %v72 = vld [vmem:[%s1 + $0x178] sm:$0xff]
  %v73 = vld [vmem:[%s1 + $0x180] sm:$0xff]
  %v74 = vld [vmem:[%s1 + $0x188] sm:$0xff]
  %v75 = vld [vmem:[%s1 + $0x190] sm:$0xff]
  %v76 = vld [vmem:[%s1 + $0x198] sm:$0xff]
  %v77 = vld [vmem:[%s1 + $0x1a0] sm:$0xff]
  %v78 = vld [vmem:[%s1 + $0x1a8] sm:$0xff]
  %v79 = vld [vmem:[%s1 + $0x1b0] sm:$0xff]
  %v80 = vld [vmem:[%s1 + $0x1b8] sm:$0xff]
  %v81 = vld [vmem:[%s1 + $0x1c0] sm:$0xff]
  %v82 = vld [vmem:[%s1 + $0x1c8] sm:$0xff]
  %v83 = vld [vmem:[%s1 + $0x1d0] sm:$0xff]
  %v84 = vld [vmem:[%s1 + $0x1d8] sm:$0xff]
  %v85 = vld [vmem:[%s1 + $0x1e0] sm:$0xff]
  %v86 = vld [vmem:[%s1 + $0x1e8] sm:$0xff]
  %v87 = vld [vmem:[%s1 + $0x1f0] sm:$0xff]
  %v88 = vld [vmem:[%s1 + $0x1f8] sm:$0xff]
  %v89 = vld [vmem:[%s1 + $0x200] sm:$0xff]
  %v90 = vld [vmem:[%s1 + $0x208] sm:$0xff]
  %v91 = vld [vmem:[%s1 + $0x210] sm:$0xff]
  %v92 = vld [vmem:[%s1 + $0x218] sm:$0xff]
  %v93 = vld [vmem:[%s1 + $0x220] sm:$0xff]
  %v94 = vld [vmem:[%s1 + $0x228] sm:$0xff]
  %v95 = vld [vmem:[%s1 + $0x230] sm:$0xff]
  %v96 = vld [vmem:[%s1 + $0x238] sm:$0xff]
  %v97 = vld [vmem:[%s1 + $0x240] sm:$0xff]
  %v98 = vld [vmem:[%s1 + $0x248] sm:$0xff]
  %v99 = vld [vmem:[%s1 + $0x250] sm:$0xff]
  %v100 = vld [vmem:[%s1 + $0x258] sm:$0xff]
  %v101 = vld [vmem:[%s1 + $0x260] sm:$0xff]
  %v102 = vld [vmem:[%s1 + $0x268] sm:$0xff]
  %v103 = vld [vmem:[%s1 + $0x270] sm:$0xff]
  %v104 = vld [vmem:[%s1 + $0x278] sm:$0xff]
  %v105 = vld [vmem:[%s1 + $0x280] sm:$0xff]
  %v106 = vld [vmem:[%s1 + $0x288] sm:$0xff]
  %v107 = vld [vmem:[%s1 + $0x290] sm:$0xff]
  %v108 = vld [vmem:[%s1 + $0x298] sm:$0xff]
  %v109 = vld [vmem:[%s1 + $0x2a0] sm:$0xff]
  %v110 = vld [vmem:[%s1 + $0x2a8] sm:$0xff]
  %v111 = vld [vmem:[%s1 + $0x2b0] sm:$0xff]
  %v112 = vld [vmem:[%s1 + $0x2b8] sm:$0xff]
  %v113 = vld [vmem:[%s1 + $0x2c0] sm:$0xff]
  %v114 = vld [vmem:[%s1 + $0x2c8] sm:$0xff]
  %v115 = vld [vmem:[%s1 + $0x2d0] sm:$0xff]
  %v116 = vld [vmem:[%s1 + $0x2d8] sm:$0xff]
  %v117 = vld [vmem:[%s1 + $0x2e0] sm:$0xff]
  %v118 = vld [vmem:[%s1 + $0x2e8] sm:$0xff]
  %v119 = vld [vmem:[%s1 + $0x2f0] sm:$0xff]
  %v120 = vld [vmem:[%s1 + $0x2f8] sm:$0xff]
  %v121 = vld [vmem:[%s1 + $0x300] sm:$0xff]
  %v122 = vld [vmem:[%s1 + $0x308] sm:$0xff]
  %v123 = vld [vmem:[%s1 + $0x310] sm:$0xff]
  %v124 = vld [vmem:[%s1 + $0x318] sm:$0xff]
  %v125 = vld [vmem:[%s1 + $0x320] sm:$0xff]
  %v126 = vld [vmem:[%s1 + $0x328] sm:$0xff]
  %v127 = vld [vmem:[%s1 + $0x330] sm:$0xff]
  %v128 = vld [vmem:[%s1 + $0x338] sm:$0xff]
  %v129 = vld [vmem:[%s1 + $0x340] sm:$0xff]
  %v130 = vld [vmem:[%s1 + $0x348] sm:$0xff]
  %v131 = vld [vmem:[%s1 + $0x350] sm:$0xff]
  %v132 = vld [vmem:[%s1 + $0x358] sm:$0xff]
  %v133 = vld [vmem:[%s1 + $0x360] sm:$0xff]
  %v134 = vld [vmem:[%s1 + $0x368] sm:$0xff]
  %v135 = vld [vmem:[%s1 + $0x370] sm:$0xff]
  %v136 = vld [vmem:[%s1 + $0x378] sm:$0xff]
  %v137 = vld [vmem:[%s1 + $0x380] sm:$0xff]
  %v138 = vld [vmem:[%s1 + $0x388] sm:$0xff]
  %v139 = vld [vmem:[%s1 + $0x390] sm:$0xff]
  %v140 = vld [vmem:[%s1 + $0x398] sm:$0xff]
  %v141 = vld [vmem:[%s1 + $0x3a0] sm:$0xff]
  %v142 = vld [vmem:[%s1 + $0x3a8] sm:$0xff]
  %v143 = vld [vmem:[%s1 + $0x3b0] sm:$0xff]
  %v144 = vld [vmem:[%s1 + $0x3b8] sm:$0xff]
  %v145 = vld [vmem:[%s1 + $0x3c0] sm:$0xff]
  %v146 = vld [vmem:[%s1 + $0x3c8] sm:$0xff]
  %v147 = vld [vmem:[%s1 + $0x3d0] sm:$0xff]
  %v148 = vld [vmem:[%s1 + $0x3d8] sm:$0xff]
  %v149 = vld [vmem:[%s1 + $0x3e0] sm:$0xff]
  %v150 = vld [vmem:[%s1 + $0x3e8] sm:$0xff]
  %v151 = vld [vmem:[%s1 + $0x3f0] sm:$0xff]
  %v152 = vld [vmem:[%s1 + $0x3f8] sm:$0xff]
  %v153 = vld [vmem:[%s1 + $0x400] sm:$0xff]
  %v154 = vld [vmem:[%s1 + $0x408] sm:$0xff]
  %v155 = vld [vmem:[%s1 + $0x410] sm:$0xff]
  %v156 = vld [vmem:[%s1 + $0x418] sm:$0xff]
  %v157 = vld [vmem:[%s1 + $0x420] sm:$0xff]
  %v158 = vld [vmem:[%s1 + $0x428] sm:$0xff]
  %v159 = vld [vmem:[%s1 + $0x430] sm:$0xff]
  %v160 = vld [vmem:[%s1 + $0x438] sm:$0xff]
  %v161 = vld [vmem:[%s1 + $0x440] sm:$0xff]
  %v162 = vld [vmem:[%s1 + $0x448] sm:$0xff]
  %v163 = vld [vmem:[%s1 + $0x450] sm:$0xff]
  %v164 = vld [vmem:[%s1 + $0x458] sm:$0xff]
  %v165 = vld [vmem:[%s1 + $0x460] sm:$0xff]
  %v166 = vld [vmem:[%s1 + $0x468] sm:$0xff]
  %v167 = vld [vmem:[%s1 + $0x470] sm:$0xff]
  %v168 = vld [vmem:[%s1 + $0x478] sm:$0xff]
  %v169 = vld [vmem:[%s1 + $0x480] sm:$0xff]
  %v170 = vld [vmem:[%s1 + $0x488] sm:$0xff]
  %v171 = vld [vmem:[%s1 + $0x490] sm:$0xff]
  %v172 = vld [vmem:[%s1 + $0x498] sm:$0xff]
  %v173 = vld [vmem:[%s1 + $0x4a0] sm:$0xff]
  %v174 = vld [vmem:[%s1 + $0x4a8] sm:$0xff]
  %v175 = vld [vmem:[%s1 + $0x4b0] sm:$0xff]
  %v176 = vld [vmem:[%s1 + $0x4b8] sm:$0xff]
  %v177 = vld [vmem:[%s1 + $0x4c0] sm:$0xff]
  %v178 = vld [vmem:[%s1 + $0x4c8] sm:$0xff]
  %v179 = vld [vmem:[%s1 + $0x4d0] sm:$0xff]
  %v180 = vld [vmem:[%s1 + $0x4d8] sm:$0xff]
  %v181 = vld [vmem:[%s1 + $0x4e0] sm:$0xff]
  %v182 = vld [vmem:[%s1 + $0x4e8] sm:$0xff]
  %v183 = vld [vmem:[%s1 + $0x4f0] sm:$0xff]
  %v184 = vld [vmem:[%s1 + $0x4f8] sm:$0xff]
  %v185 = vld [vmem:[%s1 + $0x500] sm:$0xff]
  %v186 = vld [vmem:[%s1 + $0x508] sm:$0xff]
  %v187 = vld [vmem:[%s1 + $0x510] sm:$0xff]
  %v188 = vld [vmem:[%s1 + $0x518] sm:$0xff]
  %v189 = vld [vmem:[%s1 + $0x520] sm:$0xff]
  %v190 = vld [vmem:[%s1 + $0x528] sm:$0xff]
  %v191 = vld [vmem:[%s1 + $0x530] sm:$0xff]
  %v192 = vld [vmem:[%s1 + $0x538] sm:$0xff]
  %v193 = vld [vmem:[%s1 + $0x540] sm:$0xff]
  %v194 = vld [vmem:[%s1 + $0x548] sm:$0xff]
  %v195 = vld [vmem:[%s1 + $0x550] sm:$0xff]
  %v196 = vld [vmem:[%s1 + $0x558] sm:$0xff]
  %v197 = vld [vmem:[%s1 + $0x560] sm:$0xff]
  %v198 = vld [vmem:[%s1 + $0x568] sm:$0xff]
  %v199 = vld [vmem:[%s1 + $0x570] sm:$0xff]
  %v200 = vld [vmem:[%s1 + $0x578] sm:$0xff]
  %v201 = vld [vmem:[%s1 + $0x580] sm:$0xff]
  %v202 = vld [vmem:[%s1 + $0x588] sm:$0xff]
  %v203 = vld [vmem:[%s1 + $0x590] sm:$0xff]
  %v204 = vld [vmem:[%s1 + $0x598] sm:$0xff]
  %v205 = vld [vmem:[%s1 + $0x5a0] sm:$0xff]
  %v206 = vld [vmem:[%s1 + $0x5a8] sm:$0xff]
  %v207 = vld [vmem:[%s1 + $0x5b0] sm:$0xff]
  %v208 = vld [vmem:[%s1 + $0x5b8] sm:$0xff]
  %v209 = vld [vmem:[%s1 + $0x5c0] sm:$0xff]
  %v210 = vld [vmem:[%s1 + $0x5c8] sm:$0xff]
  %v211 = vld [vmem:[%s1 + $0x5d0] sm:$0xff]
  %v212 = vld [vmem:[%s1 + $0x5d8] sm:$0xff]
  %v213 = vld [vmem:[%s1 + $0x5e0] sm:$0xff]
  %v214 = vld [vmem:[%s1 + $0x5e8] sm:$0xff]
  %v215 = vld [vmem:[%s1 + $0x5f0] sm:$0xff]
  %v216 = vld [vmem:[%s1 + $0x5f8] sm:$0xff]
  %v217 = vld [vmem:[%s1 + $0x600] sm:$0xff]
  %v218 = vld [vmem:[%s1 + $0x608] sm:$0xff]
  %v219 = vld [vmem:[%s1 + $0x610] sm:$0xff]
  %v220 = vld [vmem:[%s1 + $0x618] sm:$0xff]
  %v221 = vld [vmem:[%s1 + $0x620] sm:$0xff]
  %v222 = vld [vmem:[%s1 + $0x628] sm:$0xff]
  %v223 = vld [vmem:[%s1 + $0x630] sm:$0xff]
  %v224 = vld [vmem:[%s1 + $0x638] sm:$0xff]
  %v225 = vld [vmem:[%s1 + $0x640] sm:$0xff]
  %v226 = vld [vmem:[%s1 + $0x648] sm:$0xff]
  %v227 = vld [vmem:[%s1 + $0x650] sm:$0xff]
  %v228 = vld [vmem:[%s1 + $0x658] sm:$0xff]
  %v229 = vld [vmem:[%s1 + $0x660] sm:$0xff]
  %v230 = vld [vmem:[%s1 + $0x668] sm:$0xff]
  %v231 = vld [vmem:[%s1 + $0x670] sm:$0xff]
  %v232 = vld [vmem:[%s1 + $0x678] sm:$0xff]
  %v233 = vld [vmem:[%s1 + $0x680] sm:$0xff]
  %v234 = vld [vmem:[%s1 + $0x688] sm:$0xff]
  %v235 = vld [vmem:[%s1 + $0x690] sm:$0xff]
  %v236 = vld [vmem:[%s1 + $0x698] sm:$0xff]
  %v237 = vld [vmem:[%s1 + $0x6a0] sm:$0xff]
  %v238 = vld [vmem:[%s1 + $0x6a8] sm:$0xff]
  %v239 = vld [vmem:[%s1 + $0x6b0] sm:$0xff]
  %v240 = vld [vmem:[%s1 + $0x6b8] sm:$0xff]
  %v241 = vld [vmem:[%s1 + $0x6c0] sm:$0xff]
  %v242 = vld [vmem:[%s1 + $0x6c8] sm:$0xff]
  %v243 = vld [vmem:[%s1 + $0x6d0] sm:$0xff]
  %v244 = vld [vmem:[%s1 + $0x6d8] sm:$0xff]
  %v245 = vld [vmem:[%s1 + $0x6e0] sm:$0xff]
  %v246 = vld [vmem:[%s1 + $0x6e8] sm:$0xff]
  %v247 = vld [vmem:[%s1 + $0x6f0] sm:$0xff]
  %v248 = vld [vmem:[%s1 + $0x6f8] sm:$0xff]
  %v249 = vld [vmem:[%s1 + $0x700] sm:$0xff]
  %v250 = vld [vmem:[%s1 + $0x708] sm:$0xff]
  %v251 = vld [vmem:[%s1 + $0x710] sm:$0xff]
  %v252 = vld [vmem:[%s1 + $0x718] sm:$0xff]
  %v253 = vld [vmem:[%s1 + $0x720] sm:$0xff]
  %v254 = vld [vmem:[%s1 + $0x728] sm:$0xff]
  %v255 = vld [vmem:[%s1 + $0x730] sm:$0xff]
  %v256 = vld [vmem:[%s1 + $0x738] sm:$0xff]
  %v257 = vld [vmem:[%s1 + $0x740] sm:$0xff]
  %v258 = vld [vmem:[%s1 + $0x748] sm:$0xff]
  %v259 = vld [vmem:[%s1 + $0x750] sm:$0xff]
  %v260 = vld [vmem:[%s1 + $0x758] sm:$0xff]
  %v261 = vld [vmem:[%s1 + $0x760] sm:$0xff]
  %v262 = vld [vmem:[%s1 + $0x768] sm:$0xff]
  %v263 = vld [vmem:[%s1 + $0x770] sm:$0xff]
  %v264 = vld [vmem:[%s1 + $0x778] sm:$0xff]
  %v265 = vld [vmem:[%s1 + $0x780] sm:$0xff]
  %v266 = vld [vmem:[%s1 + $0x788] sm:$0xff]
  %v267 = vld [vmem:[%s1 + $0x790] sm:$0xff]
  %v268 = vld [vmem:[%s1 + $0x798] sm:$0xff]
  %v269 = vld [vmem:[%s1 + $0x7a0] sm:$0xff]
  %v270 = vld [vmem:[%s1 + $0x7a8] sm:$0xff]
  %v271 = vld [vmem:[%s1 + $0x7b0] sm:$0xff]
  %v272 = vld [vmem:[%s1 + $0x7b8] sm:$0xff]
  %v273 = vld [vmem:[%s1 + $0x7c0] sm:$0xff]
  %v274 = vld [vmem:[%s1 + $0x7c8] sm:$0xff]
  %v275 = vld [vmem:[%s1 + $0x7d0] sm:$0xff]
  %v276 = vld [vmem:[%s1 + $0x7d8] sm:$0xff]
  %v277 = vld [vmem:[%s1 + $0x7e0] sm:$0xff]
  %v278 = vld [vmem:[%s1 + $0x7e8] sm:$0xff]
  %v279 = vld [vmem:[%s1 + $0x7f0] sm:$0xff]
  %v280 = vld [vmem:[%s1 + $0x7f8] sm:$0xff]
  %v281 = vld [vmem:[%s2] sm:$0xf]
  %v283 = vperm.slane %v281, 0
  %v284 = vperm.slane %v281, 1
  %v285 = vperm.slane %v281, 2
  %v286 = vperm.slane %v281, 3
  %v291 = vld [vmem:[#allocation2] sm:$0xff]
  %v292 = vld [vmem:[#allocation2 + $0x8] sm:$0xff]
  %v293 = vld [vmem:[#allocation2 + $0x10] sm:$0xff]
  %v294 = vld [vmem:[#allocation2 + $0x18] sm:$0xff]
  %v295 = vld [vmem:[#allocation3] sm:$0xff]
  %v296 = vld [vmem:[#allocation4] sm:$0xff]
  %v297 = vld [vmem:[#allocation5] sm:$0xff]
  %v298 = vld [vmem:[%s0] sm:$0xff]
  %v299 = vld [vmem:[%s0 + $0x8] sm:$0xff]
  %v300 = vld [vmem:[%s0 + $0x10] sm:$0xff]
  %v301 = vld [vmem:[%s0 + $0x18] sm:$0xff]
  %v302 = vadd.f32 %v298, %v291
  %v303 = vadd.f32 %v299, %v292
  %v304 = vadd.f32 %v300, %v293
  %v305 = vadd.f32 %v301, %v294
  %v306 = vxor.u32 %v302, 2147483648
  %v307 = vxor.u32 %v303, 2147483648
  %v308 = vxor.u32 %v304, 2147483648
  %v309 = vmul.f32 %v306, 1.442695
  %v310 = vpow.pop %v309
  %v311 = vmul.f32 %v307, 1.442695
  %v312 = vpow.pop %v311
  %v313 = vmul.f32 %v308, 1.442695
  %v314 = vpow.pop %v313
  %v315 = vadd.f32 %v310, 1.0
  %v316 = vadd.f32 %v312, 1.0
  %v317 = vadd.f32 %v314, 1.0
  %v318 = vrcp.pop %v315
  %v319 = vmul.f32 %v315, %v318
  %v320 = vsub.f32 1.0, %v319
  %v321 = vmul.f32 %v318, %v320
  %v322 = vadd.f32 %v318, %v321
  %vm323 = vweird.f32 %v315
  %vm324 = vweird.f32 %v318
  %vm325 = vmor %vm323, %vm324
  %v326 = vsel %vm325, %v318, %v322
  %v327 = vand.u32 2147483647, %v315
  %vm328 = vcmp.eq.f32.partialorder %v327, 8.507059e+37
  %v329 = vand.u32 %v315, 2147483648
  %v330 = vor.u32 1.1754944e-38, %v329
  %v331 = vsel %vm328, %v330, %v326
  %v332 = vmul.f32 1.0, %v331
  %v333 = vrcp.pop %v316
  %v334 = vmul.f32 %v316, %v333
  %v335 = vsub.f32 1.0, %v334
  %v336 = vmul.f32 %v333, %v335
  %v337 = vadd.f32 %v333, %v336
  %vm338 = vweird.f32 %v316
  %vm339 = vweird.f32 %v333
  %vm340 = vmor %vm338, %vm339
  %v341 = vsel %vm340, %v333, %v337
  %v342 = vand.u32 2147483647, %v316
  %vm343 = vcmp.eq.f32.partialorder %v342, 8.507059e+37
  %v344 = vand.u32 %v316, 2147483648
  %v345 = vor.u32 1.1754944e-38, %v344
  %v346 = vsel %vm343, %v345, %v341
  %v347 = vmul.f32 1.0, %v346
  %v348 = vrcp.pop %v317
  %v349 = vmul.f32 %v317, %v348
  %v350 = vsub.f32 1.0, %v349
  %v351 = vmul.f32 %v348, %v350
  %v352 = vadd.f32 %v348, %v351
  %vm353 = vweird.f32 %v317
  %vm354 = vweird.f32 %v348
  %vm355 = vmor %vm353, %vm354
  %v356 = vsel %vm355, %v348, %v352
  %v357 = vand.u32 2147483647, %v317
  %vm358 = vcmp.eq.f32.partialorder %v357, 8.507059e+37
  %v359 = vand.u32 %v317, 2147483648
  %v360 = vor.u32 1.1754944e-38, %v359
  %v361 = vsel %vm358, %v360, %v356
  %v362 = vmul.f32 1.0, %v361
  %v363 = vtanh.pop %v305
  %v364 = vmul.f32 %v347, %v295
  %v365 = vmul.f32 %v332, %v363
  %v366 = vadd.f32 %v364, %v365
  %v367 = vtanh.pop %v366
  %v368 = vmul.f32 %v362, %v367
  %369 = vmatpush.msra.mxu0 %v145
  %370 = vmatpush.msra.mxu0 %v137
  %371 = vmatpush.msra.mxu0 %v129
  %372 = vmatpush.msra.mxu0 %v121
  %373 = vmatpush.msra.mxu0 %v113
  %374 = vmatpush.msra.mxu0 %v105
  %375 = vmatpush.msra.mxu0 %v97
  %376 = vmatpush.msra.mxu0 %v89
  %377 = vmatpush.msra.mxu0 %v81
  %378 = vmatpush.msra.mxu0 %v73
  %379 = vmatpush.msra.mxu0 %v65
  %380 = vmatpush.msra.mxu0 %v57
  %381 = vmatpush.msra.mxu0 %v49
  %382 = vmatpush.msra.mxu0 %v41
  %383 = vmatpush.msra.mxu0 %v33
  %384 = vmatpush.msra.mxu0 %v25
  %385 = vmatmul.f32.gmra.mxu0 %v368
  %v386 = vpop.f32.mrf.mxu0
  %v387 = vadd.f32 0.0, %v386
  %388 = vdwg.mxu0
  %389 = vmatpush.msra.mxu0 %v273
  %390 = vmatpush.msra.mxu0 %v265
  %391 = vmatpush.msra.mxu0 %v257
  %392 = vmatpush.msra.mxu0 %v249
  %393 = vmatpush.msra.mxu0 %v241
  %394 = vmatpush.msra.mxu0 %v233
  %395 = vmatpush.msra.mxu0 %v225
  %396 = vmatpush.msra.mxu0 %v217
  %397 = vmatpush.msra.mxu0 %v209
  %398 = vmatpush.msra.mxu0 %v201
  %399 = vmatpush.msra.mxu0 %v193
  %400 = vmatpush.msra.mxu0 %v185
  %401 = vmatpush.msra.mxu0 %v177
  %402 = vmatpush.msra.mxu0 %v169
  %403 = vmatpush.msra.mxu0 %v161
  %404 = vmatpush.msra.mxu0 %v153
  %405 = vmatmul.f32.gmra.mxu0 %v296
  %v406 = vpop.f32.mrf.mxu0
  %v407 = vadd.f32 %v387, %v406
  %408 = vdwg.mxu0
  %409 = vmatpush.msra.mxu0 %v146
  %410 = vmatpush.msra.mxu0 %v138
  %411 = vmatpush.msra.mxu0 %v130
  %412 = vmatpush.msra.mxu0 %v122
  %413 = vmatpush.msra.mxu0 %v114
  %414 = vmatpush.msra.mxu0 %v106
  %415 = vmatpush.msra.mxu0 %v98
  %416 = vmatpush.msra.mxu0 %v90
  %417 = vmatpush.msra.mxu0 %v82
  %418 = vmatpush.msra.mxu0 %v74
  %419 = vmatpush.msra.mxu0 %v66
  %420 = vmatpush.msra.mxu0 %v58
  %421 = vmatpush.msra.mxu0 %v50
  %422 = vmatpush.msra.mxu0 %v42
  %423 = vmatpush.msra.mxu0 %v34
  %424 = vmatpush.msra.mxu0 %v26
  %425 = vmatmul.f32.gmra.mxu0 %v368
  %v426 = vpop.f32.mrf.mxu0
  %v427 = vadd.f32 0.0, %v426
  %428 = vdwg.mxu0
  %429 = vmatpush.msra.mxu0 %v274
  %430 = vmatpush.msra.mxu0 %v266
  %431 = vmatpush.msra.mxu0 %v258
  %432 = vmatpush.msra.mxu0 %v250
  %433 = vmatpush.msra.mxu0 %v242
  %434 = vmatpush.msra.mxu0 %v234
  %435 = vmatpush.msra.mxu0 %v226
  %436 = vmatpush.msra.mxu0 %v218
  %437 = vmatpush.msra.mxu0 %v210
  %438 = vmatpush.msra.mxu0 %v202
  %439 = vmatpush.msra.mxu0 %v194
  %440 = vmatpush.msra.mxu0 %v186
  %441 = vmatpush.msra.mxu0 %v178
  %442 = vmatpush.msra.mxu0 %v170
  %443 = vmatpush.msra.mxu0 %v162
  %444 = vmatpush.msra.mxu0 %v154
  %445 = vmatmul.f32.gmra.mxu0 %v296
  %v446 = vpop.f32.mrf.mxu0
  %v447 = vadd.f32 %v427, %v446
  %448 = vdwg.mxu0
  %449 = vmatpush.msra.mxu0 %v147
  %450 = vmatpush.msra.mxu0 %v139
  %451 = vmatpush.msra.mxu0 %v131
  %452 = vmatpush.msra.mxu0 %v123
  %453 = vmatpush.msra.mxu0 %v115
  %454 = vmatpush.msra.mxu0 %v107
  %455 = vmatpush.msra.mxu0 %v99
  %456 = vmatpush.msra.mxu0 %v91
  %457 = vmatpush.msra.mxu0 %v83
  %458 = vmatpush.msra.mxu0 %v75
  %459 = vmatpush.msra.mxu0 %v67
  %460 = vmatpush.msra.mxu0 %v59
  %461 = vmatpush.msra.mxu0 %v51
  %462 = vmatpush.msra.mxu0 %v43
  %463 = vmatpush.msra.mxu0 %v35
  %464 = vmatpush.msra.mxu0 %v27
  %465 = vmatmul.f32.gmra.mxu0 %v368
  %v466 = vpop.f32.mrf.mxu0
  %v467 = vadd.f32 0.0, %v466
  %468 = vdwg.mxu0
  %469 = vmatpush.msra.mxu0 %v275
  %470 = vmatpush.msra.mxu0 %v267
  %471 = vmatpush.msra.mxu0 %v259
  %472 = vmatpush.msra.mxu0 %v251
  %473 = vmatpush.msra.mxu0 %v243
  %474 = vmatpush.msra.mxu0 %v235
  %475 = vmatpush.msra.mxu0 %v227
  %476 = vmatpush.msra.mxu0 %v219
  %477 = vmatpush.msra.mxu0 %v211
  %478 = vmatpush.msra.mxu0 %v203
  %479 = vmatpush.msra.mxu0 %v195
  %480 = vmatpush.msra.mxu0 %v187
  %481 = vmatpush.msra.mxu0 %v179
  %482 = vmatpush.msra.mxu0 %v171
  %483 = vmatpush.msra.mxu0 %v163
  %484 = vmatpush.msra.mxu0 %v155
  %485 = vmatmul.f32.gmra.mxu0 %v296
  %v486 = vpop.f32.mrf.mxu0
  %v487 = vadd.f32 %v467, %v486
  %488 = vdwg.mxu0
  %489 = vmatpush.msra.mxu0 %v148
  %490 = vmatpush.msra.mxu0 %v140
  %491 = vmatpush.msra.mxu0 %v132
  %492 = vmatpush.msra.mxu0 %v124
  %493 = vmatpush.msra.mxu0 %v116
  %494 = vmatpush.msra.mxu0 %v108
  %495 = vmatpush.msra.mxu0 %v100
  %496 = vmatpush.msra.mxu0 %v92
  %497 = vmatpush.msra.mxu0 %v84
  %498 = vmatpush.msra.mxu0 %v76
  %499 = vmatpush.msra.mxu0 %v68
  %500 = vmatpush.msra.mxu0 %v60
  %501 = vmatpush.msra.mxu0 %v52
  %502 = vmatpush.msra.mxu0 %v44
  %503 = vmatpush.msra.mxu0 %v36
  %504 = vmatpush.msra.mxu0 %v28
  %505 = vmatmul.f32.gmra.mxu0 %v368
  %v506 = vpop.f32.mrf.mxu0
  %v507 = vadd.f32 0.0, %v506
  %508 = vdwg.mxu0
  %509 = vmatpush.msra.mxu0 %v276
  %510 = vmatpush.msra.mxu0 %v268
  %511 = vmatpush.msra.mxu0 %v260
  %512 = vmatpush.msra.mxu0 %v252
  %513 = vmatpush.msra.mxu0 %v244
  %514 = vmatpush.msra.mxu0 %v236
  %515 = vmatpush.msra.mxu0 %v228
  %516 = vmatpush.msra.mxu0 %v220
  %517 = vmatpush.msra.mxu0 %v212
  %518 = vmatpush.msra.mxu0 %v204
  %519 = vmatpush.msra.mxu0 %v196
  %520 = vmatpush.msra.mxu0 %v188
  %521 = vmatpush.msra.mxu0 %v180
  %522 = vmatpush.msra.mxu0 %v172
  %523 = vmatpush.msra.mxu0 %v164
  %524 = vmatpush.msra.mxu0 %v156
  %525 = vmatmul.f32.gmra.mxu0 %v296
  %v526 = vpop.f32.mrf.mxu0
  %v527 = vadd.f32 %v507, %v526
  %528 = vdwg.mxu0
  %529 = vmatpush.msra.mxu0 %v149
  %530 = vmatpush.msra.mxu0 %v141
  %531 = vmatpush.msra.mxu0 %v133
  %532 = vmatpush.msra.mxu0 %v125
  %533 = vmatpush.msra.mxu0 %v117
  %534 = vmatpush.msra.mxu0 %v109
  %535 = vmatpush.msra.mxu0 %v101
  %536 = vmatpush.msra.mxu0 %v93
  %537 = vmatpush.msra.mxu0 %v85
  %538 = vmatpush.msra.mxu0 %v77
  %539 = vmatpush.msra.mxu0 %v69
  %540 = vmatpush.msra.mxu0 %v61
  %541 = vmatpush.msra.mxu0 %v53
  %542 = vmatpush.msra.mxu0 %v45
  %543 = vmatpush.msra.mxu0 %v37
  %544 = vmatpush.msra.mxu0 %v29
  %545 = vmatmul.f32.gmra.mxu0 %v368
  %v546 = vpop.f32.mrf.mxu0
  %v547 = vadd.f32 0.0, %v546
  %548 = vdwg.mxu0
  %549 = vmatpush.msra.mxu0 %v277
  %550 = vmatpush.msra.mxu0 %v269
  %551 = vmatpush.msra.mxu0 %v261
  %552 = vmatpush.msra.mxu0 %v253
  %553 = vmatpush.msra.mxu0 %v245
  %554 = vmatpush.msra.mxu0 %v237
  %555 = vmatpush.msra.mxu0 %v229
  %556 = vmatpush.msra.mxu0 %v221
  %557 = vmatpush.msra.mxu0 %v213
  %558 = vmatpush.msra.mxu0 %v205
  %559 = vmatpush.msra.mxu0 %v197
  %560 = vmatpush.msra.mxu0 %v189
  %561 = vmatpush.msra.mxu0 %v181
  %562 = vmatpush.msra.mxu0 %v173
  %563 = vmatpush.msra.mxu0 %v165
  %564 = vmatpush.msra.mxu0 %v157
  %565 = vmatmul.f32.gmra.mxu0 %v296
  %v566 = vpop.f32.mrf.mxu0
  %v567 = vadd.f32 %v547, %v566
  %568 = vdwg.mxu0
  %569 = vmatpush.msra.mxu0 %v150
  %570 = vmatpush.msra.mxu0 %v142
  %571 = vmatpush.msra.mxu0 %v134
  %572 = vmatpush.msra.mxu0 %v126
  %573 = vmatpush.msra.mxu0 %v118
  %574 = vmatpush.msra.mxu0 %v110
  %575 = vmatpush.msra.mxu0 %v102
  %576 = vmatpush.msra.mxu0 %v94
  %577 = vmatpush.msra.mxu0 %v86
  %578 = vmatpush.msra.mxu0 %v78
  %579 = vmatpush.msra.mxu0 %v70
  %580 = vmatpush.msra.mxu0 %v62
  %581 = vmatpush.msra.mxu0 %v54
  %582 = vmatpush.msra.mxu0 %v46
  %583 = vmatpush.msra.mxu0 %v38
  %584 = vmatpush.msra.mxu0 %v30
  %585 = vmatmul.f32.gmra.mxu0 %v368
  %v586 = vpop.f32.mrf.mxu0
  %v587 = vadd.f32 0.0, %v586
  %588 = vdwg.mxu0
  %589 = vmatpush.msra.mxu0 %v278
  %590 = vmatpush.msra.mxu0 %v270
  %591 = vmatpush.msra.mxu0 %v262
  %592 = vmatpush.msra.mxu0 %v254
  %593 = vmatpush.msra.mxu0 %v246
  %594 = vmatpush.msra.mxu0 %v238
  %595 = vmatpush.msra.mxu0 %v230
  %596 = vmatpush.msra.mxu0 %v222
  %597 = vmatpush.msra.mxu0 %v214
  %598 = vmatpush.msra.mxu0 %v206
  %599 = vmatpush.msra.mxu0 %v198
  %600 = vmatpush.msra.mxu0 %v190
  %601 = vmatpush.msra.mxu0 %v182
  %602 = vmatpush.msra.mxu0 %v174
  %603 = vmatpush.msra.mxu0 %v166
  %604 = vmatpush.msra.mxu0 %v158
  %605 = vmatmul.f32.gmra.mxu0 %v296
  %v606 = vpop.f32.mrf.mxu0
  %v607 = vadd.f32 %v587, %v606
  %608 = vdwg.mxu0
  %609 = vmatpush.msra.mxu0 %v151
  %610 = vmatpush.msra.mxu0 %v143
  %611 = vmatpush.msra.mxu0 %v135
  %612 = vmatpush.msra.mxu0 %v127
  %613 = vmatpush.msra.mxu0 %v119
  %614 = vmatpush.msra.mxu0 %v111
  %615 = vmatpush.msra.mxu0 %v103
  %616 = vmatpush.msra.mxu0 %v95
  %617 = vmatpush.msra.mxu0 %v87
  %618 = vmatpush.msra.mxu0 %v79
  %619 = vmatpush.msra.mxu0 %v71
  %620 = vmatpush.msra.mxu0 %v63
  %621 = vmatpush.msra.mxu0 %v55
  %622 = vmatpush.msra.mxu0 %v47
  %623 = vmatpush.msra.mxu0 %v39
  %624 = vmatpush.msra.mxu0 %v31
  %625 = vmatmul.f32.gmra.mxu0 %v368
  %v626 = vpop.f32.mrf.mxu0
  %v627 = vadd.f32 0.0, %v626
  %628 = vdwg.mxu0
  %629 = vmatpush.msra.mxu0 %v279
  %630 = vmatpush.msra.mxu0 %v271
  %631 = vmatpush.msra.mxu0 %v263
  %632 = vmatpush.msra.mxu0 %v255
  %633 = vmatpush.msra.mxu0 %v247
  %634 = vmatpush.msra.mxu0 %v239
  %635 = vmatpush.msra.mxu0 %v231
  %636 = vmatpush.msra.mxu0 %v223
  %637 = vmatpush.msra.mxu0 %v215
  %638 = vmatpush.msra.mxu0 %v207
  %639 = vmatpush.msra.mxu0 %v199
  %640 = vmatpush.msra.mxu0 %v191
  %641 = vmatpush.msra.mxu0 %v183
  %642 = vmatpush.msra.mxu0 %v175
  %643 = vmatpush.msra.mxu0 %v167
  %644 = vmatpush.msra.mxu0 %v159
  %645 = vmatmul.f32.gmra.mxu0 %v296
  %v646 = vpop.f32.mrf.mxu0
  %v647 = vadd.f32 %v627, %v646
  %648 = vdwg.mxu0
  %649 = vmatpush.msra.mxu0 %v152
  %650 = vmatpush.msra.mxu0 %v144
  %651 = vmatpush.msra.mxu0 %v136
  %652 = vmatpush.msra.mxu0 %v128
  %653 = vmatpush.msra.mxu0 %v120
  %654 = vmatpush.msra.mxu0 %v112
  %655 = vmatpush.msra.mxu0 %v104
  %656 = vmatpush.msra.mxu0 %v96
  %657 = vmatpush.msra.mxu0 %v88
  %658 = vmatpush.msra.mxu0 %v80
  %659 = vmatpush.msra.mxu0 %v72
  %660 = vmatpush.msra.mxu0 %v64
  %661 = vmatpush.msra.mxu0 %v56
  %662 = vmatpush.msra.mxu0 %v48
  %663 = vmatpush.msra.mxu0 %v40
  %664 = vmatpush.msra.mxu0 %v32
  %665 = vmatmul.f32.gmra.mxu0 %v368
  %v666 = vpop.f32.mrf.mxu0
  %v667 = vadd.f32 0.0, %v666
  %668 = vdwg.mxu0
  %669 = vmatpush.msra.mxu0 %v280
  %670 = vmatpush.msra.mxu0 %v272
  %671 = vmatpush.msra.mxu0 %v264
  %672 = vmatpush.msra.mxu0 %v256
  %673 = vmatpush.msra.mxu0 %v248
  %674 = vmatpush.msra.mxu0 %v240
  %675 = vmatpush.msra.mxu0 %v232
  %676 = vmatpush.msra.mxu0 %v224
  %677 = vmatpush.msra.mxu0 %v216
  %678 = vmatpush.msra.mxu0 %v208
  %679 = vmatpush.msra.mxu0 %v200
  %680 = vmatpush.msra.mxu0 %v192
  %681 = vmatpush.msra.mxu0 %v184
  %682 = vmatpush.msra.mxu0 %v176
  %683 = vmatpush.msra.mxu0 %v168
  %684 = vmatpush.msra.mxu0 %v160
  %685 = vmatmul.f32.gmra.mxu0 %v296
  %v686 = vpop.f32.mrf.mxu0
  %v687 = vadd.f32 %v667, %v686
  %688 = vdwg.mxu0
  %v689 = vadd.f32 %v567, %v283
  %v690 = vadd.f32 %v607, %v284
  %v691 = vadd.f32 %v647, %v285
  %v692 = vadd.f32 %v687, %v286
  %v693 = vxor.u32 %v689, 2147483648
  %v694 = vxor.u32 %v690, 2147483648
  %v695 = vxor.u32 %v691, 2147483648
  %v696 = vmul.f32 %v693, 1.442695
  %v697 = vpow.pop %v696
  %v698 = vmul.f32 %v694, 1.442695
  %v699 = vpow.pop %v698
  %v700 = vmul.f32 %v695, 1.442695
  %v701 = vpow.pop %v700
  %v702 = vadd.f32 %v697, 1.0
  %v703 = vadd.f32 %v699, 1.0
  %v704 = vadd.f32 %v701, 1.0
  %v705 = vrcp.pop %v702
  %v706 = vmul.f32 %v702, %v705
  %v707 = vsub.f32 1.0, %v706
  %v708 = vmul.f32 %v705, %v707
  %v709 = vadd.f32 %v705, %v708
  %vm710 = vweird.f32 %v702
  %vm711 = vweird.f32 %v705
  %vm712 = vmor %vm710, %vm711
  %v713 = vsel %vm712, %v705, %v709
  %v714 = vand.u32 2147483647, %v702
  %vm715 = vcmp.eq.f32.partialorder %v714, 8.507059e+37
  %v716 = vand.u32 %v702, 2147483648
  %v717 = vor.u32 1.1754944e-38, %v716
  %v718 = vsel %vm715, %v717, %v713
  %v719 = vmul.f32 1.0, %v718
  %v720 = vrcp.pop %v703
  %v721 = vmul.f32 %v703, %v720
  %v722 = vsub.f32 1.0, %v721
  %v723 = vmul.f32 %v720, %v722
  %v724 = vadd.f32 %v720, %v723
  %vm725 = vweird.f32 %v703
  %vm726 = vweird.f32 %v720
  %vm727 = vmor %vm725, %vm726
  %v728 = vsel %vm727, %v720, %v724
  %v729 = vand.u32 2147483647, %v703
  %vm730 = vcmp.eq.f32.partialorder %v729, 8.507059e+37
  %v731 = vand.u32 %v703, 2147483648
  %v732 = vor.u32 1.1754944e-38, %v731
  %v733 = vsel %vm730, %v732, %v728
  %v734 = vmul.f32 1.0, %v733
  %v735 = vrcp.pop %v704
  %v736 = vmul.f32 %v704, %v735
  %v737 = vsub.f32 1.0, %v736
  %v738 = vmul.f32 %v735, %v737
  %v739 = vadd.f32 %v735, %v738
  %vm740 = vweird.f32 %v704
  %vm741 = vweird.f32 %v735
  %vm742 = vmor %vm740, %vm741
  %v743 = vsel %vm742, %v735, %v739
  %v744 = vand.u32 2147483647, %v704
  %vm745 = vcmp.eq.f32.partialorder %v744, 8.507059e+37
  %v746 = vand.u32 %v704, 2147483648
  %v747 = vor.u32 1.1754944e-38, %v746
  %v748 = vsel %vm745, %v747, %v743
  %v749 = vmul.f32 1.0, %v748
  %v750 = vtanh.pop %v692
  %v751 = vmul.f32 %v734, %v297
  %v752 = vmul.f32 %v719, %v750
  %v753 = vadd.f32 %v751, %v752
  %v754 = vtanh.pop %v753
  %v755 = vmul.f32 %v749, %v754
  %756 = vst [vmem:[%s3] sm:$0xff] %v755
  %s757 = scalar_lea.vmem %s0, 32
  %v758 = vld [vmem:[%s757] sm:$0xff]
  %v759 = vld [vmem:[%s757 + $0x8] sm:$0xff]
  %v760 = vld [vmem:[%s757 + $0x10] sm:$0xff]
  %v761 = vld [vmem:[%s757 + $0x18] sm:$0xff]
  %v762 = vadd.f32 %v758, %v407
  %v763 = vadd.f32 %v759, %v447
  %v764 = vadd.f32 %v760, %v487
  %v765 = vadd.f32 %v761, %v527
  %v766 = vxor.u32 %v762, 2147483648
  %v767 = vxor.u32 %v763, 2147483648
  %v768 = vxor.u32 %v764, 2147483648
  %v769 = vmul.f32 %v766, 1.442695
  %v770 = vpow.pop %v769
  %v771 = vmul.f32 %v767, 1.442695
  %v772 = vpow.pop %v771
  %v773 = vmul.f32 %v768, 1.442695
  %v774 = vpow.pop %v773
  %v775 = vadd.f32 %v770, 1.0
  %v776 = vadd.f32 %v772, 1.0
  %v777 = vadd.f32 %v774, 1.0
  %v778 = vrcp.pop %v775
  %v779 = vmul.f32 %v775, %v778
  %v780 = vsub.f32 1.0, %v779
  %v781 = vmul.f32 %v778, %v780
  %v782 = vadd.f32 %v778, %v781
  %vm783 = vweird.f32 %v775
  %vm784 = vweird.f32 %v778
  %vm785 = vmor %vm783, %vm784
  %v786 = vsel %vm785, %v778, %v782
  %v787 = vand.u32 2147483647, %v775
  %vm788 = vcmp.eq.f32.partialorder %v787, 8.507059e+37
  %v789 = vand.u32 %v775, 2147483648
  %v790 = vor.u32 1.1754944e-38, %v789
  %v791 = vsel %vm788, %v790, %v786
  %v792 = vmul.f32 1.0, %v791
  %v793 = vrcp.pop %v776
  %v794 = vmul.f32 %v776, %v793
  %v795 = vsub.f32 1.0, %v794
  %v796 = vmul.f32 %v793, %v795
  %v797 = vadd.f32 %v793, %v796
  %vm798 = vweird.f32 %v776
  %vm799 = vweird.f32 %v793
  %vm800 = vmor %vm798, %vm799
  %v801 = vsel %vm800, %v793, %v797
  %v802 = vand.u32 2147483647, %v776
  %vm803 = vcmp.eq.f32.partialorder %v802, 8.507059e+37
  %v804 = vand.u32 %v776, 2147483648
  %v805 = vor.u32 1.1754944e-38, %v804
  %v806 = vsel %vm803, %v805, %v801
  %v807 = vmul.f32 1.0, %v806
  %v808 = vrcp.pop %v777
  %v809 = vmul.f32 %v777, %v808
  %v810 = vsub.f32 1.0, %v809
  %v811 = vmul.f32 %v808, %v810
  %v812 = vadd.f32 %v808, %v811
  %vm813 = vweird.f32 %v777
  %vm814 = vweird.f32 %v808
  %vm815 = vmor %vm813, %vm814
  %v816 = vsel %vm815, %v808, %v812
  %v817 = vand.u32 2147483647, %v777
  %vm818 = vcmp.eq.f32.partialorder %v817, 8.507059e+37
  %v819 = vand.u32 %v777, 2147483648
  %v820 = vor.u32 1.1754944e-38, %v819
  %v821 = vsel %vm818, %v820, %v816
  %v822 = vmul.f32 1.0, %v821
  %v823 = vtanh.pop %v765
  %v824 = vmul.f32 %v807, %v366
  %v825 = vmul.f32 %v792, %v823
  %v826 = vadd.f32 %v824, %v825
  %v827 = vtanh.pop %v826
  %v828 = vmul.f32 %v822, %v827
  %829 = vmatpush.msra.mxu0 %v145
  %830 = vmatpush.msra.mxu0 %v137
  %831 = vmatpush.msra.mxu0 %v129
  %832 = vmatpush.msra.mxu0 %v121
  %833 = vmatpush.msra.mxu0 %v113
  %834 = vmatpush.msra.mxu0 %v105
  %835 = vmatpush.msra.mxu0 %v97
  %836 = vmatpush.msra.mxu0 %v89
  %837 = vmatpush.msra.mxu0 %v81
  %838 = vmatpush.msra.mxu0 %v73
  %839 = vmatpush.msra.mxu0 %v65
  %840 = vmatpush.msra.mxu0 %v57
  %841 = vmatpush.msra.mxu0 %v49
  %842 = vmatpush.msra.mxu0 %v41
  %843 = vmatpush.msra.mxu0 %v33
  %844 = vmatpush.msra.mxu0 %v25
  %845 = vmatmul.f32.gmra.mxu0 %v828
  %v846 = vpop.f32.mrf.mxu0
  %v847 = vadd.f32 0.0, %v846
  %848 = vdwg.mxu0
  %849 = vmatpush.msra.mxu0 %v273
  %850 = vmatpush.msra.mxu0 %v265
  %851 = vmatpush.msra.mxu0 %v257
  %852 = vmatpush.msra.mxu0 %v249
  %853 = vmatpush.msra.mxu0 %v241
  %854 = vmatpush.msra.mxu0 %v233
  %855 = vmatpush.msra.mxu0 %v225
  %856 = vmatpush.msra.mxu0 %v217
  %857 = vmatpush.msra.mxu0 %v209
  %858 = vmatpush.msra.mxu0 %v201
  %859 = vmatpush.msra.mxu0 %v193
  %860 = vmatpush.msra.mxu0 %v185
  %861 = vmatpush.msra.mxu0 %v177
  %862 = vmatpush.msra.mxu0 %v169
  %863 = vmatpush.msra.mxu0 %v161
  %864 = vmatpush.msra.mxu0 %v153
  %865 = vmatmul.f32.gmra.mxu0 %v755
  %v866 = vpop.f32.mrf.mxu0
  %v867 = vadd.f32 %v847, %v866
  %868 = vdwg.mxu0
  %869 = vmatpush.msra.mxu0 %v146
  %870 = vmatpush.msra.mxu0 %v138
  %871 = vmatpush.msra.mxu0 %v130
  %872 = vmatpush.msra.mxu0 %v122
  %873 = vmatpush.msra.mxu0 %v114
  %874 = vmatpush.msra.mxu0 %v106
  %875 = vmatpush.msra.mxu0 %v98
  %876 = vmatpush.msra.mxu0 %v90
  %877 = vmatpush.msra.mxu0 %v82
  %878 = vmatpush.msra.mxu0 %v74
  %879 = vmatpush.msra.mxu0 %v66
  %880 = vmatpush.msra.mxu0 %v58
  %881 = vmatpush.msra.mxu0 %v50
  %882 = vmatpush.msra.mxu0 %v42
  %883 = vmatpush.msra.mxu0 %v34
  %884 = vmatpush.msra.mxu0 %v26
  %885 = vmatmul.f32.gmra.mxu0 %v828
  %v886 = vpop.f32.mrf.mxu0
  %v887 = vadd.f32 0.0, %v886
  %888 = vdwg.mxu0
  %889 = vmatpush.msra.mxu0 %v274
  %890 = vmatpush.msra.mxu0 %v266
  %891 = vmatpush.msra.mxu0 %v258
  %892 = vmatpush.msra.mxu0 %v250
  %893 = vmatpush.msra.mxu0 %v242
  %894 = vmatpush.msra.mxu0 %v234
  %895 = vmatpush.msra.mxu0 %v226
  %896 = vmatpush.msra.mxu0 %v218
  %897 = vmatpush.msra.mxu0 %v210
  %898 = vmatpush.msra.mxu0 %v202
  %899 = vmatpush.msra.mxu0 %v194
  %900 = vmatpush.msra.mxu0 %v186
  %901 = vmatpush.msra.mxu0 %v178
  %902 = vmatpush.msra.mxu0 %v170
  %903 = vmatpush.msra.mxu0 %v162
  %904 = vmatpush.msra.mxu0 %v154
  %905 = vmatmul.f32.gmra.mxu0 %v755
  %v906 = vpop.f32.mrf.mxu0
  %v907 = vadd.f32 %v887, %v906
  %908 = vdwg.mxu0
  %909 = vmatpush.msra.mxu0 %v147
  %910 = vmatpush.msra.mxu0 %v139
  %911 = vmatpush.msra.mxu0 %v131
  %912 = vmatpush.msra.mxu0 %v123
  %913 = vmatpush.msra.mxu0 %v115
  %914 = vmatpush.msra.mxu0 %v107
  %915 = vmatpush.msra.mxu0 %v99
  %916 = vmatpush.msra.mxu0 %v91
  %917 = vmatpush.msra.mxu0 %v83
  %918 = vmatpush.msra.mxu0 %v75
  %919 = vmatpush.msra.mxu0 %v67
  %920 = vmatpush.msra.mxu0 %v59
  %921 = vmatpush.msra.mxu0 %v51
  %922 = vmatpush.msra.mxu0 %v43
  %923 = vmatpush.msra.mxu0 %v35
  %924 = vmatpush.msra.mxu0 %v27
  %925 = vmatmul.f32.gmra.mxu0 %v828
  %v926 = vpop.f32.mrf.mxu0
  %v927 = vadd.f32 0.0, %v926
  %928 = vdwg.mxu0
  %929 = vmatpush.msra.mxu0 %v275
  %930 = vmatpush.msra.mxu0 %v267
  %931 = vmatpush.msra.mxu0 %v259
  %932 = vmatpush.msra.mxu0 %v251
  %933 = vmatpush.msra.mxu0 %v243
  %934 = vmatpush.msra.mxu0 %v235
  %935 = vmatpush.msra.mxu0 %v227
  %936 = vmatpush.msra.mxu0 %v219
  %937 = vmatpush.msra.mxu0 %v211
  %938 = vmatpush.msra.mxu0 %v203
  %939 = vmatpush.msra.mxu0 %v195
  %940 = vmatpush.msra.mxu0 %v187
  %941 = vmatpush.msra.mxu0 %v179
  %942 = vmatpush.msra.mxu0 %v171
  %943 = vmatpush.msra.mxu0 %v163
  %944 = vmatpush.msra.mxu0 %v155
  %945 = vmatmul.f32.gmra.mxu0 %v755
  %v946 = vpop.f32.mrf.mxu0
  %v947 = vadd.f32 %v927, %v946
  %948 = vdwg.mxu0
  %949 = vmatpush.msra.mxu0 %v148
  %950 = vmatpush.msra.mxu0 %v140
  %951 = vmatpush.msra.mxu0 %v132
  %952 = vmatpush.msra.mxu0 %v124
  %953 = vmatpush.msra.mxu0 %v116
  %954 = vmatpush.msra.mxu0 %v108
  %955 = vmatpush.msra.mxu0 %v100
  %956 = vmatpush.msra.mxu0 %v92
  %957 = vmatpush.msra.mxu0 %v84
  %958 = vmatpush.msra.mxu0 %v76
  %959 = vmatpush.msra.mxu0 %v68
  %960 = vmatpush.msra.mxu0 %v60
  %961 = vmatpush.msra.mxu0 %v52
  %962 = vmatpush.msra.mxu0 %v44
  %963 = vmatpush.msra.mxu0 %v36
  %964 = vmatpush.msra.mxu0 %v28
  %965 = vmatmul.f32.gmra.mxu0 %v828
  %v966 = vpop.f32.mrf.mxu0
  %v967 = vadd.f32 0.0, %v966
  %968 = vdwg.mxu0
  %969 = vmatpush.msra.mxu0 %v276
  %970 = vmatpush.msra.mxu0 %v268
  %971 = vmatpush.msra.mxu0 %v260
  %972 = vmatpush.msra.mxu0 %v252
  %973 = vmatpush.msra.mxu0 %v244
  %974 = vmatpush.msra.mxu0 %v236
  %975 = vmatpush.msra.mxu0 %v228
  %976 = vmatpush.msra.mxu0 %v220
  %977 = vmatpush.msra.mxu0 %v212
  %978 = vmatpush.msra.mxu0 %v204
  %979 = vmatpush.msra.mxu0 %v196
  %980 = vmatpush.msra.mxu0 %v188
  %981 = vmatpush.msra.mxu0 %v180
  %982 = vmatpush.msra.mxu0 %v172
  %983 = vmatpush.msra.mxu0 %v164
  %984 = vmatpush.msra.mxu0 %v156
  %985 = vmatmul.f32.gmra.mxu0 %v755
  %v986 = vpop.f32.mrf.mxu0
  %v987 = vadd.f32 %v967, %v986
  %988 = vdwg.mxu0
  %989 = vmatpush.msra.mxu0 %v149
  %990 = vmatpush.msra.mxu0 %v141
  %991 = vmatpush.msra.mxu0 %v133
  %992 = vmatpush.msra.mxu0 %v125
  %993 = vmatpush.msra.mxu0 %v117
  %994 = vmatpush.msra.mxu0 %v109
  %995 = vmatpush.msra.mxu0 %v101
  %996 = vmatpush.msra.mxu0 %v93
  %997 = vmatpush.msra.mxu0 %v85
  %998 = vmatpush.msra.mxu0 %v77
  %999 = vmatpush.msra.mxu0 %v69
  %1000 = vmatpush.msra.mxu0 %v61
  %1001 = vmatpush.msra.mxu0 %v53
  %1002 = vmatpush.msra.mxu0 %v45
  %1003 = vmatpush.msra.mxu0 %v37
  %1004 = vmatpush.msra.mxu0 %v29
  %1005 = vmatmul.f32.gmra.mxu0 %v828
  %v1006 = vpop.f32.mrf.mxu0
  %v1007 = vadd.f32 0.0, %v1006
  %1008 = vdwg.mxu0
  %1009 = vmatpush.msra.mxu0 %v277
  %1010 = vmatpush.msra.mxu0 %v269
  %1011 = vmatpush.msra.mxu0 %v261
  %1012 = vmatpush.msra.mxu0 %v253
  %1013 = vmatpush.msra.mxu0 %v245
  %1014 = vmatpush.msra.mxu0 %v237
  %1015 = vmatpush.msra.mxu0 %v229
  %1016 = vmatpush.msra.mxu0 %v221
  %1017 = vmatpush.msra.mxu0 %v213
  %1018 = vmatpush.msra.mxu0 %v205
  %1019 = vmatpush.msra.mxu0 %v197
  %1020 = vmatpush.msra.mxu0 %v189
  %1021 = vmatpush.msra.mxu0 %v181
  %1022 = vmatpush.msra.mxu0 %v173
  %1023 = vmatpush.msra.mxu0 %v165
  %1024 = vmatpush.msra.mxu0 %v157
  %1025 = vmatmul.f32.gmra.mxu0 %v755
  %v1026 = vpop.f32.mrf.mxu0
  %v1027 = vadd.f32 %v1007, %v1026
  %1028 = vdwg.mxu0
  %1029 = vmatpush.msra.mxu0 %v150
  %1030 = vmatpush.msra.mxu0 %v142
  %1031 = vmatpush.msra.mxu0 %v134
  %1032 = vmatpush.msra.mxu0 %v126
  %1033 = vmatpush.msra.mxu0 %v118
  %1034 = vmatpush.msra.mxu0 %v110
  %1035 = vmatpush.msra.mxu0 %v102
  %1036 = vmatpush.msra.mxu0 %v94
  %1037 = vmatpush.msra.mxu0 %v86
  %1038 = vmatpush.msra.mxu0 %v78
  %1039 = vmatpush.msra.mxu0 %v70
  %1040 = vmatpush.msra.mxu0 %v62
  %1041 = vmatpush.msra.mxu0 %v54
  %1042 = vmatpush.msra.mxu0 %v46
  %1043 = vmatpush.msra.mxu0 %v38
  %1044 = vmatpush.msra.mxu0 %v30
  %1045 = vmatmul.f32.gmra.mxu0 %v828
  %v1046 = vpop.f32.mrf.mxu0
  %v1047 = vadd.f32 0.0, %v1046
  %1048 = vdwg.mxu0
  %1049 = vmatpush.msra.mxu0 %v278
  %1050 = vmatpush.msra.mxu0 %v270
  %1051 = vmatpush.msra.mxu0 %v262
  %1052 = vmatpush.msra.mxu0 %v254
  %1053 = vmatpush.msra.mxu0 %v246
  %1054 = vmatpush.msra.mxu0 %v238
  %1055 = vmatpush.msra.mxu0 %v230
  %1056 = vmatpush.msra.mxu0 %v222
  %1057 = vmatpush.msra.mxu0 %v214
  %1058 = vmatpush.msra.mxu0 %v206
  %1059 = vmatpush.msra.mxu0 %v198
  %1060 = vmatpush.msra.mxu0 %v190
  %1061 = vmatpush.msra.mxu0 %v182
  %1062 = vmatpush.msra.mxu0 %v174
  %1063 = vmatpush.msra.mxu0 %v166
  %1064 = vmatpush.msra.mxu0 %v158
  %1065 = vmatmul.f32.gmra.mxu0 %v755
  %v1066 = vpop.f32.mrf.mxu0
  %v1067 = vadd.f32 %v1047, %v1066
  %1068 = vdwg.mxu0
  %1069 = vmatpush.msra.mxu0 %v151
  %1070 = vmatpush.msra.mxu0 %v143
  %1071 = vmatpush.msra.mxu0 %v135
  %1072 = vmatpush.msra.mxu0 %v127
  %1073 = vmatpush.msra.mxu0 %v119
  %1074 = vmatpush.msra.mxu0 %v111
  %1075 = vmatpush.msra.mxu0 %v103
  %1076 = vmatpush.msra.mxu0 %v95
  %1077 = vmatpush.msra.mxu0 %v87
  %1078 = vmatpush.msra.mxu0 %v79
  %1079 = vmatpush.msra.mxu0 %v71
  %1080 = vmatpush.msra.mxu0 %v63
  %1081 = vmatpush.msra.mxu0 %v55
  %1082 = vmatpush.msra.mxu0 %v47
  %1083 = vmatpush.msra.mxu0 %v39
  %1084 = vmatpush.msra.mxu0 %v31
  %1085 = vmatmul.f32.gmra.mxu0 %v828
  %v1086 = vpop.f32.mrf.mxu0
  %v1087 = vadd.f32 0.0, %v1086
  %1088 = vdwg.mxu0
  %1089 = vmatpush.msra.mxu0 %v279
  %1090 = vmatpush.msra.mxu0 %v271
  %1091 = vmatpush.msra.mxu0 %v263
  %1092 = vmatpush.msra.mxu0 %v255
  %1093 = vmatpush.msra.mxu0 %v247
  %1094 = vmatpush.msra.mxu0 %v239
  %1095 = vmatpush.msra.mxu0 %v231
  %1096 = vmatpush.msra.mxu0 %v223
  %1097 = vmatpush.msra.mxu0 %v215
  %1098 = vmatpush.msra.mxu0 %v207
  %1099 = vmatpush.msra.mxu0 %v199
  %1100 = vmatpush.msra.mxu0 %v191
  %1101 = vmatpush.msra.mxu0 %v183
  %1102 = vmatpush.msra.mxu0 %v175
  %1103 = vmatpush.msra.mxu0 %v167
  %1104 = vmatpush.msra.mxu0 %v159
  %1105 = vmatmul.f32.gmra.mxu0 %v755
  %v1106 = vpop.f32.mrf.mxu0
  %v1107 = vadd.f32 %v1087, %v1106
  %1108 = vdwg.mxu0
  %1109 = vmatpush.msra.mxu0 %v152
  %1110 = vmatpush.msra.mxu0 %v144
  %1111 = vmatpush.msra.mxu0 %v136
  %1112 = vmatpush.msra.mxu0 %v128
  %1113 = vmatpush.msra.mxu0 %v120
  %1114 = vmatpush.msra.mxu0 %v112
  %1115 = vmatpush.msra.mxu0 %v104
  %1116 = vmatpush.msra.mxu0 %v96
  %1117 = vmatpush.msra.mxu0 %v88
  %1118 = vmatpush.msra.mxu0 %v80
  %1119 = vmatpush.msra.mxu0 %v72
  %1120 = vmatpush.msra.mxu0 %v64
  %1121 = vmatpush.msra.mxu0 %v56
  %1122 = vmatpush.msra.mxu0 %v48
  %1123 = vmatpush.msra.mxu0 %v40
  %1124 = vmatpush.msra.mxu0 %v32
  %1125 = vmatmul.f32.gmra.mxu0 %v828
  %v1126 = vpop.f32.mrf.mxu0
  %v1127 = vadd.f32 0.0, %v1126
  %1128 = vdwg.mxu0
  %1129 = vmatpush.msra.mxu0 %v280
  %1130 = vmatpush.msra.mxu0 %v272
  %1131 = vmatpush.msra.mxu0 %v264
  %1132 = vmatpush.msra.mxu0 %v256
  %1133 = vmatpush.msra.mxu0 %v248
  %1134 = vmatpush.msra.mxu0 %v240
  %1135 = vmatpush.msra.mxu0 %v232
  %1136 = vmatpush.msra.mxu0 %v224
  %1137 = vmatpush.msra.mxu0 %v216
  %1138 = vmatpush.msra.mxu0 %v208
  %1139 = vmatpush.msra.mxu0 %v200
  %1140 = vmatpush.msra.mxu0 %v192
  %1141 = vmatpush.msra.mxu0 %v184
  %1142 = vmatpush.msra.mxu0 %v176
  %1143 = vmatpush.msra.mxu0 %v168
  %1144 = vmatpush.msra.mxu0 %v160
  %1145 = vmatmul.f32.gmra.mxu0 %v755
  %v1146 = vpop.f32.mrf.mxu0
  %v1147 = vadd.f32 %v1127, %v1146
  %1148 = vdwg.mxu0
  %v1149 = vadd.f32 %v1027, %v283
  %v1150 = vadd.f32 %v1067, %v284
  %v1151 = vadd.f32 %v1107, %v285
  %v1152 = vadd.f32 %v1147, %v286
  %v1153 = vxor.u32 %v1149, 2147483648
  %v1154 = vxor.u32 %v1150, 2147483648
  %v1155 = vxor.u32 %v1151, 2147483648
  %v1156 = vmul.f32 %v1153, 1.442695
  %v1157 = vpow.pop %v1156
  %v1158 = vmul.f32 %v1154, 1.442695
  %v1159 = vpow.pop %v1158
  %v1160 = vmul.f32 %v1155, 1.442695
  %v1161 = vpow.pop %v1160
  %v1162 = vadd.f32 %v1157, 1.0
  %v1163 = vadd.f32 %v1159, 1.0
  %v1164 = vadd.f32 %v1161, 1.0
  %v1165 = vrcp.pop %v1162
  %v1166 = vmul.f32 %v1162, %v1165
  %v1167 = vsub.f32 1.0, %v1166
  %v1168 = vmul.f32 %v1165, %v1167
  %v1169 = vadd.f32 %v1165, %v1168
  %vm1170 = vweird.f32 %v1162
  %vm1171 = vweird.f32 %v1165
  %vm1172 = vmor %vm1170, %vm1171
  %v1173 = vsel %vm1172, %v1165, %v1169
  %v1174 = vand.u32 2147483647, %v1162
  %vm1175 = vcmp.eq.f32.partialorder %v1174, 8.507059e+37
  %v1176 = vand.u32 %v1162, 2147483648
  %v1177 = vor.u32 1.1754944e-38, %v1176
  %v1178 = vsel %vm1175, %v1177, %v1173
  %v1179 = vmul.f32 1.0, %v1178
  %v1180 = vrcp.pop %v1163
  %v1181 = vmul.f32 %v1163, %v1180
  %v1182 = vsub.f32 1.0, %v1181
  %v1183 = vmul.f32 %v1180, %v1182
  %v1184 = vadd.f32 %v1180, %v1183
  %vm1185 = vweird.f32 %v1163
  %vm1186 = vweird.f32 %v1180
  %vm1187 = vmor %vm1185, %vm1186
  %v1188 = vsel %vm1187, %v1180, %v1184
  %v1189 = vand.u32 2147483647, %v1163
  %vm1190 = vcmp.eq.f32.partialorder %v1189, 8.507059e+37
  %v1191 = vand.u32 %v1163, 2147483648
  %v1192 = vor.u32 1.1754944e-38, %v1191
  %v1193 = vsel %vm1190, %v1192, %v1188
  %v1194 = vmul.f32 1.0, %v1193
  %v1195 = vrcp.pop %v1164
  %v1196 = vmul.f32 %v1164, %v1195
  %v1197 = vsub.f32 1.0, %v1196
  %v1198 = vmul.f32 %v1195, %v1197
  %v1199 = vadd.f32 %v1195, %v1198
  %vm1200 = vweird.f32 %v1164
  %vm1201 = vweird.f32 %v1195
  %vm1202 = vmor %vm1200, %vm1201
  %v1203 = vsel %vm1202, %v1195, %v1199
  %v1204 = vand.u32 2147483647, %v1164
  %vm1205 = vcmp.eq.f32.partialorder %v1204, 8.507059e+37
  %v1206 = vand.u32 %v1164, 2147483648
  %v1207 = vor.u32 1.1754944e-38, %v1206
  %v1208 = vsel %vm1205, %v1207, %v1203
  %v1209 = vmul.f32 1.0, %v1208
  %v1210 = vtanh.pop %v1152
  %v1211 = vmul.f32 %v1194, %v753
  %v1212 = vmul.f32 %v1179, %v1210
  %v1213 = vadd.f32 %v1211, %v1212
  %v1214 = vtanh.pop %v1213
  %v1215 = vmul.f32 %v1209, %v1214
  %s1216 = scalar_lea.vmem %s3, 8
  %1217 = vst [vmem:[%s1216] sm:$0xff] %v1215
  %s1218 = scalar_lea.vmem %s0, 64
  %v1219 = vld [vmem:[%s1218] sm:$0xff]
  %v1220 = vld [vmem:[%s1218 + $0x8] sm:$0xff]
  %v1221 = vld [vmem:[%s1218 + $0x10] sm:$0xff]
  %v1222 = vld [vmem:[%s1218 + $0x18] sm:$0xff]
  %v1223 = vadd.f32 %v1219, %v867
  %v1224 = vadd.f32 %v1220, %v907
  %v1225 = vadd.f32 %v1221, %v947
  %v1226 = vadd.f32 %v1222, %v987
  %v1227 = vxor.u32 %v1223, 2147483648
  %v1228 = vxor.u32 %v1224, 2147483648
  %v1229 = vxor.u32 %v1225, 2147483648
  %v1230 = vmul.f32 %v1227, 1.442695
  %v1231 = vpow.pop %v1230
  %v1232 = vmul.f32 %v1228, 1.442695
  %v1233 = vpow.pop %v1232
  %v1234 = vmul.f32 %v1229, 1.442695
  %v1235 = vpow.pop %v1234
  %v1236 = vadd.f32 %v1231, 1.0
  %v1237 = vadd.f32 %v1233, 1.0
  %v1238 = vadd.f32 %v1235, 1.0
  %v1239 = vrcp.pop %v1236
  %v1240 = vmul.f32 %v1236, %v1239
  %v1241 = vsub.f32 1.0, %v1240
  %v1242 = vmul.f32 %v1239, %v1241
  %v1243 = vadd.f32 %v1239, %v1242
  %vm1244 = vweird.f32 %v1236
  %vm1245 = vweird.f32 %v1239
  %vm1246 = vmor %vm1244, %vm1245
  %v1247 = vsel %vm1246, %v1239, %v1243
  %v1248 = vand.u32 2147483647, %v1236
  %vm1249 = vcmp.eq.f32.partialorder %v1248, 8.507059e+37
  %v1250 = vand.u32 %v1236, 2147483648
  %v1251 = vor.u32 1.1754944e-38, %v1250
  %v1252 = vsel %vm1249, %v1251, %v1247
  %v1253 = vmul.f32 1.0, %v1252
  %v1254 = vrcp.pop %v1237
  %v1255 = vmul.f32 %v1237, %v1254
  %v1256 = vsub.f32 1.0, %v1255
  %v1257 = vmul.f32 %v1254, %v1256
  %v1258 = vadd.f32 %v1254, %v1257
  %vm1259 = vweird.f32 %v1237
  %vm1260 = vweird.f32 %v1254
  %vm1261 = vmor %vm1259, %vm1260
  %v1262 = vsel %vm1261, %v1254, %v1258
  %v1263 = vand.u32 2147483647, %v1237
  %vm1264 = vcmp.eq.f32.partialorder %v1263, 8.507059e+37
  %v1265 = vand.u32 %v1237, 2147483648
  %v1266 = vor.u32 1.1754944e-38, %v1265
  %v1267 = vsel %vm1264, %v1266, %v1262
  %v1268 = vmul.f32 1.0, %v1267
  %v1269 = vrcp.pop %v1238
  %v1270 = vmul.f32 %v1238, %v1269
  %v1271 = vsub.f32 1.0, %v1270
  %v1272 = vmul.f32 %v1269, %v1271
  %v1273 = vadd.f32 %v1269, %v1272
  %vm1274 = vweird.f32 %v1238
  %vm1275 = vweird.f32 %v1269
  %vm1276 = vmor %vm1274, %vm1275
  %v1277 = vsel %vm1276, %v1269, %v1273
  %v1278 = vand.u32 2147483647, %v1238
  %vm1279 = vcmp.eq.f32.partialorder %v1278, 8.507059e+37
  %v1280 = vand.u32 %v1238, 2147483648
  %v1281 = vor.u32 1.1754944e-38, %v1280
  %v1282 = vsel %vm1279, %v1281, %v1277
  %v1283 = vmul.f32 1.0, %v1282
  %v1284 = vtanh.pop %v1226
  %v1285 = vmul.f32 %v1268, %v826
  %v1286 = vmul.f32 %v1253, %v1284
  %v1287 = vadd.f32 %v1285, %v1286
  %v1288 = vtanh.pop %v1287
  %v1289 = vmul.f32 %v1283, %v1288
  %1290 = vmatpush.msra.mxu0 %v145
  %1291 = vmatpush.msra.mxu0 %v137
  %1292 = vmatpush.msra.mxu0 %v129
  %1293 = vmatpush.msra.mxu0 %v121
  %1294 = vmatpush.msra.mxu0 %v113
  %1295 = vmatpush.msra.mxu0 %v105
  %1296 = vmatpush.msra.mxu0 %v97
  %1297 = vmatpush.msra.mxu0 %v89
  %1298 = vmatpush.msra.mxu0 %v81
  %1299 = vmatpush.msra.mxu0 %v73
  %1300 = vmatpush.msra.mxu0 %v65
  %1301 = vmatpush.msra.mxu0 %v57
  %1302 = vmatpush.msra.mxu0 %v49
  %1303 = vmatpush.msra.mxu0 %v41
  %1304 = vmatpush.msra.mxu0 %v33
  %1305 = vmatpush.msra.mxu0 %v25
  %1306 = vmatmul.f32.gmra.mxu0 %v1289
  %v1307 = vpop.f32.mrf.mxu0
  %v1308 = vadd.f32 0.0, %v1307
  %1309 = vdwg.mxu0
  %1310 = vmatpush.msra.mxu0 %v273
  %1311 = vmatpush.msra.mxu0 %v265
  %1312 = vmatpush.msra.mxu0 %v257
  %1313 = vmatpush.msra.mxu0 %v249
  %1314 = vmatpush.msra.mxu0 %v241
  %1315 = vmatpush.msra.mxu0 %v233
  %1316 = vmatpush.msra.mxu0 %v225
  %1317 = vmatpush.msra.mxu0 %v217
  %1318 = vmatpush.msra.mxu0 %v209
  %1319 = vmatpush.msra.mxu0 %v201
  %1320 = vmatpush.msra.mxu0 %v193
  %1321 = vmatpush.msra.mxu0 %v185
  %1322 = vmatpush.msra.mxu0 %v177
  %1323 = vmatpush.msra.mxu0 %v169
  %1324 = vmatpush.msra.mxu0 %v161
  %1325 = vmatpush.msra.mxu0 %v153
  %1326 = vmatmul.f32.gmra.mxu0 %v1215
  %v1327 = vpop.f32.mrf.mxu0
  %v1328 = vadd.f32 %v1308, %v1327
  %1329 = vdwg.mxu0
  %1330 = vmatpush.msra.mxu0 %v146
  %1331 = vmatpush.msra.mxu0 %v138
  %1332 = vmatpush.msra.mxu0 %v130
  %1333 = vmatpush.msra.mxu0 %v122
  %1334 = vmatpush.msra.mxu0 %v114
  %1335 = vmatpush.msra.mxu0 %v106
  %1336 = vmatpush.msra.mxu0 %v98
  %1337 = vmatpush.msra.mxu0 %v90
  %1338 = vmatpush.msra.mxu0 %v82
  %1339 = vmatpush.msra.mxu0 %v74
  %1340 = vmatpush.msra.mxu0 %v66
  %1341 = vmatpush.msra.mxu0 %v58
  %1342 = vmatpush.msra.mxu0 %v50
  %1343 = vmatpush.msra.mxu0 %v42
  %1344 = vmatpush.msra.mxu0 %v34
  %1345 = vmatpush.msra.mxu0 %v26
  %1346 = vmatmul.f32.gmra.mxu0 %v1289
  %v1347 = vpop.f32.mrf.mxu0
  %v1348 = vadd.f32 0.0, %v1347
  %1349 = vdwg.mxu0
  %1350 = vmatpush.msra.mxu0 %v274
  %1351 = vmatpush.msra.mxu0 %v266
  %1352 = vmatpush.msra.mxu0 %v258
  %1353 = vmatpush.msra.mxu0 %v250
  %1354 = vmatpush.msra.mxu0 %v242
  %1355 = vmatpush.msra.mxu0 %v234
  %1356 = vmatpush.msra.mxu0 %v226
  %1357 = vmatpush.msra.mxu0 %v218
  %1358 = vmatpush.msra.mxu0 %v210
  %1359 = vmatpush.msra.mxu0 %v202
  %1360 = vmatpush.msra.mxu0 %v194
  %1361 = vmatpush.msra.mxu0 %v186
  %1362 = vmatpush.msra.mxu0 %v178
  %1363 = vmatpush.msra.mxu0 %v170
  %1364 = vmatpush.msra.mxu0 %v162
  %1365 = vmatpush.msra.mxu0 %v154
  %1366 = vmatmul.f32.gmra.mxu0 %v1215
  %v1367 = vpop.f32.mrf.mxu0
  %v1368 = vadd.f32 %v1348, %v1367
  %1369 = vdwg.mxu0
  %1370 = vmatpush.msra.mxu0 %v147
  %1371 = vmatpush.msra.mxu0 %v139
  %1372 = vmatpush.msra.mxu0 %v131
  %1373 = vmatpush.msra.mxu0 %v123
  %1374 = vmatpush.msra.mxu0 %v115
  %1375 = vmatpush.msra.mxu0 %v107
  %1376 = vmatpush.msra.mxu0 %v99
  %1377 = vmatpush.msra.mxu0 %v91
  %1378 = vmatpush.msra.mxu0 %v83
  %1379 = vmatpush.msra.mxu0 %v75
  %1380 = vmatpush.msra.mxu0 %v67
  %1381 = vmatpush.msra.mxu0 %v59
  %1382 = vmatpush.msra.mxu0 %v51
  %1383 = vmatpush.msra.mxu0 %v43
  %1384 = vmatpush.msra.mxu0 %v35
  %1385 = vmatpush.msra.mxu0 %v27
  %1386 = vmatmul.f32.gmra.mxu0 %v1289
  %v1387 = vpop.f32.mrf.mxu0
  %v1388 = vadd.f32 0.0, %v1387
  %1389 = vdwg.mxu0
  %1390 = vmatpush.msra.mxu0 %v275
  %1391 = vmatpush.msra.mxu0 %v267
  %1392 = vmatpush.msra.mxu0 %v259
  %1393 = vmatpush.msra.mxu0 %v251
  %1394 = vmatpush.msra.mxu0 %v243
  %1395 = vmatpush.msra.mxu0 %v235
  %1396 = vmatpush.msra.mxu0 %v227
  %1397 = vmatpush.msra.mxu0 %v219
  %1398 = vmatpush.msra.mxu0 %v211
  %1399 = vmatpush.msra.mxu0 %v203
  %1400 = vmatpush.msra.mxu0 %v195
  %1401 = vmatpush.msra.mxu0 %v187
  %1402 = vmatpush.msra.mxu0 %v179
  %1403 = vmatpush.msra.mxu0 %v171
  %1404 = vmatpush.msra.mxu0 %v163
  %1405 = vmatpush.msra.mxu0 %v155
  %1406 = vmatmul.f32.gmra.mxu0 %v1215
  %v1407 = vpop.f32.mrf.mxu0
  %v1408 = vadd.f32 %v1388, %v1407
  %1409 = vdwg.mxu0
  %1410 = vmatpush.msra.mxu0 %v148
  %1411 = vmatpush.msra.mxu0 %v140
  %1412 = vmatpush.msra.mxu0 %v132
  %1413 = vmatpush.msra.mxu0 %v124
  %1414 = vmatpush.msra.mxu0 %v116
  %1415 = vmatpush.msra.mxu0 %v108
  %1416 = vmatpush.msra.mxu0 %v100
  %1417 = vmatpush.msra.mxu0 %v92
  %1418 = vmatpush.msra.mxu0 %v84
  %1419 = vmatpush.msra.mxu0 %v76
  %1420 = vmatpush.msra.mxu0 %v68
  %1421 = vmatpush.msra.mxu0 %v60
  %1422 = vmatpush.msra.mxu0 %v52
  %1423 = vmatpush.msra.mxu0 %v44
  %1424 = vmatpush.msra.mxu0 %v36
  %1425 = vmatpush.msra.mxu0 %v28
  %1426 = vmatmul.f32.gmra.mxu0 %v1289
  %v1427 = vpop.f32.mrf.mxu0
  %v1428 = vadd.f32 0.0, %v1427
  %1429 = vdwg.mxu0
  %1430 = vmatpush.msra.mxu0 %v276
  %1431 = vmatpush.msra.mxu0 %v268
  %1432 = vmatpush.msra.mxu0 %v260
  %1433 = vmatpush.msra.mxu0 %v252
  %1434 = vmatpush.msra.mxu0 %v244
  %1435 = vmatpush.msra.mxu0 %v236
  %1436 = vmatpush.msra.mxu0 %v228
  %1437 = vmatpush.msra.mxu0 %v220
  %1438 = vmatpush.msra.mxu0 %v212
  %1439 = vmatpush.msra.mxu0 %v204
  %1440 = vmatpush.msra.mxu0 %v196
  %1441 = vmatpush.msra.mxu0 %v188
  %1442 = vmatpush.msra.mxu0 %v180
  %1443 = vmatpush.msra.mxu0 %v172
  %1444 = vmatpush.msra.mxu0 %v164
  %1445 = vmatpush.msra.mxu0 %v156
  %1446 = vmatmul.f32.gmra.mxu0 %v1215
  %v1447 = vpop.f32.mrf.mxu0
  %v1448 = vadd.f32 %v1428, %v1447
  %1449 = vdwg.mxu0
  %1450 = vmatpush.msra.mxu0 %v149
  %1451 = vmatpush.msra.mxu0 %v141
  %1452 = vmatpush.msra.mxu0 %v133
  %1453 = vmatpush.msra.mxu0 %v125
  %1454 = vmatpush.msra.mxu0 %v117
  %1455 = vmatpush.msra.mxu0 %v109
  %1456 = vmatpush.msra.mxu0 %v101
  %1457 = vmatpush.msra.mxu0 %v93
  %1458 = vmatpush.msra.mxu0 %v85
  %1459 = vmatpush.msra.mxu0 %v77
  %1460 = vmatpush.msra.mxu0 %v69
  %1461 = vmatpush.msra.mxu0 %v61
  %1462 = vmatpush.msra.mxu0 %v53
  %1463 = vmatpush.msra.mxu0 %v45
  %1464 = vmatpush.msra.mxu0 %v37
  %1465 = vmatpush.msra.mxu0 %v29
  %1466 = vmatmul.f32.gmra.mxu0 %v1289
  %v1467 = vpop.f32.mrf.mxu0
  %v1468 = vadd.f32 0.0, %v1467
  %1469 = vdwg.mxu0
  %1470 = vmatpush.msra.mxu0 %v277
  %1471 = vmatpush.msra.mxu0 %v269
  %1472 = vmatpush.msra.mxu0 %v261
  %1473 = vmatpush.msra.mxu0 %v253
  %1474 = vmatpush.msra.mxu0 %v245
  %1475 = vmatpush.msra.mxu0 %v237
  %1476 = vmatpush.msra.mxu0 %v229
  %1477 = vmatpush.msra.mxu0 %v221
  %1478 = vmatpush.msra.mxu0 %v213
  %1479 = vmatpush.msra.mxu0 %v205
  %1480 = vmatpush.msra.mxu0 %v197
  %1481 = vmatpush.msra.mxu0 %v189
  %1482 = vmatpush.msra.mxu0 %v181
  %1483 = vmatpush.msra.mxu0 %v173
  %1484 = vmatpush.msra.mxu0 %v165
  %1485 = vmatpush.msra.mxu0 %v157
  %1486 = vmatmul.f32.gmra.mxu0 %v1215
  %v1487 = vpop.f32.mrf.mxu0
  %v1488 = vadd.f32 %v1468, %v1487
  %1489 = vdwg.mxu0
  %1490 = vmatpush.msra.mxu0 %v150
  %1491 = vmatpush.msra.mxu0 %v142
  %1492 = vmatpush.msra.mxu0 %v134
  %1493 = vmatpush.msra.mxu0 %v126
  %1494 = vmatpush.msra.mxu0 %v118
  %1495 = vmatpush.msra.mxu0 %v110
  %1496 = vmatpush.msra.mxu0 %v102
  %1497 = vmatpush.msra.mxu0 %v94
  %1498 = vmatpush.msra.mxu0 %v86
  %1499 = vmatpush.msra.mxu0 %v78
  %1500 = vmatpush.msra.mxu0 %v70
  %1501 = vmatpush.msra.mxu0 %v62
  %1502 = vmatpush.msra.mxu0 %v54
  %1503 = vmatpush.msra.mxu0 %v46
  %1504 = vmatpush.msra.mxu0 %v38
  %1505 = vmatpush.msra.mxu0 %v30
  %1506 = vmatmul.f32.gmra.mxu0 %v1289
  %v1507 = vpop.f32.mrf.mxu0
  %v1508 = vadd.f32 0.0, %v1507
  %1509 = vdwg.mxu0
  %1510 = vmatpush.msra.mxu0 %v278
  %1511 = vmatpush.msra.mxu0 %v270
  %1512 = vmatpush.msra.mxu0 %v262
  %1513 = vmatpush.msra.mxu0 %v254
  %1514 = vmatpush.msra.mxu0 %v246
  %1515 = vmatpush.msra.mxu0 %v238
  %1516 = vmatpush.msra.mxu0 %v230
  %1517 = vmatpush.msra.mxu0 %v222
  %1518 = vmatpush.msra.mxu0 %v214
  %1519 = vmatpush.msra.mxu0 %v206
  %1520 = vmatpush.msra.mxu0 %v198
  %1521 = vmatpush.msra.mxu0 %v190
  %1522 = vmatpush.msra.mxu0 %v182
  %1523 = vmatpush.msra.mxu0 %v174
  %1524 = vmatpush.msra.mxu0 %v166
  %1525 = vmatpush.msra.mxu0 %v158
  %1526 = vmatmul.f32.gmra.mxu0 %v1215
  %v1527 = vpop.f32.mrf.mxu0
  %v1528 = vadd.f32 %v1508, %v1527
  %1529 = vdwg.mxu0
  %1530 = vmatpush.msra.mxu0 %v151
  %1531 = vmatpush.msra.mxu0 %v143
  %1532 = vmatpush.msra.mxu0 %v135
  %1533 = vmatpush.msra.mxu0 %v127
  %1534 = vmatpush.msra.mxu0 %v119
  %1535 = vmatpush.msra.mxu0 %v111
  %1536 = vmatpush.msra.mxu0 %v103
  %1537 = vmatpush.msra.mxu0 %v95
  %1538 = vmatpush.msra.mxu0 %v87
  %1539 = vmatpush.msra.mxu0 %v79
  %1540 = vmatpush.msra.mxu0 %v71
  %1541 = vmatpush.msra.mxu0 %v63
  %1542 = vmatpush.msra.mxu0 %v55
  %1543 = vmatpush.msra.mxu0 %v47
  %1544 = vmatpush.msra.mxu0 %v39
  %1545 = vmatpush.msra.mxu0 %v31
  %1546 = vmatmul.f32.gmra.mxu0 %v1289
  %v1547 = vpop.f32.mrf.mxu0
  %v1548 = vadd.f32 0.0, %v1547
  %1549 = vdwg.mxu0
  %1550 = vmatpush.msra.mxu0 %v279
  %1551 = vmatpush.msra.mxu0 %v271
  %1552 = vmatpush.msra.mxu0 %v263
  %1553 = vmatpush.msra.mxu0 %v255
  %1554 = vmatpush.msra.mxu0 %v247
  %1555 = vmatpush.msra.mxu0 %v239
  %1556 = vmatpush.msra.mxu0 %v231
  %1557 = vmatpush.msra.mxu0 %v223
  %1558 = vmatpush.msra.mxu0 %v215
  %1559 = vmatpush.msra.mxu0 %v207
  %1560 = vmatpush.msra.mxu0 %v199
  %1561 = vmatpush.msra.mxu0 %v191
  %1562 = vmatpush.msra.mxu0 %v183
  %1563 = vmatpush.msra.mxu0 %v175
  %1564 = vmatpush.msra.mxu0 %v167
  %1565 = vmatpush.msra.mxu0 %v159
  %1566 = vmatmul.f32.gmra.mxu0 %v1215
  %v1567 = vpop.f32.mrf.mxu0
  %v1568 = vadd.f32 %v1548, %v1567
  %1569 = vdwg.mxu0
  %1570 = vmatpush.msra.mxu0 %v152
  %1571 = vmatpush.msra.mxu0 %v144
  %1572 = vmatpush.msra.mxu0 %v136
  %1573 = vmatpush.msra.mxu0 %v128
  %1574 = vmatpush.msra.mxu0 %v120
  %1575 = vmatpush.msra.mxu0 %v112
  %1576 = vmatpush.msra.mxu0 %v104
  %1577 = vmatpush.msra.mxu0 %v96
  %1578 = vmatpush.msra.mxu0 %v88
  %1579 = vmatpush.msra.mxu0 %v80
  %1580 = vmatpush.msra.mxu0 %v72
  %1581 = vmatpush.msra.mxu0 %v64
  %1582 = vmatpush.msra.mxu0 %v56
  %1583 = vmatpush.msra.mxu0 %v48
  %1584 = vmatpush.msra.mxu0 %v40
  %1585 = vmatpush.msra.mxu0 %v32
  %1586 = vmatmul.f32.gmra.mxu0 %v1289
  %v1587 = vpop.f32.mrf.mxu0
  %v1588 = vadd.f32 0.0, %v1587
  %1589 = vdwg.mxu0
  %1590 = vmatpush.msra.mxu0 %v280
  %1591 = vmatpush.msra.mxu0 %v272
  %1592 = vmatpush.msra.mxu0 %v264
  %1593 = vmatpush.msra.mxu0 %v256
  %1594 = vmatpush.msra.mxu0 %v248
  %1595 = vmatpush.msra.mxu0 %v240
  %1596 = vmatpush.msra.mxu0 %v232
  %1597 = vmatpush.msra.mxu0 %v224
  %1598 = vmatpush.msra.mxu0 %v216
  %1599 = vmatpush.msra.mxu0 %v208
  %1600 = vmatpush.msra.mxu0 %v200
  %1601 = vmatpush.msra.mxu0 %v192
  %1602 = vmatpush.msra.mxu0 %v184
  %1603 = vmatpush.msra.mxu0 %v176
  %1604 = vmatpush.msra.mxu0 %v168
  %1605 = vmatpush.msra.mxu0 %v160
  %1606 = vmatmul.f32.gmra.mxu0 %v1215
  %v1607 = vpop.f32.mrf.mxu0
  %v1608 = vadd.f32 %v1588, %v1607
  %1609 = vdwg.mxu0
  %v1610 = vadd.f32 %v1488, %v283
  %v1611 = vadd.f32 %v1528, %v284
  %v1612 = vadd.f32 %v1568, %v285
  %v1613 = vadd.f32 %v1608, %v286
  %v1614 = vxor.u32 %v1610, 2147483648
  %v1615 = vxor.u32 %v1611, 2147483648
  %v1616 = vxor.u32 %v1612, 2147483648
  %v1617 = vmul.f32 %v1614, 1.442695
  %v1618 = vpow.pop %v1617
  %v1619 = vmul.f32 %v1615, 1.442695
  %v1620 = vpow.pop %v1619
  %v1621 = vmul.f32 %v1616, 1.442695
  %v1622 = vpow.pop %v1621
  %v1623 = vadd.f32 %v1618, 1.0
  %v1624 = vadd.f32 %v1620, 1.0
  %v1625 = vadd.f32 %v1622, 1.0
  %v1626 = vrcp.pop %v1623
  %v1627 = vmul.f32 %v1623, %v1626
  %v1628 = vsub.f32 1.0, %v1627
  %v1629 = vmul.f32 %v1626, %v1628
  %v1630 = vadd.f32 %v1626, %v1629
  %vm1631 = vweird.f32 %v1623
  %vm1632 = vweird.f32 %v1626
  %vm1633 = vmor %vm1631, %vm1632
  %v1634 = vsel %vm1633, %v1626, %v1630
  %v1635 = vand.u32 2147483647, %v1623
  %vm1636 = vcmp.eq.f32.partialorder %v1635, 8.507059e+37
  %v1637 = vand.u32 %v1623, 2147483648
  %v1638 = vor.u32 1.1754944e-38, %v1637
  %v1639 = vsel %vm1636, %v1638, %v1634
  %v1640 = vmul.f32 1.0, %v1639
  %v1641 = vrcp.pop %v1624
  %v1642 = vmul.f32 %v1624, %v1641
  %v1643 = vsub.f32 1.0, %v1642
  %v1644 = vmul.f32 %v1641, %v1643
  %v1645 = vadd.f32 %v1641, %v1644
  %vm1646 = vweird.f32 %v1624
  %vm1647 = vweird.f32 %v1641
  %vm1648 = vmor %vm1646, %vm1647
  %v1649 = vsel %vm1648, %v1641, %v1645
  %v1650 = vand.u32 2147483647, %v1624
  %vm1651 = vcmp.eq.f32.partialorder %v1650, 8.507059e+37
  %v1652 = vand.u32 %v1624, 2147483648
  %v1653 = vor.u32 1.1754944e-38, %v1652
  %v1654 = vsel %vm1651, %v1653, %v1649
  %v1655 = vmul.f32 1.0, %v1654
  %v1656 = vrcp.pop %v1625
  %v1657 = vmul.f32 %v1625, %v1656
  %v1658 = vsub.f32 1.0, %v1657
  %v1659 = vmul.f32 %v1656, %v1658
  %v1660 = vadd.f32 %v1656, %v1659
  %vm1661 = vweird.f32 %v1625
  %vm1662 = vweird.f32 %v1656
  %vm1663 = vmor %vm1661, %vm1662
  %v1664 = vsel %vm1663, %v1656, %v1660
  %v1665 = vand.u32 2147483647, %v1625
  %vm1666 = vcmp.eq.f32.partialorder %v1665, 8.507059e+37
  %v1667 = vand.u32 %v1625, 2147483648
  %v1668 = vor.u32 1.1754944e-38, %v1667
  %v1669 = vsel %vm1666, %v1668, %v1664
  %v1670 = vmul.f32 1.0, %v1669
  %v1671 = vtanh.pop %v1613
  %v1672 = vmul.f32 %v1655, %v1213
  %v1673 = vmul.f32 %v1640, %v1671
  %v1674 = vadd.f32 %v1672, %v1673
  %v1675 = vtanh.pop %v1674
  %v1676 = vmul.f32 %v1670, %v1675
  %s1677 = scalar_lea.vmem %s3, 16
  %1678 = vst [vmem:[%s1677] sm:$0xff] %v1676
  %s1679 = scalar_lea.vmem %s0, 96
  %v1680 = vld [vmem:[%s1679] sm:$0xff]
  %v1681 = vld [vmem:[%s1679 + $0x8] sm:$0xff]
  %v1682 = vld [vmem:[%s1679 + $0x10] sm:$0xff]
  %v1683 = vld [vmem:[%s1679 + $0x18] sm:$0xff]
  %v1684 = vadd.f32 %v1680, %v1328
  %v1685 = vadd.f32 %v1681, %v1368
  %v1686 = vadd.f32 %v1682, %v1408
  %v1687 = vadd.f32 %v1683, %v1448
  %v1688 = vxor.u32 %v1684, 2147483648
  %v1689 = vxor.u32 %v1685, 2147483648
  %v1690 = vxor.u32 %v1686, 2147483648
  %v1691 = vmul.f32 %v1688, 1.442695
  %v1692 = vpow.pop %v1691
  %v1693 = vmul.f32 %v1689, 1.442695
  %v1694 = vpow.pop %v1693
  %v1695 = vmul.f32 %v1690, 1.442695
  %v1696 = vpow.pop %v1695
  %v1697 = vadd.f32 %v1692, 1.0
  %v1698 = vadd.f32 %v1694, 1.0
  %v1699 = vadd.f32 %v1696, 1.0
  %v1700 = vrcp.pop %v1697
  %v1701 = vmul.f32 %v1697, %v1700
  %v1702 = vsub.f32 1.0, %v1701
  %v1703 = vmul.f32 %v1700, %v1702
  %v1704 = vadd.f32 %v1700, %v1703
  %vm1705 = vweird.f32 %v1697
  %vm1706 = vweird.f32 %v1700
  %vm1707 = vmor %vm1705, %vm1706
  %v1708 = vsel %vm1707, %v1700, %v1704
  %v1709 = vand.u32 2147483647, %v1697
  %vm1710 = vcmp.eq.f32.partialorder %v1709, 8.507059e+37
  %v1711 = vand.u32 %v1697, 2147483648
  %v1712 = vor.u32 1.1754944e-38, %v1711
  %v1713 = vsel %vm1710, %v1712, %v1708
  %v1714 = vmul.f32 1.0, %v1713
  %v1715 = vrcp.pop %v1698
  %v1716 = vmul.f32 %v1698, %v1715
  %v1717 = vsub.f32 1.0, %v1716
  %v1718 = vmul.f32 %v1715, %v1717
  %v1719 = vadd.f32 %v1715, %v1718
  %vm1720 = vweird.f32 %v1698
  %vm1721 = vweird.f32 %v1715
  %vm1722 = vmor %vm1720, %vm1721
  %v1723 = vsel %vm1722, %v1715, %v1719
  %v1724 = vand.u32 2147483647, %v1698
  %vm1725 = vcmp.eq.f32.partialorder %v1724, 8.507059e+37
  %v1726 = vand.u32 %v1698, 2147483648
  %v1727 = vor.u32 1.1754944e-38, %v1726
  %v1728 = vsel %vm1725, %v1727, %v1723
  %v1729 = vmul.f32 1.0, %v1728
  %v1730 = vrcp.pop %v1699
  %v1731 = vmul.f32 %v1699, %v1730
  %v1732 = vsub.f32 1.0, %v1731
  %v1733 = vmul.f32 %v1730, %v1732
  %v1734 = vadd.f32 %v1730, %v1733
  %vm1735 = vweird.f32 %v1699
  %vm1736 = vweird.f32 %v1730
  %vm1737 = vmor %vm1735, %vm1736
  %v1738 = vsel %vm1737, %v1730, %v1734
  %v1739 = vand.u32 2147483647, %v1699
  %vm1740 = vcmp.eq.f32.partialorder %v1739, 8.507059e+37
  %v1741 = vand.u32 %v1699, 2147483648
  %v1742 = vor.u32 1.1754944e-38, %v1741
  %v1743 = vsel %vm1740, %v1742, %v1738
  %v1744 = vmul.f32 1.0, %v1743
  %v1745 = vtanh.pop %v1687
  %v1746 = vmul.f32 %v1729, %v1287
  %v1747 = vmul.f32 %v1714, %v1745
  %v1748 = vadd.f32 %v1746, %v1747
  %v1749 = vtanh.pop %v1748
  %v1750 = vmul.f32 %v1744, %v1749
  %1751 = vmatpush.msra.mxu0 %v145
  %1752 = vmatpush.msra.mxu0 %v137
  %1753 = vmatpush.msra.mxu0 %v129
  %1754 = vmatpush.msra.mxu0 %v121
  %1755 = vmatpush.msra.mxu0 %v113
  %1756 = vmatpush.msra.mxu0 %v105
  %1757 = vmatpush.msra.mxu0 %v97
  %1758 = vmatpush.msra.mxu0 %v89
  %1759 = vmatpush.msra.mxu0 %v81
  %1760 = vmatpush.msra.mxu0 %v73
  %1761 = vmatpush.msra.mxu0 %v65
  %1762 = vmatpush.msra.mxu0 %v57
  %1763 = vmatpush.msra.mxu0 %v49
  %1764 = vmatpush.msra.mxu0 %v41
  %1765 = vmatpush.msra.mxu0 %v33
  %1766 = vmatpush.msra.mxu0 %v25
  %1767 = vmatmul.f32.gmra.mxu0 %v1750
  %v1768 = vpop.f32.mrf.mxu0
  %v1769 = vadd.f32 0.0, %v1768
  %1770 = vdwg.mxu0
  %1771 = vmatpush.msra.mxu0 %v273
  %1772 = vmatpush.msra.mxu0 %v265
  %1773 = vmatpush.msra.mxu0 %v257
  %1774 = vmatpush.msra.mxu0 %v249
  %1775 = vmatpush.msra.mxu0 %v241
  %1776 = vmatpush.msra.mxu0 %v233
  %1777 = vmatpush.msra.mxu0 %v225
  %1778 = vmatpush.msra.mxu0 %v217
  %1779 = vmatpush.msra.mxu0 %v209
  %1780 = vmatpush.msra.mxu0 %v201
  %1781 = vmatpush.msra.mxu0 %v193
  %1782 = vmatpush.msra.mxu0 %v185
  %1783 = vmatpush.msra.mxu0 %v177
  %1784 = vmatpush.msra.mxu0 %v169
  %1785 = vmatpush.msra.mxu0 %v161
  %1786 = vmatpush.msra.mxu0 %v153
  %1787 = vmatmul.f32.gmra.mxu0 %v1676
  %v1788 = vpop.f32.mrf.mxu0
  %v1789 = vadd.f32 %v1769, %v1788
  %1790 = vdwg.mxu0
  %1791 = vmatpush.msra.mxu0 %v146
  %1792 = vmatpush.msra.mxu0 %v138
  %1793 = vmatpush.msra.mxu0 %v130
  %1794 = vmatpush.msra.mxu0 %v122
  %1795 = vmatpush.msra.mxu0 %v114
  %1796 = vmatpush.msra.mxu0 %v106
  %1797 = vmatpush.msra.mxu0 %v98
  %1798 = vmatpush.msra.mxu0 %v90
  %1799 = vmatpush.msra.mxu0 %v82
  %1800 = vmatpush.msra.mxu0 %v74
  %1801 = vmatpush.msra.mxu0 %v66
  %1802 = vmatpush.msra.mxu0 %v58
  %1803 = vmatpush.msra.mxu0 %v50
  %1804 = vmatpush.msra.mxu0 %v42
  %1805 = vmatpush.msra.mxu0 %v34
  %1806 = vmatpush.msra.mxu0 %v26
  %1807 = vmatmul.f32.gmra.mxu0 %v1750
  %v1808 = vpop.f32.mrf.mxu0
  %v1809 = vadd.f32 0.0, %v1808
  %1810 = vdwg.mxu0
  %1811 = vmatpush.msra.mxu0 %v274
  %1812 = vmatpush.msra.mxu0 %v266
  %1813 = vmatpush.msra.mxu0 %v258
  %1814 = vmatpush.msra.mxu0 %v250
  %1815 = vmatpush.msra.mxu0 %v242
  %1816 = vmatpush.msra.mxu0 %v234
  %1817 = vmatpush.msra.mxu0 %v226
  %1818 = vmatpush.msra.mxu0 %v218
  %1819 = vmatpush.msra.mxu0 %v210
  %1820 = vmatpush.msra.mxu0 %v202
  %1821 = vmatpush.msra.mxu0 %v194
  %1822 = vmatpush.msra.mxu0 %v186
  %1823 = vmatpush.msra.mxu0 %v178
  %1824 = vmatpush.msra.mxu0 %v170
  %1825 = vmatpush.msra.mxu0 %v162
  %1826 = vmatpush.msra.mxu0 %v154
  %1827 = vmatmul.f32.gmra.mxu0 %v1676
  %v1828 = vpop.f32.mrf.mxu0
  %v1829 = vadd.f32 %v1809, %v1828
  %1830 = vdwg.mxu0
  %1831 = vmatpush.msra.mxu0 %v147
  %1832 = vmatpush.msra.mxu0 %v139
  %1833 = vmatpush.msra.mxu0 %v131
  %1834 = vmatpush.msra.mxu0 %v123
  %1835 = vmatpush.msra.mxu0 %v115
  %1836 = vmatpush.msra.mxu0 %v107
  %1837 = vmatpush.msra.mxu0 %v99
  %1838 = vmatpush.msra.mxu0 %v91
  %1839 = vmatpush.msra.mxu0 %v83
  %1840 = vmatpush.msra.mxu0 %v75
  %1841 = vmatpush.msra.mxu0 %v67
  %1842 = vmatpush.msra.mxu0 %v59
  %1843 = vmatpush.msra.mxu0 %v51
  %1844 = vmatpush.msra.mxu0 %v43
  %1845 = vmatpush.msra.mxu0 %v35
  %1846 = vmatpush.msra.mxu0 %v27
  %1847 = vmatmul.f32.gmra.mxu0 %v1750
  %v1848 = vpop.f32.mrf.mxu0
  %v1849 = vadd.f32 0.0, %v1848
  %1850 = vdwg.mxu0
  %1851 = vmatpush.msra.mxu0 %v275
  %1852 = vmatpush.msra.mxu0 %v267
  %1853 = vmatpush.msra.mxu0 %v259
  %1854 = vmatpush.msra.mxu0 %v251
  %1855 = vmatpush.msra.mxu0 %v243
  %1856 = vmatpush.msra.mxu0 %v235
  %1857 = vmatpush.msra.mxu0 %v227
  %1858 = vmatpush.msra.mxu0 %v219
  %1859 = vmatpush.msra.mxu0 %v211
  %1860 = vmatpush.msra.mxu0 %v203
  %1861 = vmatpush.msra.mxu0 %v195
  %1862 = vmatpush.msra.mxu0 %v187
  %1863 = vmatpush.msra.mxu0 %v179
  %1864 = vmatpush.msra.mxu0 %v171
  %1865 = vmatpush.msra.mxu0 %v163
  %1866 = vmatpush.msra.mxu0 %v155
  %1867 = vmatmul.f32.gmra.mxu0 %v1676
  %v1868 = vpop.f32.mrf.mxu0
  %v1869 = vadd.f32 %v1849, %v1868
  %1870 = vdwg.mxu0
  %1871 = vmatpush.msra.mxu0 %v148
  %1872 = vmatpush.msra.mxu0 %v140
  %1873 = vmatpush.msra.mxu0 %v132
  %1874 = vmatpush.msra.mxu0 %v124
  %1875 = vmatpush.msra.mxu0 %v116
  %1876 = vmatpush.msra.mxu0 %v108
  %1877 = vmatpush.msra.mxu0 %v100
  %1878 = vmatpush.msra.mxu0 %v92
  %1879 = vmatpush.msra.mxu0 %v84
  %1880 = vmatpush.msra.mxu0 %v76
  %1881 = vmatpush.msra.mxu0 %v68
  %1882 = vmatpush.msra.mxu0 %v60
  %1883 = vmatpush.msra.mxu0 %v52
  %1884 = vmatpush.msra.mxu0 %v44
  %1885 = vmatpush.msra.mxu0 %v36
  %1886 = vmatpush.msra.mxu0 %v28
  %1887 = vmatmul.f32.gmra.mxu0 %v1750
  %v1888 = vpop.f32.mrf.mxu0
  %v1889 = vadd.f32 0.0, %v1888
  %1890 = vdwg.mxu0
  %1891 = vmatpush.msra.mxu0 %v276
  %1892 = vmatpush.msra.mxu0 %v268
  %1893 = vmatpush.msra.mxu0 %v260
  %1894 = vmatpush.msra.mxu0 %v252
  %1895 = vmatpush.msra.mxu0 %v244
  %1896 = vmatpush.msra.mxu0 %v236
  %1897 = vmatpush.msra.mxu0 %v228
  %1898 = vmatpush.msra.mxu0 %v220
  %1899 = vmatpush.msra.mxu0 %v212
  %1900 = vmatpush.msra.mxu0 %v204
  %1901 = vmatpush.msra.mxu0 %v196
  %1902 = vmatpush.msra.mxu0 %v188
  %1903 = vmatpush.msra.mxu0 %v180
  %1904 = vmatpush.msra.mxu0 %v172
  %1905 = vmatpush.msra.mxu0 %v164
  %1906 = vmatpush.msra.mxu0 %v156
  %1907 = vmatmul.f32.gmra.mxu0 %v1676
  %v1908 = vpop.f32.mrf.mxu0
  %v1909 = vadd.f32 %v1889, %v1908
  %1910 = vdwg.mxu0
  %1911 = vmatpush.msra.mxu0 %v149
  %1912 = vmatpush.msra.mxu0 %v141
  %1913 = vmatpush.msra.mxu0 %v133
  %1914 = vmatpush.msra.mxu0 %v125
  %1915 = vmatpush.msra.mxu0 %v117
  %1916 = vmatpush.msra.mxu0 %v109
  %1917 = vmatpush.msra.mxu0 %v101
  %1918 = vmatpush.msra.mxu0 %v93
  %1919 = vmatpush.msra.mxu0 %v85
  %1920 = vmatpush.msra.mxu0 %v77
  %1921 = vmatpush.msra.mxu0 %v69
  %1922 = vmatpush.msra.mxu0 %v61
  %1923 = vmatpush.msra.mxu0 %v53
  %1924 = vmatpush.msra.mxu0 %v45
  %1925 = vmatpush.msra.mxu0 %v37
  %1926 = vmatpush.msra.mxu0 %v29
  %1927 = vmatmul.f32.gmra.mxu0 %v1750
  %v1928 = vpop.f32.mrf.mxu0
  %v1929 = vadd.f32 0.0, %v1928
  %1930 = vdwg.mxu0
  %1931 = vmatpush.msra.mxu0 %v277
  %1932 = vmatpush.msra.mxu0 %v269
  %1933 = vmatpush.msra.mxu0 %v261
  %1934 = vmatpush.msra.mxu0 %v253
  %1935 = vmatpush.msra.mxu0 %v245
  %1936 = vmatpush.msra.mxu0 %v237
  %1937 = vmatpush.msra.mxu0 %v229
  %1938 = vmatpush.msra.mxu0 %v221
  %1939 = vmatpush.msra.mxu0 %v213
  %1940 = vmatpush.msra.mxu0 %v205
  %1941 = vmatpush.msra.mxu0 %v197
  %1942 = vmatpush.msra.mxu0 %v189
  %1943 = vmatpush.msra.mxu0 %v181
  %1944 = vmatpush.msra.mxu0 %v173
  %1945 = vmatpush.msra.mxu0 %v165
  %1946 = vmatpush.msra.mxu0 %v157
  %1947 = vmatmul.f32.gmra.mxu0 %v1676
  %v1948 = vpop.f32.mrf.mxu0
  %v1949 = vadd.f32 %v1929, %v1948
  %1950 = vdwg.mxu0
  %1951 = vmatpush.msra.mxu0 %v150
  %1952 = vmatpush.msra.mxu0 %v142
  %1953 = vmatpush.msra.mxu0 %v134
  %1954 = vmatpush.msra.mxu0 %v126
  %1955 = vmatpush.msra.mxu0 %v118
  %1956 = vmatpush.msra.mxu0 %v110
  %1957 = vmatpush.msra.mxu0 %v102
  %1958 = vmatpush.msra.mxu0 %v94
  %1959 = vmatpush.msra.mxu0 %v86
  %1960 = vmatpush.msra.mxu0 %v78
  %1961 = vmatpush.msra.mxu0 %v70
  %1962 = vmatpush.msra.mxu0 %v62
  %1963 = vmatpush.msra.mxu0 %v54
  %1964 = vmatpush.msra.mxu0 %v46
  %1965 = vmatpush.msra.mxu0 %v38
  %1966 = vmatpush.msra.mxu0 %v30
  %1967 = vmatmul.f32.gmra.mxu0 %v1750
  %v1968 = vpop.f32.mrf.mxu0
  %v1969 = vadd.f32 0.0, %v1968
  %1970 = vdwg.mxu0
  %1971 = vmatpush.msra.mxu0 %v278
  %1972 = vmatpush.msra.mxu0 %v270
  %1973 = vmatpush.msra.mxu0 %v262
  %1974 = vmatpush.msra.mxu0 %v254
  %1975 = vmatpush.msra.mxu0 %v246
  %1976 = vmatpush.msra.mxu0 %v238
  %1977 = vmatpush.msra.mxu0 %v230
  %1978 = vmatpush.msra.mxu0 %v222
  %1979 = vmatpush.msra.mxu0 %v214
  %1980 = vmatpush.msra.mxu0 %v206
  %1981 = vmatpush.msra.mxu0 %v198
  %1982 = vmatpush.msra.mxu0 %v190
  %1983 = vmatpush.msra.mxu0 %v182
  %1984 = vmatpush.msra.mxu0 %v174
  %1985 = vmatpush.msra.mxu0 %v166
  %1986 = vmatpush.msra.mxu0 %v158
  %1987 = vmatmul.f32.gmra.mxu0 %v1676
  %v1988 = vpop.f32.mrf.mxu0
  %v1989 = vadd.f32 %v1969, %v1988
  %1990 = vdwg.mxu0
  %1991 = vmatpush.msra.mxu0 %v151
  %1992 = vmatpush.msra.mxu0 %v143
  %1993 = vmatpush.msra.mxu0 %v135
  %1994 = vmatpush.msra.mxu0 %v127
  %1995 = vmatpush.msra.mxu0 %v119
  %1996 = vmatpush.msra.mxu0 %v111
  %1997 = vmatpush.msra.mxu0 %v103
  %1998 = vmatpush.msra.mxu0 %v95
  %1999 = vmatpush.msra.mxu0 %v87
  %2000 = vmatpush.msra.mxu0 %v79
  %2001 = vmatpush.msra.mxu0 %v71
  %2002 = vmatpush.msra.mxu0 %v63
  %2003 = vmatpush.msra.mxu0 %v55
  %2004 = vmatpush.msra.mxu0 %v47
  %2005 = vmatpush.msra.mxu0 %v39
  %2006 = vmatpush.msra.mxu0 %v31
  %2007 = vmatmul.f32.gmra.mxu0 %v1750
  %v2008 = vpop.f32.mrf.mxu0
  %v2009 = vadd.f32 0.0, %v2008
  %2010 = vdwg.mxu0
  %2011 = vmatpush.msra.mxu0 %v279
  %2012 = vmatpush.msra.mxu0 %v271
  %2013 = vmatpush.msra.mxu0 %v263
  %2014 = vmatpush.msra.mxu0 %v255
  %2015 = vmatpush.msra.mxu0 %v247
  %2016 = vmatpush.msra.mxu0 %v239
  %2017 = vmatpush.msra.mxu0 %v231
  %2018 = vmatpush.msra.mxu0 %v223
  %2019 = vmatpush.msra.mxu0 %v215
  %2020 = vmatpush.msra.mxu0 %v207
  %2021 = vmatpush.msra.mxu0 %v199
  %2022 = vmatpush.msra.mxu0 %v191
  %2023 = vmatpush.msra.mxu0 %v183
  %2024 = vmatpush.msra.mxu0 %v175
  %2025 = vmatpush.msra.mxu0 %v167
  %2026 = vmatpush.msra.mxu0 %v159
  %2027 = vmatmul.f32.gmra.mxu0 %v1676
  %v2028 = vpop.f32.mrf.mxu0
  %v2029 = vadd.f32 %v2009, %v2028
  %2030 = vdwg.mxu0
  %2031 = vmatpush.msra.mxu0 %v152
  %2032 = vmatpush.msra.mxu0 %v144
  %2033 = vmatpush.msra.mxu0 %v136
  %2034 = vmatpush.msra.mxu0 %v128
  %2035 = vmatpush.msra.mxu0 %v120
  %2036 = vmatpush.msra.mxu0 %v112
  %2037 = vmatpush.msra.mxu0 %v104
  %2038 = vmatpush.msra.mxu0 %v96
  %2039 = vmatpush.msra.mxu0 %v88
  %2040 = vmatpush.msra.mxu0 %v80
  %2041 = vmatpush.msra.mxu0 %v72
  %2042 = vmatpush.msra.mxu0 %v64
  %2043 = vmatpush.msra.mxu0 %v56
  %2044 = vmatpush.msra.mxu0 %v48
  %2045 = vmatpush.msra.mxu0 %v40
  %2046 = vmatpush.msra.mxu0 %v32
  %2047 = vmatmul.f32.gmra.mxu0 %v1750
  %v2048 = vpop.f32.mrf.mxu0
  %v2049 = vadd.f32 0.0, %v2048
  %2050 = vdwg.mxu0
  %2051 = vmatpush.msra.mxu0 %v280
  %2052 = vmatpush.msra.mxu0 %v272
  %2053 = vmatpush.msra.mxu0 %v264
  %2054 = vmatpush.msra.mxu0 %v256
  %2055 = vmatpush.msra.mxu0 %v248
  %2056 = vmatpush.msra.mxu0 %v240
  %2057 = vmatpush.msra.mxu0 %v232
  %2058 = vmatpush.msra.mxu0 %v224
  %2059 = vmatpush.msra.mxu0 %v216
  %2060 = vmatpush.msra.mxu0 %v208
  %2061 = vmatpush.msra.mxu0 %v200
  %2062 = vmatpush.msra.mxu0 %v192
  %2063 = vmatpush.msra.mxu0 %v184
  %2064 = vmatpush.msra.mxu0 %v176
  %2065 = vmatpush.msra.mxu0 %v168
  %2066 = vmatpush.msra.mxu0 %v160
  %2067 = vmatmul.f32.gmra.mxu0 %v1676
  %v2068 = vpop.f32.mrf.mxu0
  %v2069 = vadd.f32 %v2049, %v2068
  %2070 = vdwg.mxu0
  %v2071 = vadd.f32 %v1949, %v283
  %v2072 = vadd.f32 %v1989, %v284
  %v2073 = vadd.f32 %v2029, %v285
  %v2074 = vadd.f32 %v2069, %v286
  %v2075 = vxor.u32 %v2071, 2147483648
  %v2076 = vxor.u32 %v2072, 2147483648
  %v2077 = vxor.u32 %v2073, 2147483648
  %v2078 = vmul.f32 %v2075, 1.442695
  %v2079 = vpow.pop %v2078
  %v2080 = vmul.f32 %v2076, 1.442695
  %v2081 = vpow.pop %v2080
  %v2082 = vmul.f32 %v2077, 1.442695
  %v2083 = vpow.pop %v2082
  %v2084 = vadd.f32 %v2079, 1.0
  %v2085 = vadd.f32 %v2081, 1.0
  %v2086 = vadd.f32 %v2083, 1.0
  %v2087 = vrcp.pop %v2084
  %v2088 = vmul.f32 %v2084, %v2087
  %v2089 = vsub.f32 1.0, %v2088
  %v2090 = vmul.f32 %v2087, %v2089
  %v2091 = vadd.f32 %v2087, %v2090
  %vm2092 = vweird.f32 %v2084
  %vm2093 = vweird.f32 %v2087
  %vm2094 = vmor %vm2092, %vm2093
  %v2095 = vsel %vm2094, %v2087, %v2091
  %v2096 = vand.u32 2147483647, %v2084
  %vm2097 = vcmp.eq.f32.partialorder %v2096, 8.507059e+37
  %v2098 = vand.u32 %v2084, 2147483648
  %v2099 = vor.u32 1.1754944e-38, %v2098
  %v2100 = vsel %vm2097, %v2099, %v2095
  %v2101 = vmul.f32 1.0, %v2100
  %v2102 = vrcp.pop %v2085
  %v2103 = vmul.f32 %v2085, %v2102
  %v2104 = vsub.f32 1.0, %v2103
  %v2105 = vmul.f32 %v2102, %v2104
  %v2106 = vadd.f32 %v2102, %v2105
  %vm2107 = vweird.f32 %v2085
  %vm2108 = vweird.f32 %v2102
  %vm2109 = vmor %vm2107, %vm2108
  %v2110 = vsel %vm2109, %v2102, %v2106
  %v2111 = vand.u32 2147483647, %v2085
  %vm2112 = vcmp.eq.f32.partialorder %v2111, 8.507059e+37
  %v2113 = vand.u32 %v2085, 2147483648
  %v2114 = vor.u32 1.1754944e-38, %v2113
  %v2115 = vsel %vm2112, %v2114, %v2110
  %v2116 = vmul.f32 1.0, %v2115
  %v2117 = vrcp.pop %v2086
  %v2118 = vmul.f32 %v2086, %v2117
  %v2119 = vsub.f32 1.0, %v2118
  %v2120 = vmul.f32 %v2117, %v2119
  %v2121 = vadd.f32 %v2117, %v2120
  %vm2122 = vweird.f32 %v2086
  %vm2123 = vweird.f32 %v2117
  %vm2124 = vmor %vm2122, %vm2123
  %v2125 = vsel %vm2124, %v2117, %v2121
  %v2126 = vand.u32 2147483647, %v2086
  %vm2127 = vcmp.eq.f32.partialorder %v2126, 8.507059e+37
  %v2128 = vand.u32 %v2086, 2147483648
  %v2129 = vor.u32 1.1754944e-38, %v2128
  %v2130 = vsel %vm2127, %v2129, %v2125
  %v2131 = vmul.f32 1.0, %v2130
  %v2132 = vtanh.pop %v2074
  %v2133 = vmul.f32 %v2116, %v1674
  %v2134 = vmul.f32 %v2101, %v2132
  %v2135 = vadd.f32 %v2133, %v2134
  %v2136 = vtanh.pop %v2135
  %v2137 = vmul.f32 %v2131, %v2136
  %s2138 = scalar_lea.vmem %s3, 24
  %2139 = vst [vmem:[%s2138] sm:$0xff] %v2137
  %s2140 = scalar_lea.vmem %s0, 128
  %v2141 = vld [vmem:[%s2140] sm:$0xff]
  %v2142 = vld [vmem:[%s2140 + $0x8] sm:$0xff]
  %v2143 = vld [vmem:[%s2140 + $0x10] sm:$0xff]
  %v2144 = vld [vmem:[%s2140 + $0x18] sm:$0xff]
  %v2145 = vadd.f32 %v2141, %v1789
  %v2146 = vadd.f32 %v2142, %v1829
  %v2147 = vadd.f32 %v2143, %v1869
  %v2148 = vadd.f32 %v2144, %v1909
  %v2149 = vxor.u32 %v2145, 2147483648
  %v2150 = vxor.u32 %v2146, 2147483648
  %v2151 = vxor.u32 %v2147, 2147483648
  %v2152 = vmul.f32 %v2149, 1.442695
  %v2153 = vpow.pop %v2152
  %v2154 = vmul.f32 %v2150, 1.442695
  %v2155 = vpow.pop %v2154
  %v2156 = vmul.f32 %v2151, 1.442695
  %v2157 = vpow.pop %v2156
  %v2158 = vadd.f32 %v2153, 1.0
  %v2159 = vadd.f32 %v2155, 1.0
  %v2160 = vadd.f32 %v2157, 1.0
  %v2161 = vrcp.pop %v2158
  %v2162 = vmul.f32 %v2158, %v2161
  %v2163 = vsub.f32 1.0, %v2162
  %v2164 = vmul.f32 %v2161, %v2163
  %v2165 = vadd.f32 %v2161, %v2164
  %vm2166 = vweird.f32 %v2158
  %vm2167 = vweird.f32 %v2161
  %vm2168 = vmor %vm2166, %vm2167
  %v2169 = vsel %vm2168, %v2161, %v2165
  %v2170 = vand.u32 2147483647, %v2158
  %vm2171 = vcmp.eq.f32.partialorder %v2170, 8.507059e+37
  %v2172 = vand.u32 %v2158, 2147483648
  %v2173 = vor.u32 1.1754944e-38, %v2172
  %v2174 = vsel %vm2171, %v2173, %v2169
  %v2175 = vmul.f32 1.0, %v2174
  %v2176 = vrcp.pop %v2159
  %v2177 = vmul.f32 %v2159, %v2176
  %v2178 = vsub.f32 1.0, %v2177
  %v2179 = vmul.f32 %v2176, %v2178
  %v2180 = vadd.f32 %v2176, %v2179
  %vm2181 = vweird.f32 %v2159
  %vm2182 = vweird.f32 %v2176
  %vm2183 = vmor %vm2181, %vm2182
  %v2184 = vsel %vm2183, %v2176, %v2180
  %v2185 = vand.u32 2147483647, %v2159
  %vm2186 = vcmp.eq.f32.partialorder %v2185, 8.507059e+37
  %v2187 = vand.u32 %v2159, 2147483648
  %v2188 = vor.u32 1.1754944e-38, %v2187
  %v2189 = vsel %vm2186, %v2188, %v2184
  %v2190 = vmul.f32 1.0, %v2189
  %v2191 = vrcp.pop %v2160
  %v2192 = vmul.f32 %v2160, %v2191
  %v2193 = vsub.f32 1.0, %v2192
  %v2194 = vmul.f32 %v2191, %v2193
  %v2195 = vadd.f32 %v2191, %v2194
  %vm2196 = vweird.f32 %v2160
  %vm2197 = vweird.f32 %v2191
  %vm2198 = vmor %vm2196, %vm2197
  %v2199 = vsel %vm2198, %v2191, %v2195
  %v2200 = vand.u32 2147483647, %v2160
  %vm2201 = vcmp.eq.f32.partialorder %v2200, 8.507059e+37
  %v2202 = vand.u32 %v2160, 2147483648
  %v2203 = vor.u32 1.1754944e-38, %v2202
  %v2204 = vsel %vm2201, %v2203, %v2199
  %v2205 = vmul.f32 1.0, %v2204
  %v2206 = vtanh.pop %v2148
  %v2207 = vmul.f32 %v2190, %v1748
  %v2208 = vmul.f32 %v2175, %v2206
  %v2209 = vadd.f32 %v2207, %v2208
  %v2210 = vtanh.pop %v2209
  %v2211 = vmul.f32 %v2205, %v2210
  %2212 = vmatpush.msra.mxu0 %v145
  %2213 = vmatpush.msra.mxu0 %v137
  %2214 = vmatpush.msra.mxu0 %v129
  %2215 = vmatpush.msra.mxu0 %v121
  %2216 = vmatpush.msra.mxu0 %v113
  %2217 = vmatpush.msra.mxu0 %v105
  %2218 = vmatpush.msra.mxu0 %v97
  %2219 = vmatpush.msra.mxu0 %v89
  %2220 = vmatpush.msra.mxu0 %v81
  %2221 = vmatpush.msra.mxu0 %v73
  %2222 = vmatpush.msra.mxu0 %v65
  %2223 = vmatpush.msra.mxu0 %v57
  %2224 = vmatpush.msra.mxu0 %v49
  %2225 = vmatpush.msra.mxu0 %v41
  %2226 = vmatpush.msra.mxu0 %v33
  %2227 = vmatpush.msra.mxu0 %v25
  %2228 = vmatmul.f32.gmra.mxu0 %v2211
  %v2229 = vpop.f32.mrf.mxu0
  %v2230 = vadd.f32 0.0, %v2229
  %2231 = vdwg.mxu0
  %2232 = vmatpush.msra.mxu0 %v273
  %2233 = vmatpush.msra.mxu0 %v265
  %2234 = vmatpush.msra.mxu0 %v257
  %2235 = vmatpush.msra.mxu0 %v249
  %2236 = vmatpush.msra.mxu0 %v241
  %2237 = vmatpush.msra.mxu0 %v233
  %2238 = vmatpush.msra.mxu0 %v225
  %2239 = vmatpush.msra.mxu0 %v217
  %2240 = vmatpush.msra.mxu0 %v209
  %2241 = vmatpush.msra.mxu0 %v201
  %2242 = vmatpush.msra.mxu0 %v193
  %2243 = vmatpush.msra.mxu0 %v185
  %2244 = vmatpush.msra.mxu0 %v177
  %2245 = vmatpush.msra.mxu0 %v169
  %2246 = vmatpush.msra.mxu0 %v161
  %2247 = vmatpush.msra.mxu0 %v153
  %2248 = vmatmul.f32.gmra.mxu0 %v2137
  %v2249 = vpop.f32.mrf.mxu0
  %v2250 = vadd.f32 %v2230, %v2249
  %2251 = vdwg.mxu0
  %2252 = vmatpush.msra.mxu0 %v146
  %2253 = vmatpush.msra.mxu0 %v138
  %2254 = vmatpush.msra.mxu0 %v130
  %2255 = vmatpush.msra.mxu0 %v122
  %2256 = vmatpush.msra.mxu0 %v114
  %2257 = vmatpush.msra.mxu0 %v106
  %2258 = vmatpush.msra.mxu0 %v98
  %2259 = vmatpush.msra.mxu0 %v90
  %2260 = vmatpush.msra.mxu0 %v82
  %2261 = vmatpush.msra.mxu0 %v74
  %2262 = vmatpush.msra.mxu0 %v66
  %2263 = vmatpush.msra.mxu0 %v58
  %2264 = vmatpush.msra.mxu0 %v50
  %2265 = vmatpush.msra.mxu0 %v42
  %2266 = vmatpush.msra.mxu0 %v34
  %2267 = vmatpush.msra.mxu0 %v26
  %2268 = vmatmul.f32.gmra.mxu0 %v2211
  %v2269 = vpop.f32.mrf.mxu0
  %v2270 = vadd.f32 0.0, %v2269
  %2271 = vdwg.mxu0
  %2272 = vmatpush.msra.mxu0 %v274
  %2273 = vmatpush.msra.mxu0 %v266
  %2274 = vmatpush.msra.mxu0 %v258
  %2275 = vmatpush.msra.mxu0 %v250
  %2276 = vmatpush.msra.mxu0 %v242
  %2277 = vmatpush.msra.mxu0 %v234
  %2278 = vmatpush.msra.mxu0 %v226
  %2279 = vmatpush.msra.mxu0 %v218
  %2280 = vmatpush.msra.mxu0 %v210
  %2281 = vmatpush.msra.mxu0 %v202
  %2282 = vmatpush.msra.mxu0 %v194
  %2283 = vmatpush.msra.mxu0 %v186
  %2284 = vmatpush.msra.mxu0 %v178
  %2285 = vmatpush.msra.mxu0 %v170
  %2286 = vmatpush.msra.mxu0 %v162
  %2287 = vmatpush.msra.mxu0 %v154
  %2288 = vmatmul.f32.gmra.mxu0 %v2137
  %v2289 = vpop.f32.mrf.mxu0
  %v2290 = vadd.f32 %v2270, %v2289
  %2291 = vdwg.mxu0
  %2292 = vmatpush.msra.mxu0 %v147
  %2293 = vmatpush.msra.mxu0 %v139
  %2294 = vmatpush.msra.mxu0 %v131
  %2295 = vmatpush.msra.mxu0 %v123
  %2296 = vmatpush.msra.mxu0 %v115
  %2297 = vmatpush.msra.mxu0 %v107
  %2298 = vmatpush.msra.mxu0 %v99
  %2299 = vmatpush.msra.mxu0 %v91
  %2300 = vmatpush.msra.mxu0 %v83
  %2301 = vmatpush.msra.mxu0 %v75
  %2302 = vmatpush.msra.mxu0 %v67
  %2303 = vmatpush.msra.mxu0 %v59
  %2304 = vmatpush.msra.mxu0 %v51
  %2305 = vmatpush.msra.mxu0 %v43
  %2306 = vmatpush.msra.mxu0 %v35
  %2307 = vmatpush.msra.mxu0 %v27
  %2308 = vmatmul.f32.gmra.mxu0 %v2211
  %v2309 = vpop.f32.mrf.mxu0
  %v2310 = vadd.f32 0.0, %v2309
  %2311 = vdwg.mxu0
  %2312 = vmatpush.msra.mxu0 %v275
  %2313 = vmatpush.msra.mxu0 %v267
  %2314 = vmatpush.msra.mxu0 %v259
  %2315 = vmatpush.msra.mxu0 %v251
  %2316 = vmatpush.msra.mxu0 %v243
  %2317 = vmatpush.msra.mxu0 %v235
  %2318 = vmatpush.msra.mxu0 %v227
  %2319 = vmatpush.msra.mxu0 %v219
  %2320 = vmatpush.msra.mxu0 %v211
  %2321 = vmatpush.msra.mxu0 %v203
  %2322 = vmatpush.msra.mxu0 %v195
  %2323 = vmatpush.msra.mxu0 %v187
  %2324 = vmatpush.msra.mxu0 %v179
  %2325 = vmatpush.msra.mxu0 %v171
  %2326 = vmatpush.msra.mxu0 %v163
  %2327 = vmatpush.msra.mxu0 %v155
  %2328 = vmatmul.f32.gmra.mxu0 %v2137
  %v2329 = vpop.f32.mrf.mxu0
  %v2330 = vadd.f32 %v2310, %v2329
  %2331 = vdwg.mxu0
  %2332 = vmatpush.msra.mxu0 %v148
  %2333 = vmatpush.msra.mxu0 %v140
  %2334 = vmatpush.msra.mxu0 %v132
  %2335 = vmatpush.msra.mxu0 %v124
  %2336 = vmatpush.msra.mxu0 %v116
  %2337 = vmatpush.msra.mxu0 %v108
  %2338 = vmatpush.msra.mxu0 %v100
  %2339 = vmatpush.msra.mxu0 %v92
  %2340 = vmatpush.msra.mxu0 %v84
  %2341 = vmatpush.msra.mxu0 %v76
  %2342 = vmatpush.msra.mxu0 %v68
  %2343 = vmatpush.msra.mxu0 %v60
  %2344 = vmatpush.msra.mxu0 %v52
  %2345 = vmatpush.msra.mxu0 %v44
  %2346 = vmatpush.msra.mxu0 %v36
  %2347 = vmatpush.msra.mxu0 %v28
  %2348 = vmatmul.f32.gmra.mxu0 %v2211
  %v2349 = vpop.f32.mrf.mxu0
  %v2350 = vadd.f32 0.0, %v2349
  %2351 = vdwg.mxu0
  %2352 = vmatpush.msra.mxu0 %v276
  %2353 = vmatpush.msra.mxu0 %v268
  %2354 = vmatpush.msra.mxu0 %v260
  %2355 = vmatpush.msra.mxu0 %v252
  %2356 = vmatpush.msra.mxu0 %v244
  %2357 = vmatpush.msra.mxu0 %v236
  %2358 = vmatpush.msra.mxu0 %v228
  %2359 = vmatpush.msra.mxu0 %v220
  %2360 = vmatpush.msra.mxu0 %v212
  %2361 = vmatpush.msra.mxu0 %v204
  %2362 = vmatpush.msra.mxu0 %v196
  %2363 = vmatpush.msra.mxu0 %v188
  %2364 = vmatpush.msra.mxu0 %v180
  %2365 = vmatpush.msra.mxu0 %v172
  %2366 = vmatpush.msra.mxu0 %v164
  %2367 = vmatpush.msra.mxu0 %v156
  %2368 = vmatmul.f32.gmra.mxu0 %v2137
  %v2369 = vpop.f32.mrf.mxu0
  %v2370 = vadd.f32 %v2350, %v2369
  %2371 = vdwg.mxu0
  %2372 = vmatpush.msra.mxu0 %v149
  %2373 = vmatpush.msra.mxu0 %v141
  %2374 = vmatpush.msra.mxu0 %v133
  %2375 = vmatpush.msra.mxu0 %v125
  %2376 = vmatpush.msra.mxu0 %v117
  %2377 = vmatpush.msra.mxu0 %v109
  %2378 = vmatpush.msra.mxu0 %v101
  %2379 = vmatpush.msra.mxu0 %v93
  %2380 = vmatpush.msra.mxu0 %v85
  %2381 = vmatpush.msra.mxu0 %v77
  %2382 = vmatpush.msra.mxu0 %v69
  %2383 = vmatpush.msra.mxu0 %v61
  %2384 = vmatpush.msra.mxu0 %v53
  %2385 = vmatpush.msra.mxu0 %v45
  %2386 = vmatpush.msra.mxu0 %v37
  %2387 = vmatpush.msra.mxu0 %v29
  %2388 = vmatmul.f32.gmra.mxu0 %v2211
  %v2389 = vpop.f32.mrf.mxu0
  %v2390 = vadd.f32 0.0, %v2389
  %2391 = vdwg.mxu0
  %2392 = vmatpush.msra.mxu0 %v277
  %2393 = vmatpush.msra.mxu0 %v269
  %2394 = vmatpush.msra.mxu0 %v261
  %2395 = vmatpush.msra.mxu0 %v253
  %2396 = vmatpush.msra.mxu0 %v245
  %2397 = vmatpush.msra.mxu0 %v237
  %2398 = vmatpush.msra.mxu0 %v229
  %2399 = vmatpush.msra.mxu0 %v221
  %2400 = vmatpush.msra.mxu0 %v213
  %2401 = vmatpush.msra.mxu0 %v205
  %2402 = vmatpush.msra.mxu0 %v197
  %2403 = vmatpush.msra.mxu0 %v189
  %2404 = vmatpush.msra.mxu0 %v181
  %2405 = vmatpush.msra.mxu0 %v173
  %2406 = vmatpush.msra.mxu0 %v165
  %2407 = vmatpush.msra.mxu0 %v157
  %2408 = vmatmul.f32.gmra.mxu0 %v2137
  %v2409 = vpop.f32.mrf.mxu0
  %v2410 = vadd.f32 %v2390, %v2409
  %2411 = vdwg.mxu0
  %2412 = vmatpush.msra.mxu0 %v150
  %2413 = vmatpush.msra.mxu0 %v142
  %2414 = vmatpush.msra.mxu0 %v134
  %2415 = vmatpush.msra.mxu0 %v126
  %2416 = vmatpush.msra.mxu0 %v118
  %2417 = vmatpush.msra.mxu0 %v110
  %2418 = vmatpush.msra.mxu0 %v102
  %2419 = vmatpush.msra.mxu0 %v94
  %2420 = vmatpush.msra.mxu0 %v86
  %2421 = vmatpush.msra.mxu0 %v78
  %2422 = vmatpush.msra.mxu0 %v70
  %2423 = vmatpush.msra.mxu0 %v62
  %2424 = vmatpush.msra.mxu0 %v54
  %2425 = vmatpush.msra.mxu0 %v46
  %2426 = vmatpush.msra.mxu0 %v38
  %2427 = vmatpush.msra.mxu0 %v30
  %2428 = vmatmul.f32.gmra.mxu0 %v2211
  %v2429 = vpop.f32.mrf.mxu0
  %v2430 = vadd.f32 0.0, %v2429
  %2431 = vdwg.mxu0
  %2432 = vmatpush.msra.mxu0 %v278
  %2433 = vmatpush.msra.mxu0 %v270
  %2434 = vmatpush.msra.mxu0 %v262
  %2435 = vmatpush.msra.mxu0 %v254
  %2436 = vmatpush.msra.mxu0 %v246
  %2437 = vmatpush.msra.mxu0 %v238
  %2438 = vmatpush.msra.mxu0 %v230
  %2439 = vmatpush.msra.mxu0 %v222
  %2440 = vmatpush.msra.mxu0 %v214
  %2441 = vmatpush.msra.mxu0 %v206
  %2442 = vmatpush.msra.mxu0 %v198
  %2443 = vmatpush.msra.mxu0 %v190
  %2444 = vmatpush.msra.mxu0 %v182
  %2445 = vmatpush.msra.mxu0 %v174
  %2446 = vmatpush.msra.mxu0 %v166
  %2447 = vmatpush.msra.mxu0 %v158
  %2448 = vmatmul.f32.gmra.mxu0 %v2137
  %v2449 = vpop.f32.mrf.mxu0
  %v2450 = vadd.f32 %v2430, %v2449
  %2451 = vdwg.mxu0
  %2452 = vmatpush.msra.mxu0 %v151
  %2453 = vmatpush.msra.mxu0 %v143
  %2454 = vmatpush.msra.mxu0 %v135
  %2455 = vmatpush.msra.mxu0 %v127
  %2456 = vmatpush.msra.mxu0 %v119
  %2457 = vmatpush.msra.mxu0 %v111
  %2458 = vmatpush.msra.mxu0 %v103
  %2459 = vmatpush.msra.mxu0 %v95
  %2460 = vmatpush.msra.mxu0 %v87
  %2461 = vmatpush.msra.mxu0 %v79
  %2462 = vmatpush.msra.mxu0 %v71
  %2463 = vmatpush.msra.mxu0 %v63
  %2464 = vmatpush.msra.mxu0 %v55
  %2465 = vmatpush.msra.mxu0 %v47
  %2466 = vmatpush.msra.mxu0 %v39
  %2467 = vmatpush.msra.mxu0 %v31
  %2468 = vmatmul.f32.gmra.mxu0 %v2211
  %v2469 = vpop.f32.mrf.mxu0
  %v2470 = vadd.f32 0.0, %v2469
  %2471 = vdwg.mxu0
  %2472 = vmatpush.msra.mxu0 %v279
  %2473 = vmatpush.msra.mxu0 %v271
  %2474 = vmatpush.msra.mxu0 %v263
  %2475 = vmatpush.msra.mxu0 %v255
  %2476 = vmatpush.msra.mxu0 %v247
  %2477 = vmatpush.msra.mxu0 %v239
  %2478 = vmatpush.msra.mxu0 %v231
  %2479 = vmatpush.msra.mxu0 %v223
  %2480 = vmatpush.msra.mxu0 %v215
  %2481 = vmatpush.msra.mxu0 %v207
  %2482 = vmatpush.msra.mxu0 %v199
  %2483 = vmatpush.msra.mxu0 %v191
  %2484 = vmatpush.msra.mxu0 %v183
  %2485 = vmatpush.msra.mxu0 %v175
  %2486 = vmatpush.msra.mxu0 %v167
  %2487 = vmatpush.msra.mxu0 %v159
  %2488 = vmatmul.f32.gmra.mxu0 %v2137
  %v2489 = vpop.f32.mrf.mxu0
  %v2490 = vadd.f32 %v2470, %v2489
  %2491 = vdwg.mxu0
  %2492 = vmatpush.msra.mxu0 %v152
  %2493 = vmatpush.msra.mxu0 %v144
  %2494 = vmatpush.msra.mxu0 %v136
  %2495 = vmatpush.msra.mxu0 %v128
  %2496 = vmatpush.msra.mxu0 %v120
  %2497 = vmatpush.msra.mxu0 %v112
  %2498 = vmatpush.msra.mxu0 %v104
  %2499 = vmatpush.msra.mxu0 %v96
  %2500 = vmatpush.msra.mxu0 %v88
  %2501 = vmatpush.msra.mxu0 %v80
  %2502 = vmatpush.msra.mxu0 %v72
  %2503 = vmatpush.msra.mxu0 %v64
  %2504 = vmatpush.msra.mxu0 %v56
  %2505 = vmatpush.msra.mxu0 %v48
  %2506 = vmatpush.msra.mxu0 %v40
  %2507 = vmatpush.msra.mxu0 %v32
  %2508 = vmatmul.f32.gmra.mxu0 %v2211
  %v2509 = vpop.f32.mrf.mxu0
  %v2510 = vadd.f32 0.0, %v2509
  %2511 = vdwg.mxu0
  %2512 = vmatpush.msra.mxu0 %v280
  %2513 = vmatpush.msra.mxu0 %v272
  %2514 = vmatpush.msra.mxu0 %v264
  %2515 = vmatpush.msra.mxu0 %v256
  %2516 = vmatpush.msra.mxu0 %v248
  %2517 = vmatpush.msra.mxu0 %v240
  %2518 = vmatpush.msra.mxu0 %v232
  %2519 = vmatpush.msra.mxu0 %v224
  %2520 = vmatpush.msra.mxu0 %v216
  %2521 = vmatpush.msra.mxu0 %v208
  %2522 = vmatpush.msra.mxu0 %v200
  %2523 = vmatpush.msra.mxu0 %v192
  %2524 = vmatpush.msra.mxu0 %v184
  %2525 = vmatpush.msra.mxu0 %v176
  %2526 = vmatpush.msra.mxu0 %v168
  %2527 = vmatpush.msra.mxu0 %v160
  %2528 = vmatmul.f32.gmra.mxu0 %v2137
  %v2529 = vpop.f32.mrf.mxu0
  %v2530 = vadd.f32 %v2510, %v2529
  %2531 = vdwg.mxu0
  %v2532 = vadd.f32 %v2410, %v283
  %v2533 = vadd.f32 %v2450, %v284
  %v2534 = vadd.f32 %v2490, %v285
  %v2535 = vadd.f32 %v2530, %v286
  %v2536 = vxor.u32 %v2532, 2147483648
  %v2537 = vxor.u32 %v2533, 2147483648
  %v2538 = vxor.u32 %v2534, 2147483648
  %v2539 = vmul.f32 %v2536, 1.442695
  %v2540 = vpow.pop %v2539
  %v2541 = vmul.f32 %v2537, 1.442695
  %v2542 = vpow.pop %v2541
  %v2543 = vmul.f32 %v2538, 1.442695
  %v2544 = vpow.pop %v2543
  %v2545 = vadd.f32 %v2540, 1.0
  %v2546 = vadd.f32 %v2542, 1.0
  %v2547 = vadd.f32 %v2544, 1.0
  %v2548 = vrcp.pop %v2545
  %v2549 = vmul.f32 %v2545, %v2548
  %v2550 = vsub.f32 1.0, %v2549
  %v2551 = vmul.f32 %v2548, %v2550
  %v2552 = vadd.f32 %v2548, %v2551
  %vm2553 = vweird.f32 %v2545
  %vm2554 = vweird.f32 %v2548
  %vm2555 = vmor %vm2553, %vm2554
  %v2556 = vsel %vm2555, %v2548, %v2552
  %v2557 = vand.u32 2147483647, %v2545
  %vm2558 = vcmp.eq.f32.partialorder %v2557, 8.507059e+37
  %v2559 = vand.u32 %v2545, 2147483648
  %v2560 = vor.u32 1.1754944e-38, %v2559
  %v2561 = vsel %vm2558, %v2560, %v2556
  %v2562 = vmul.f32 1.0, %v2561
  %v2563 = vrcp.pop %v2546
  %v2564 = vmul.f32 %v2546, %v2563
  %v2565 = vsub.f32 1.0, %v2564
  %v2566 = vmul.f32 %v2563, %v2565
  %v2567 = vadd.f32 %v2563, %v2566
  %vm2568 = vweird.f32 %v2546
  %vm2569 = vweird.f32 %v2563
  %vm2570 = vmor %vm2568, %vm2569
  %v2571 = vsel %vm2570, %v2563, %v2567
  %v2572 = vand.u32 2147483647, %v2546
  %vm2573 = vcmp.eq.f32.partialorder %v2572, 8.507059e+37
  %v2574 = vand.u32 %v2546, 2147483648
  %v2575 = vor.u32 1.1754944e-38, %v2574
  %v2576 = vsel %vm2573, %v2575, %v2571
  %v2577 = vmul.f32 1.0, %v2576
  %v2578 = vrcp.pop %v2547
  %v2579 = vmul.f32 %v2547, %v2578
  %v2580 = vsub.f32 1.0, %v2579
  %v2581 = vmul.f32 %v2578, %v2580
  %v2582 = vadd.f32 %v2578, %v2581
  %vm2583 = vweird.f32 %v2547
  %vm2584 = vweird.f32 %v2578
  %vm2585 = vmor %vm2583, %vm2584
  %v2586 = vsel %vm2585, %v2578, %v2582
  %v2587 = vand.u32 2147483647, %v2547
  %vm2588 = vcmp.eq.f32.partialorder %v2587, 8.507059e+37
  %v2589 = vand.u32 %v2547, 2147483648
  %v2590 = vor.u32 1.1754944e-38, %v2589
  %v2591 = vsel %vm2588, %v2590, %v2586
  %v2592 = vmul.f32 1.0, %v2591
  %v2593 = vtanh.pop %v2535
  %v2594 = vmul.f32 %v2577, %v2135
  %v2595 = vmul.f32 %v2562, %v2593
  %v2596 = vadd.f32 %v2594, %v2595
  %v2597 = vtanh.pop %v2596
  %v2598 = vmul.f32 %v2592, %v2597
  %s2599 = scalar_lea.vmem %s3, 32
  %2600 = vst [vmem:[%s2599] sm:$0xff] %v2598
  %s2601 = scalar_lea.vmem %s0, 160
  %v2602 = vld [vmem:[%s2601] sm:$0xff]
  %v2603 = vld [vmem:[%s2601 + $0x8] sm:$0xff]
  %v2604 = vld [vmem:[%s2601 + $0x10] sm:$0xff]
  %v2605 = vld [vmem:[%s2601 + $0x18] sm:$0xff]
  %v2606 = vadd.f32 %v2602, %v2250
  %v2607 = vadd.f32 %v2603, %v2290
  %v2608 = vadd.f32 %v2604, %v2330
  %v2609 = vadd.f32 %v2605, %v2370
  %v2610 = vxor.u32 %v2606, 2147483648
  %v2611 = vxor.u32 %v2607, 2147483648
  %v2612 = vxor.u32 %v2608, 2147483648
  %v2613 = vmul.f32 %v2610, 1.442695
  %v2614 = vpow.pop %v2613
  %v2615 = vmul.f32 %v2611, 1.442695
  %v2616 = vpow.pop %v2615
  %v2617 = vmul.f32 %v2612, 1.442695
  %v2618 = vpow.pop %v2617
  %v2619 = vadd.f32 %v2614, 1.0
  %v2620 = vadd.f32 %v2616, 1.0
  %v2621 = vadd.f32 %v2618, 1.0
  %v2622 = vrcp.pop %v2619
  %v2623 = vmul.f32 %v2619, %v2622
  %v2624 = vsub.f32 1.0, %v2623
  %v2625 = vmul.f32 %v2622, %v2624
  %v2626 = vadd.f32 %v2622, %v2625
  %vm2627 = vweird.f32 %v2619
  %vm2628 = vweird.f32 %v2622
  %vm2629 = vmor %vm2627, %vm2628
  %v2630 = vsel %vm2629, %v2622, %v2626
  %v2631 = vand.u32 2147483647, %v2619
  %vm2632 = vcmp.eq.f32.partialorder %v2631, 8.507059e+37
  %v2633 = vand.u32 %v2619, 2147483648
  %v2634 = vor.u32 1.1754944e-38, %v2633
  %v2635 = vsel %vm2632, %v2634, %v2630
  %v2636 = vmul.f32 1.0, %v2635
  %v2637 = vrcp.pop %v2620
  %v2638 = vmul.f32 %v2620, %v2637
  %v2639 = vsub.f32 1.0, %v2638
  %v2640 = vmul.f32 %v2637, %v2639
  %v2641 = vadd.f32 %v2637, %v2640
  %vm2642 = vweird.f32 %v2620
  %vm2643 = vweird.f32 %v2637
  %vm2644 = vmor %vm2642, %vm2643
  %v2645 = vsel %vm2644, %v2637, %v2641
  %v2646 = vand.u32 2147483647, %v2620
  %vm2647 = vcmp.eq.f32.partialorder %v2646, 8.507059e+37
  %v2648 = vand.u32 %v2620, 2147483648
  %v2649 = vor.u32 1.1754944e-38, %v2648
  %v2650 = vsel %vm2647, %v2649, %v2645
  %v2651 = vmul.f32 1.0, %v2650
  %v2652 = vrcp.pop %v2621
  %v2653 = vmul.f32 %v2621, %v2652
  %v2654 = vsub.f32 1.0, %v2653
  %v2655 = vmul.f32 %v2652, %v2654
  %v2656 = vadd.f32 %v2652, %v2655
  %vm2657 = vweird.f32 %v2621
  %vm2658 = vweird.f32 %v2652
  %vm2659 = vmor %vm2657, %vm2658
  %v2660 = vsel %vm2659, %v2652, %v2656
  %v2661 = vand.u32 2147483647, %v2621
  %vm2662 = vcmp.eq.f32.partialorder %v2661, 8.507059e+37
  %v2663 = vand.u32 %v2621, 2147483648
  %v2664 = vor.u32 1.1754944e-38, %v2663
  %v2665 = vsel %vm2662, %v2664, %v2660
  %v2666 = vmul.f32 1.0, %v2665
  %v2667 = vtanh.pop %v2609
  %v2668 = vmul.f32 %v2651, %v2209
  %v2669 = vmul.f32 %v2636, %v2667
  %v2670 = vadd.f32 %v2668, %v2669
  %v2671 = vtanh.pop %v2670
  %v2672 = vmul.f32 %v2666, %v2671
  %2673 = vmatpush.msra.mxu0 %v145
  %2674 = vmatpush.msra.mxu0 %v137
  %2675 = vmatpush.msra.mxu0 %v129
  %2676 = vmatpush.msra.mxu0 %v121
  %2677 = vmatpush.msra.mxu0 %v113
  %2678 = vmatpush.msra.mxu0 %v105
  %2679 = vmatpush.msra.mxu0 %v97
  %2680 = vmatpush.msra.mxu0 %v89
  %2681 = vmatpush.msra.mxu0 %v81
  %2682 = vmatpush.msra.mxu0 %v73
  %2683 = vmatpush.msra.mxu0 %v65
  %2684 = vmatpush.msra.mxu0 %v57
  %2685 = vmatpush.msra.mxu0 %v49
  %2686 = vmatpush.msra.mxu0 %v41
  %2687 = vmatpush.msra.mxu0 %v33
  %2688 = vmatpush.msra.mxu0 %v25
  %2689 = vmatmul.f32.gmra.mxu0 %v2672
  %v2690 = vpop.f32.mrf.mxu0
  %v2691 = vadd.f32 0.0, %v2690
  %2692 = vdwg.mxu0
  %2693 = vmatpush.msra.mxu0 %v273
  %2694 = vmatpush.msra.mxu0 %v265
  %2695 = vmatpush.msra.mxu0 %v257
  %2696 = vmatpush.msra.mxu0 %v249
  %2697 = vmatpush.msra.mxu0 %v241
  %2698 = vmatpush.msra.mxu0 %v233
  %2699 = vmatpush.msra.mxu0 %v225
  %2700 = vmatpush.msra.mxu0 %v217
  %2701 = vmatpush.msra.mxu0 %v209
  %2702 = vmatpush.msra.mxu0 %v201
  %2703 = vmatpush.msra.mxu0 %v193
  %2704 = vmatpush.msra.mxu0 %v185
  %2705 = vmatpush.msra.mxu0 %v177
  %2706 = vmatpush.msra.mxu0 %v169
  %2707 = vmatpush.msra.mxu0 %v161
  %2708 = vmatpush.msra.mxu0 %v153
  %2709 = vmatmul.f32.gmra.mxu0 %v2598
  %v2710 = vpop.f32.mrf.mxu0
  %v2711 = vadd.f32 %v2691, %v2710
  %2712 = vdwg.mxu0
  %2713 = vmatpush.msra.mxu0 %v146
  %2714 = vmatpush.msra.mxu0 %v138
  %2715 = vmatpush.msra.mxu0 %v130
  %2716 = vmatpush.msra.mxu0 %v122
  %2717 = vmatpush.msra.mxu0 %v114
  %2718 = vmatpush.msra.mxu0 %v106
  %2719 = vmatpush.msra.mxu0 %v98
  %2720 = vmatpush.msra.mxu0 %v90
  %2721 = vmatpush.msra.mxu0 %v82
  %2722 = vmatpush.msra.mxu0 %v74
  %2723 = vmatpush.msra.mxu0 %v66
  %2724 = vmatpush.msra.mxu0 %v58
  %2725 = vmatpush.msra.mxu0 %v50
  %2726 = vmatpush.msra.mxu0 %v42
  %2727 = vmatpush.msra.mxu0 %v34
  %2728 = vmatpush.msra.mxu0 %v26
  %2729 = vmatmul.f32.gmra.mxu0 %v2672
  %v2730 = vpop.f32.mrf.mxu0
  %v2731 = vadd.f32 0.0, %v2730
  %2732 = vdwg.mxu0
  %2733 = vmatpush.msra.mxu0 %v274
  %2734 = vmatpush.msra.mxu0 %v266
  %2735 = vmatpush.msra.mxu0 %v258
  %2736 = vmatpush.msra.mxu0 %v250
  %2737 = vmatpush.msra.mxu0 %v242
  %2738 = vmatpush.msra.mxu0 %v234
  %2739 = vmatpush.msra.mxu0 %v226
  %2740 = vmatpush.msra.mxu0 %v218
  %2741 = vmatpush.msra.mxu0 %v210
  %2742 = vmatpush.msra.mxu0 %v202
  %2743 = vmatpush.msra.mxu0 %v194
  %2744 = vmatpush.msra.mxu0 %v186
  %2745 = vmatpush.msra.mxu0 %v178
  %2746 = vmatpush.msra.mxu0 %v170
  %2747 = vmatpush.msra.mxu0 %v162
  %2748 = vmatpush.msra.mxu0 %v154
  %2749 = vmatmul.f32.gmra.mxu0 %v2598
  %v2750 = vpop.f32.mrf.mxu0
  %v2751 = vadd.f32 %v2731, %v2750
  %2752 = vdwg.mxu0
  %2753 = vmatpush.msra.mxu0 %v147
  %2754 = vmatpush.msra.mxu0 %v139
  %2755 = vmatpush.msra.mxu0 %v131
  %2756 = vmatpush.msra.mxu0 %v123
  %2757 = vmatpush.msra.mxu0 %v115
  %2758 = vmatpush.msra.mxu0 %v107
  %2759 = vmatpush.msra.mxu0 %v99
  %2760 = vmatpush.msra.mxu0 %v91
  %2761 = vmatpush.msra.mxu0 %v83
  %2762 = vmatpush.msra.mxu0 %v75
  %2763 = vmatpush.msra.mxu0 %v67
  %2764 = vmatpush.msra.mxu0 %v59
  %2765 = vmatpush.msra.mxu0 %v51
  %2766 = vmatpush.msra.mxu0 %v43
  %2767 = vmatpush.msra.mxu0 %v35
  %2768 = vmatpush.msra.mxu0 %v27
  %2769 = vmatmul.f32.gmra.mxu0 %v2672
  %v2770 = vpop.f32.mrf.mxu0
  %v2771 = vadd.f32 0.0, %v2770
  %2772 = vdwg.mxu0
  %2773 = vmatpush.msra.mxu0 %v275
  %2774 = vmatpush.msra.mxu0 %v267
  %2775 = vmatpush.msra.mxu0 %v259
  %2776 = vmatpush.msra.mxu0 %v251
  %2777 = vmatpush.msra.mxu0 %v243
  %2778 = vmatpush.msra.mxu0 %v235
  %2779 = vmatpush.msra.mxu0 %v227
  %2780 = vmatpush.msra.mxu0 %v219
  %2781 = vmatpush.msra.mxu0 %v211
  %2782 = vmatpush.msra.mxu0 %v203
  %2783 = vmatpush.msra.mxu0 %v195
  %2784 = vmatpush.msra.mxu0 %v187
  %2785 = vmatpush.msra.mxu0 %v179
  %2786 = vmatpush.msra.mxu0 %v171
  %2787 = vmatpush.msra.mxu0 %v163
  %2788 = vmatpush.msra.mxu0 %v155
  %2789 = vmatmul.f32.gmra.mxu0 %v2598
  %v2790 = vpop.f32.mrf.mxu0
  %v2791 = vadd.f32 %v2771, %v2790
  %2792 = vdwg.mxu0
  %2793 = vmatpush.msra.mxu0 %v148
  %2794 = vmatpush.msra.mxu0 %v140
  %2795 = vmatpush.msra.mxu0 %v132
  %2796 = vmatpush.msra.mxu0 %v124
  %2797 = vmatpush.msra.mxu0 %v116
  %2798 = vmatpush.msra.mxu0 %v108
  %2799 = vmatpush.msra.mxu0 %v100
  %2800 = vmatpush.msra.mxu0 %v92
  %2801 = vmatpush.msra.mxu0 %v84
  %2802 = vmatpush.msra.mxu0 %v76
  %2803 = vmatpush.msra.mxu0 %v68
  %2804 = vmatpush.msra.mxu0 %v60
  %2805 = vmatpush.msra.mxu0 %v52
  %2806 = vmatpush.msra.mxu0 %v44
  %2807 = vmatpush.msra.mxu0 %v36
  %2808 = vmatpush.msra.mxu0 %v28
  %2809 = vmatmul.f32.gmra.mxu0 %v2672
  %v2810 = vpop.f32.mrf.mxu0
  %v2811 = vadd.f32 0.0, %v2810
  %2812 = vdwg.mxu0
  %2813 = vmatpush.msra.mxu0 %v276
  %2814 = vmatpush.msra.mxu0 %v268
  %2815 = vmatpush.msra.mxu0 %v260
  %2816 = vmatpush.msra.mxu0 %v252
  %2817 = vmatpush.msra.mxu0 %v244
  %2818 = vmatpush.msra.mxu0 %v236
  %2819 = vmatpush.msra.mxu0 %v228
  %2820 = vmatpush.msra.mxu0 %v220
  %2821 = vmatpush.msra.mxu0 %v212
  %2822 = vmatpush.msra.mxu0 %v204
  %2823 = vmatpush.msra.mxu0 %v196
  %2824 = vmatpush.msra.mxu0 %v188
  %2825 = vmatpush.msra.mxu0 %v180
  %2826 = vmatpush.msra.mxu0 %v172
  %2827 = vmatpush.msra.mxu0 %v164
  %2828 = vmatpush.msra.mxu0 %v156
  %2829 = vmatmul.f32.gmra.mxu0 %v2598
  %v2830 = vpop.f32.mrf.mxu0
  %v2831 = vadd.f32 %v2811, %v2830
  %2832 = vdwg.mxu0
  %2833 = vmatpush.msra.mxu0 %v149
  %2834 = vmatpush.msra.mxu0 %v141
  %2835 = vmatpush.msra.mxu0 %v133
  %2836 = vmatpush.msra.mxu0 %v125
  %2837 = vmatpush.msra.mxu0 %v117
  %2838 = vmatpush.msra.mxu0 %v109
  %2839 = vmatpush.msra.mxu0 %v101
  %2840 = vmatpush.msra.mxu0 %v93
  %2841 = vmatpush.msra.mxu0 %v85
  %2842 = vmatpush.msra.mxu0 %v77
  %2843 = vmatpush.msra.mxu0 %v69
  %2844 = vmatpush.msra.mxu0 %v61
  %2845 = vmatpush.msra.mxu0 %v53
  %2846 = vmatpush.msra.mxu0 %v45
  %2847 = vmatpush.msra.mxu0 %v37
  %2848 = vmatpush.msra.mxu0 %v29
  %2849 = vmatmul.f32.gmra.mxu0 %v2672
  %v2850 = vpop.f32.mrf.mxu0
  %v2851 = vadd.f32 0.0, %v2850
  %2852 = vdwg.mxu0
  %2853 = vmatpush.msra.mxu0 %v277
  %2854 = vmatpush.msra.mxu0 %v269
  %2855 = vmatpush.msra.mxu0 %v261
  %2856 = vmatpush.msra.mxu0 %v253
  %2857 = vmatpush.msra.mxu0 %v245
  %2858 = vmatpush.msra.mxu0 %v237
  %2859 = vmatpush.msra.mxu0 %v229
  %2860 = vmatpush.msra.mxu0 %v221
  %2861 = vmatpush.msra.mxu0 %v213
  %2862 = vmatpush.msra.mxu0 %v205
  %2863 = vmatpush.msra.mxu0 %v197
  %2864 = vmatpush.msra.mxu0 %v189
  %2865 = vmatpush.msra.mxu0 %v181
  %2866 = vmatpush.msra.mxu0 %v173
  %2867 = vmatpush.msra.mxu0 %v165
  %2868 = vmatpush.msra.mxu0 %v157
  %2869 = vmatmul.f32.gmra.mxu0 %v2598
  %v2870 = vpop.f32.mrf.mxu0
  %v2871 = vadd.f32 %v2851, %v2870
  %2872 = vdwg.mxu0
  %2873 = vmatpush.msra.mxu0 %v150
  %2874 = vmatpush.msra.mxu0 %v142
  %2875 = vmatpush.msra.mxu0 %v134
  %2876 = vmatpush.msra.mxu0 %v126
  %2877 = vmatpush.msra.mxu0 %v118
  %2878 = vmatpush.msra.mxu0 %v110
  %2879 = vmatpush.msra.mxu0 %v102
  %2880 = vmatpush.msra.mxu0 %v94
  %2881 = vmatpush.msra.mxu0 %v86
  %2882 = vmatpush.msra.mxu0 %v78
  %2883 = vmatpush.msra.mxu0 %v70
  %2884 = vmatpush.msra.mxu0 %v62
  %2885 = vmatpush.msra.mxu0 %v54
  %2886 = vmatpush.msra.mxu0 %v46
  %2887 = vmatpush.msra.mxu0 %v38
  %2888 = vmatpush.msra.mxu0 %v30
  %2889 = vmatmul.f32.gmra.mxu0 %v2672
  %v2890 = vpop.f32.mrf.mxu0
  %v2891 = vadd.f32 0.0, %v2890
  %2892 = vdwg.mxu0
  %2893 = vmatpush.msra.mxu0 %v278
  %2894 = vmatpush.msra.mxu0 %v270
  %2895 = vmatpush.msra.mxu0 %v262
  %2896 = vmatpush.msra.mxu0 %v254
  %2897 = vmatpush.msra.mxu0 %v246
  %2898 = vmatpush.msra.mxu0 %v238
  %2899 = vmatpush.msra.mxu0 %v230
  %2900 = vmatpush.msra.mxu0 %v222
  %2901 = vmatpush.msra.mxu0 %v214
  %2902 = vmatpush.msra.mxu0 %v206
  %2903 = vmatpush.msra.mxu0 %v198
  %2904 = vmatpush.msra.mxu0 %v190
  %2905 = vmatpush.msra.mxu0 %v182
  %2906 = vmatpush.msra.mxu0 %v174
  %2907 = vmatpush.msra.mxu0 %v166
  %2908 = vmatpush.msra.mxu0 %v158
  %2909 = vmatmul.f32.gmra.mxu0 %v2598
  %v2910 = vpop.f32.mrf.mxu0
  %v2911 = vadd.f32 %v2891, %v2910
  %2912 = vdwg.mxu0
  %2913 = vmatpush.msra.mxu0 %v151
  %2914 = vmatpush.msra.mxu0 %v143
  %2915 = vmatpush.msra.mxu0 %v135
  %2916 = vmatpush.msra.mxu0 %v127
  %2917 = vmatpush.msra.mxu0 %v119
  %2918 = vmatpush.msra.mxu0 %v111
  %2919 = vmatpush.msra.mxu0 %v103
  %2920 = vmatpush.msra.mxu0 %v95
  %2921 = vmatpush.msra.mxu0 %v87
  %2922 = vmatpush.msra.mxu0 %v79
  %2923 = vmatpush.msra.mxu0 %v71
  %2924 = vmatpush.msra.mxu0 %v63
  %2925 = vmatpush.msra.mxu0 %v55
  %2926 = vmatpush.msra.mxu0 %v47
  %2927 = vmatpush.msra.mxu0 %v39
  %2928 = vmatpush.msra.mxu0 %v31
  %2929 = vmatmul.f32.gmra.mxu0 %v2672
  %v2930 = vpop.f32.mrf.mxu0
  %v2931 = vadd.f32 0.0, %v2930
  %2932 = vdwg.mxu0
  %2933 = vmatpush.msra.mxu0 %v279
  %2934 = vmatpush.msra.mxu0 %v271
  %2935 = vmatpush.msra.mxu0 %v263
  %2936 = vmatpush.msra.mxu0 %v255
  %2937 = vmatpush.msra.mxu0 %v247
  %2938 = vmatpush.msra.mxu0 %v239
  %2939 = vmatpush.msra.mxu0 %v231
  %2940 = vmatpush.msra.mxu0 %v223
  %2941 = vmatpush.msra.mxu0 %v215
  %2942 = vmatpush.msra.mxu0 %v207
  %2943 = vmatpush.msra.mxu0 %v199
  %2944 = vmatpush.msra.mxu0 %v191
  %2945 = vmatpush.msra.mxu0 %v183
  %2946 = vmatpush.msra.mxu0 %v175
  %2947 = vmatpush.msra.mxu0 %v167
  %2948 = vmatpush.msra.mxu0 %v159
  %2949 = vmatmul.f32.gmra.mxu0 %v2598
  %v2950 = vpop.f32.mrf.mxu0
  %v2951 = vadd.f32 %v2931, %v2950
  %2952 = vdwg.mxu0
  %2953 = vmatpush.msra.mxu0 %v152
  %2954 = vmatpush.msra.mxu0 %v144
  %2955 = vmatpush.msra.mxu0 %v136
  %2956 = vmatpush.msra.mxu0 %v128
  %2957 = vmatpush.msra.mxu0 %v120
  %2958 = vmatpush.msra.mxu0 %v112
  %2959 = vmatpush.msra.mxu0 %v104
  %2960 = vmatpush.msra.mxu0 %v96
  %2961 = vmatpush.msra.mxu0 %v88
  %2962 = vmatpush.msra.mxu0 %v80
  %2963 = vmatpush.msra.mxu0 %v72
  %2964 = vmatpush.msra.mxu0 %v64
  %2965 = vmatpush.msra.mxu0 %v56
  %2966 = vmatpush.msra.mxu0 %v48
  %2967 = vmatpush.msra.mxu0 %v40
  %2968 = vmatpush.msra.mxu0 %v32
  %2969 = vmatmul.f32.gmra.mxu0 %v2672
  %v2970 = vpop.f32.mrf.mxu0
  %v2971 = vadd.f32 0.0, %v2970
  %2972 = vdwg.mxu0
  %2973 = vmatpush.msra.mxu0 %v280
  %2974 = vmatpush.msra.mxu0 %v272
  %2975 = vmatpush.msra.mxu0 %v264
  %2976 = vmatpush.msra.mxu0 %v256
  %2977 = vmatpush.msra.mxu0 %v248
  %2978 = vmatpush.msra.mxu0 %v240
  %2979 = vmatpush.msra.mxu0 %v232
  %2980 = vmatpush.msra.mxu0 %v224
  %2981 = vmatpush.msra.mxu0 %v216
  %2982 = vmatpush.msra.mxu0 %v208
  %2983 = vmatpush.msra.mxu0 %v200
  %2984 = vmatpush.msra.mxu0 %v192
  %2985 = vmatpush.msra.mxu0 %v184
  %2986 = vmatpush.msra.mxu0 %v176
  %2987 = vmatpush.msra.mxu0 %v168
  %2988 = vmatpush.msra.mxu0 %v160
  %2989 = vmatmul.f32.gmra.mxu0 %v2598
  %v2990 = vpop.f32.mrf.mxu0
  %v2991 = vadd.f32 %v2971, %v2990
  %2992 = vdwg.mxu0
  %v2993 = vadd.f32 %v2871, %v283
  %v2994 = vadd.f32 %v2911, %v284
  %v2995 = vadd.f32 %v2951, %v285
  %v2996 = vadd.f32 %v2991, %v286
  %v2997 = vxor.u32 %v2993, 2147483648
  %v2998 = vxor.u32 %v2994, 2147483648
  %v2999 = vxor.u32 %v2995, 2147483648
  %v3000 = vmul.f32 %v2997, 1.442695
  %v3001 = vpow.pop %v3000
  %v3002 = vmul.f32 %v2998, 1.442695
  %v3003 = vpow.pop %v3002
  %v3004 = vmul.f32 %v2999, 1.442695
  %v3005 = vpow.pop %v3004
  %v3006 = vadd.f32 %v3001, 1.0
  %v3007 = vadd.f32 %v3003, 1.0
  %v3008 = vadd.f32 %v3005, 1.0
  %v3009 = vrcp.pop %v3006
  %v3010 = vmul.f32 %v3006, %v3009
  %v3011 = vsub.f32 1.0, %v3010
  %v3012 = vmul.f32 %v3009, %v3011
  %v3013 = vadd.f32 %v3009, %v3012
  %vm3014 = vweird.f32 %v3006
  %vm3015 = vweird.f32 %v3009
  %vm3016 = vmor %vm3014, %vm3015
  %v3017 = vsel %vm3016, %v3009, %v3013
  %v3018 = vand.u32 2147483647, %v3006
  %vm3019 = vcmp.eq.f32.partialorder %v3018, 8.507059e+37
  %v3020 = vand.u32 %v3006, 2147483648
  %v3021 = vor.u32 1.1754944e-38, %v3020
  %v3022 = vsel %vm3019, %v3021, %v3017
  %v3023 = vmul.f32 1.0, %v3022
  %v3024 = vrcp.pop %v3007
  %v3025 = vmul.f32 %v3007, %v3024
  %v3026 = vsub.f32 1.0, %v3025
  %v3027 = vmul.f32 %v3024, %v3026
  %v3028 = vadd.f32 %v3024, %v3027
  %vm3029 = vweird.f32 %v3007
  %vm3030 = vweird.f32 %v3024
  %vm3031 = vmor %vm3029, %vm3030
  %v3032 = vsel %vm3031, %v3024, %v3028
  %v3033 = vand.u32 2147483647, %v3007
  %vm3034 = vcmp.eq.f32.partialorder %v3033, 8.507059e+37
  %v3035 = vand.u32 %v3007, 2147483648
  %v3036 = vor.u32 1.1754944e-38, %v3035
  %v3037 = vsel %vm3034, %v3036, %v3032
  %v3038 = vmul.f32 1.0, %v3037
  %v3039 = vrcp.pop %v3008
  %v3040 = vmul.f32 %v3008, %v3039
  %v3041 = vsub.f32 1.0, %v3040
  %v3042 = vmul.f32 %v3039, %v3041
  %v3043 = vadd.f32 %v3039, %v3042
  %vm3044 = vweird.f32 %v3008
  %vm3045 = vweird.f32 %v3039
  %vm3046 = vmor %vm3044, %vm3045
  %v3047 = vsel %vm3046, %v3039, %v3043
  %v3048 = vand.u32 2147483647, %v3008
  %vm3049 = vcmp.eq.f32.partialorder %v3048, 8.507059e+37
  %v3050 = vand.u32 %v3008, 2147483648
  %v3051 = vor.u32 1.1754944e-38, %v3050
  %v3052 = vsel %vm3049, %v3051, %v3047
  %v3053 = vmul.f32 1.0, %v3052
  %v3054 = vtanh.pop %v2996
  %v3055 = vmul.f32 %v3038, %v2596
  %v3056 = vmul.f32 %v3023, %v3054
  %v3057 = vadd.f32 %v3055, %v3056
  %v3058 = vtanh.pop %v3057
  %v3059 = vmul.f32 %v3053, %v3058
  %s3060 = scalar_lea.vmem %s3, 40
  %3061 = vst [vmem:[%s3060] sm:$0xff] %v3059
  %s3062 = scalar_lea.vmem %s0, 192
  %v3063 = vld [vmem:[%s3062] sm:$0xff]
  %v3064 = vld [vmem:[%s3062 + $0x8] sm:$0xff]
  %v3065 = vld [vmem:[%s3062 + $0x10] sm:$0xff]
  %v3066 = vld [vmem:[%s3062 + $0x18] sm:$0xff]
  %v3067 = vadd.f32 %v3063, %v2711
  %v3068 = vadd.f32 %v3064, %v2751
  %v3069 = vadd.f32 %v3065, %v2791
  %v3070 = vadd.f32 %v3066, %v2831
  %v3071 = vxor.u32 %v3067, 2147483648
  %v3072 = vxor.u32 %v3068, 2147483648
  %v3073 = vxor.u32 %v3069, 2147483648
  %v3074 = vmul.f32 %v3071, 1.442695
  %v3075 = vpow.pop %v3074
  %v3076 = vmul.f32 %v3072, 1.442695
  %v3077 = vpow.pop %v3076
  %v3078 = vmul.f32 %v3073, 1.442695
  %v3079 = vpow.pop %v3078
  %v3080 = vadd.f32 %v3075, 1.0
  %v3081 = vadd.f32 %v3077, 1.0
  %v3082 = vadd.f32 %v3079, 1.0
  %v3083 = vrcp.pop %v3080
  %v3084 = vmul.f32 %v3080, %v3083
  %v3085 = vsub.f32 1.0, %v3084
  %v3086 = vmul.f32 %v3083, %v3085
  %v3087 = vadd.f32 %v3083, %v3086
  %vm3088 = vweird.f32 %v3080
  %vm3089 = vweird.f32 %v3083
  %vm3090 = vmor %vm3088, %vm3089
  %v3091 = vsel %vm3090, %v3083, %v3087
  %v3092 = vand.u32 2147483647, %v3080
  %vm3093 = vcmp.eq.f32.partialorder %v3092, 8.507059e+37
  %v3094 = vand.u32 %v3080, 2147483648
  %v3095 = vor.u32 1.1754944e-38, %v3094
  %v3096 = vsel %vm3093, %v3095, %v3091
  %v3097 = vmul.f32 1.0, %v3096
  %v3098 = vrcp.pop %v3081
  %v3099 = vmul.f32 %v3081, %v3098
  %v3100 = vsub.f32 1.0, %v3099
  %v3101 = vmul.f32 %v3098, %v3100
  %v3102 = vadd.f32 %v3098, %v3101
  %vm3103 = vweird.f32 %v3081
  %vm3104 = vweird.f32 %v3098
  %vm3105 = vmor %vm3103, %vm3104
  %v3106 = vsel %vm3105, %v3098, %v3102
  %v3107 = vand.u32 2147483647, %v3081
  %vm3108 = vcmp.eq.f32.partialorder %v3107, 8.507059e+37
  %v3109 = vand.u32 %v3081, 2147483648
  %v3110 = vor.u32 1.1754944e-38, %v3109
  %v3111 = vsel %vm3108, %v3110, %v3106
  %v3112 = vmul.f32 1.0, %v3111
  %v3113 = vrcp.pop %v3082
  %v3114 = vmul.f32 %v3082, %v3113
  %v3115 = vsub.f32 1.0, %v3114
  %v3116 = vmul.f32 %v3113, %v3115
  %v3117 = vadd.f32 %v3113, %v3116
  %vm3118 = vweird.f32 %v3082
  %vm3119 = vweird.f32 %v3113
  %vm3120 = vmor %vm3118, %vm3119
  %v3121 = vsel %vm3120, %v3113, %v3117
  %v3122 = vand.u32 2147483647, %v3082
  %vm3123 = vcmp.eq.f32.partialorder %v3122, 8.507059e+37
  %v3124 = vand.u32 %v3082, 2147483648
  %v3125 = vor.u32 1.1754944e-38, %v3124
  %v3126 = vsel %vm3123, %v3125, %v3121
  %v3127 = vmul.f32 1.0, %v3126
  %v3128 = vtanh.pop %v3070
  %v3129 = vmul.f32 %v3112, %v2670
  %v3130 = vmul.f32 %v3097, %v3128
  %v3131 = vadd.f32 %v3129, %v3130
  %v3132 = vtanh.pop %v3131
  %v3133 = vmul.f32 %v3127, %v3132
  %3134 = vmatpush.msra.mxu0 %v145
  %3135 = vmatpush.msra.mxu0 %v137
  %3136 = vmatpush.msra.mxu0 %v129
  %3137 = vmatpush.msra.mxu0 %v121
  %3138 = vmatpush.msra.mxu0 %v113
  %3139 = vmatpush.msra.mxu0 %v105
  %3140 = vmatpush.msra.mxu0 %v97
  %3141 = vmatpush.msra.mxu0 %v89
  %3142 = vmatpush.msra.mxu0 %v81
  %3143 = vmatpush.msra.mxu0 %v73
  %3144 = vmatpush.msra.mxu0 %v65
  %3145 = vmatpush.msra.mxu0 %v57
  %3146 = vmatpush.msra.mxu0 %v49
  %3147 = vmatpush.msra.mxu0 %v41
  %3148 = vmatpush.msra.mxu0 %v33
  %3149 = vmatpush.msra.mxu0 %v25
  %3150 = vmatmul.f32.gmra.mxu0 %v3133
  %v3151 = vpop.f32.mrf.mxu0
  %v3152 = vadd.f32 0.0, %v3151
  %3153 = vdwg.mxu0
  %3154 = vmatpush.msra.mxu0 %v273
  %3155 = vmatpush.msra.mxu0 %v265
  %3156 = vmatpush.msra.mxu0 %v257
  %3157 = vmatpush.msra.mxu0 %v249
  %3158 = vmatpush.msra.mxu0 %v241
  %3159 = vmatpush.msra.mxu0 %v233
  %3160 = vmatpush.msra.mxu0 %v225
  %3161 = vmatpush.msra.mxu0 %v217
  %3162 = vmatpush.msra.mxu0 %v209
  %3163 = vmatpush.msra.mxu0 %v201
  %3164 = vmatpush.msra.mxu0 %v193
  %3165 = vmatpush.msra.mxu0 %v185
  %3166 = vmatpush.msra.mxu0 %v177
  %3167 = vmatpush.msra.mxu0 %v169
  %3168 = vmatpush.msra.mxu0 %v161
  %3169 = vmatpush.msra.mxu0 %v153
  %3170 = vmatmul.f32.gmra.mxu0 %v3059
  %v3171 = vpop.f32.mrf.mxu0
  %v3172 = vadd.f32 %v3152, %v3171
  %3173 = vdwg.mxu0
  %3174 = vmatpush.msra.mxu0 %v146
  %3175 = vmatpush.msra.mxu0 %v138
  %3176 = vmatpush.msra.mxu0 %v130
  %3177 = vmatpush.msra.mxu0 %v122
  %3178 = vmatpush.msra.mxu0 %v114
  %3179 = vmatpush.msra.mxu0 %v106
  %3180 = vmatpush.msra.mxu0 %v98
  %3181 = vmatpush.msra.mxu0 %v90
  %3182 = vmatpush.msra.mxu0 %v82
  %3183 = vmatpush.msra.mxu0 %v74
  %3184 = vmatpush.msra.mxu0 %v66
  %3185 = vmatpush.msra.mxu0 %v58
  %3186 = vmatpush.msra.mxu0 %v50
  %3187 = vmatpush.msra.mxu0 %v42
  %3188 = vmatpush.msra.mxu0 %v34
  %3189 = vmatpush.msra.mxu0 %v26
  %3190 = vmatmul.f32.gmra.mxu0 %v3133
  %v3191 = vpop.f32.mrf.mxu0
  %v3192 = vadd.f32 0.0, %v3191
  %3193 = vdwg.mxu0
  %3194 = vmatpush.msra.mxu0 %v274
  %3195 = vmatpush.msra.mxu0 %v266
  %3196 = vmatpush.msra.mxu0 %v258
  %3197 = vmatpush.msra.mxu0 %v250
  %3198 = vmatpush.msra.mxu0 %v242
  %3199 = vmatpush.msra.mxu0 %v234
  %3200 = vmatpush.msra.mxu0 %v226
  %3201 = vmatpush.msra.mxu0 %v218
  %3202 = vmatpush.msra.mxu0 %v210
  %3203 = vmatpush.msra.mxu0 %v202
  %3204 = vmatpush.msra.mxu0 %v194
  %3205 = vmatpush.msra.mxu0 %v186
  %3206 = vmatpush.msra.mxu0 %v178
  %3207 = vmatpush.msra.mxu0 %v170
  %3208 = vmatpush.msra.mxu0 %v162
  %3209 = vmatpush.msra.mxu0 %v154
  %3210 = vmatmul.f32.gmra.mxu0 %v3059
  %v3211 = vpop.f32.mrf.mxu0
  %v3212 = vadd.f32 %v3192, %v3211
  %3213 = vdwg.mxu0
  %3214 = vmatpush.msra.mxu0 %v147
  %3215 = vmatpush.msra.mxu0 %v139
  %3216 = vmatpush.msra.mxu0 %v131
  %3217 = vmatpush.msra.mxu0 %v123
  %3218 = vmatpush.msra.mxu0 %v115
  %3219 = vmatpush.msra.mxu0 %v107
  %3220 = vmatpush.msra.mxu0 %v99
  %3221 = vmatpush.msra.mxu0 %v91
  %3222 = vmatpush.msra.mxu0 %v83
  %3223 = vmatpush.msra.mxu0 %v75
  %3224 = vmatpush.msra.mxu0 %v67
  %3225 = vmatpush.msra.mxu0 %v59
  %3226 = vmatpush.msra.mxu0 %v51
  %3227 = vmatpush.msra.mxu0 %v43
  %3228 = vmatpush.msra.mxu0 %v35
  %3229 = vmatpush.msra.mxu0 %v27
  %3230 = vmatmul.f32.gmra.mxu0 %v3133
  %v3231 = vpop.f32.mrf.mxu0
  %v3232 = vadd.f32 0.0, %v3231
  %3233 = vdwg.mxu0
  %3234 = vmatpush.msra.mxu0 %v275
  %3235 = vmatpush.msra.mxu0 %v267
  %3236 = vmatpush.msra.mxu0 %v259
  %3237 = vmatpush.msra.mxu0 %v251
  %3238 = vmatpush.msra.mxu0 %v243
  %3239 = vmatpush.msra.mxu0 %v235
  %3240 = vmatpush.msra.mxu0 %v227
  %3241 = vmatpush.msra.mxu0 %v219
  %3242 = vmatpush.msra.mxu0 %v211
  %3243 = vmatpush.msra.mxu0 %v203
  %3244 = vmatpush.msra.mxu0 %v195
  %3245 = vmatpush.msra.mxu0 %v187
  %3246 = vmatpush.msra.mxu0 %v179
  %3247 = vmatpush.msra.mxu0 %v171
  %3248 = vmatpush.msra.mxu0 %v163
  %3249 = vmatpush.msra.mxu0 %v155
  %3250 = vmatmul.f32.gmra.mxu0 %v3059
  %v3251 = vpop.f32.mrf.mxu0
  %v3252 = vadd.f32 %v3232, %v3251
  %3253 = vdwg.mxu0
  %3254 = vmatpush.msra.mxu0 %v148
  %3255 = vmatpush.msra.mxu0 %v140
  %3256 = vmatpush.msra.mxu0 %v132
  %3257 = vmatpush.msra.mxu0 %v124
  %3258 = vmatpush.msra.mxu0 %v116
  %3259 = vmatpush.msra.mxu0 %v108
  %3260 = vmatpush.msra.mxu0 %v100
  %3261 = vmatpush.msra.mxu0 %v92
  %3262 = vmatpush.msra.mxu0 %v84
  %3263 = vmatpush.msra.mxu0 %v76
  %3264 = vmatpush.msra.mxu0 %v68
  %3265 = vmatpush.msra.mxu0 %v60
  %3266 = vmatpush.msra.mxu0 %v52
  %3267 = vmatpush.msra.mxu0 %v44
  %3268 = vmatpush.msra.mxu0 %v36
  %3269 = vmatpush.msra.mxu0 %v28
  %3270 = vmatmul.f32.gmra.mxu0 %v3133
  %v3271 = vpop.f32.mrf.mxu0
  %v3272 = vadd.f32 0.0, %v3271
  %3273 = vdwg.mxu0
  %3274 = vmatpush.msra.mxu0 %v276
  %3275 = vmatpush.msra.mxu0 %v268
  %3276 = vmatpush.msra.mxu0 %v260
  %3277 = vmatpush.msra.mxu0 %v252
  %3278 = vmatpush.msra.mxu0 %v244
  %3279 = vmatpush.msra.mxu0 %v236
  %3280 = vmatpush.msra.mxu0 %v228
  %3281 = vmatpush.msra.mxu0 %v220
  %3282 = vmatpush.msra.mxu0 %v212
  %3283 = vmatpush.msra.mxu0 %v204
  %3284 = vmatpush.msra.mxu0 %v196
  %3285 = vmatpush.msra.mxu0 %v188
  %3286 = vmatpush.msra.mxu0 %v180
  %3287 = vmatpush.msra.mxu0 %v172
  %3288 = vmatpush.msra.mxu0 %v164
  %3289 = vmatpush.msra.mxu0 %v156
  %3290 = vmatmul.f32.gmra.mxu0 %v3059
  %v3291 = vpop.f32.mrf.mxu0
  %v3292 = vadd.f32 %v3272, %v3291
  %3293 = vdwg.mxu0
  %3294 = vmatpush.msra.mxu0 %v149
  %3295 = vmatpush.msra.mxu0 %v141
  %3296 = vmatpush.msra.mxu0 %v133
  %3297 = vmatpush.msra.mxu0 %v125
  %3298 = vmatpush.msra.mxu0 %v117
  %3299 = vmatpush.msra.mxu0 %v109
  %3300 = vmatpush.msra.mxu0 %v101
  %3301 = vmatpush.msra.mxu0 %v93
  %3302 = vmatpush.msra.mxu0 %v85
  %3303 = vmatpush.msra.mxu0 %v77
  %3304 = vmatpush.msra.mxu0 %v69
  %3305 = vmatpush.msra.mxu0 %v61
  %3306 = vmatpush.msra.mxu0 %v53
  %3307 = vmatpush.msra.mxu0 %v45
  %3308 = vmatpush.msra.mxu0 %v37
  %3309 = vmatpush.msra.mxu0 %v29
  %3310 = vmatmul.f32.gmra.mxu0 %v3133
  %v3311 = vpop.f32.mrf.mxu0
  %v3312 = vadd.f32 0.0, %v3311
  %3313 = vdwg.mxu0
  %3314 = vmatpush.msra.mxu0 %v277
  %3315 = vmatpush.msra.mxu0 %v269
  %3316 = vmatpush.msra.mxu0 %v261
  %3317 = vmatpush.msra.mxu0 %v253
  %3318 = vmatpush.msra.mxu0 %v245
  %3319 = vmatpush.msra.mxu0 %v237
  %3320 = vmatpush.msra.mxu0 %v229
  %3321 = vmatpush.msra.mxu0 %v221
  %3322 = vmatpush.msra.mxu0 %v213
  %3323 = vmatpush.msra.mxu0 %v205
  %3324 = vmatpush.msra.mxu0 %v197
  %3325 = vmatpush.msra.mxu0 %v189
  %3326 = vmatpush.msra.mxu0 %v181
  %3327 = vmatpush.msra.mxu0 %v173
  %3328 = vmatpush.msra.mxu0 %v165
  %3329 = vmatpush.msra.mxu0 %v157
  %3330 = vmatmul.f32.gmra.mxu0 %v3059
  %v3331 = vpop.f32.mrf.mxu0
  %v3332 = vadd.f32 %v3312, %v3331
  %3333 = vdwg.mxu0
  %3334 = vmatpush.msra.mxu0 %v150
  %3335 = vmatpush.msra.mxu0 %v142
  %3336 = vmatpush.msra.mxu0 %v134
  %3337 = vmatpush.msra.mxu0 %v126
  %3338 = vmatpush.msra.mxu0 %v118
  %3339 = vmatpush.msra.mxu0 %v110
  %3340 = vmatpush.msra.mxu0 %v102
  %3341 = vmatpush.msra.mxu0 %v94
  %3342 = vmatpush.msra.mxu0 %v86
  %3343 = vmatpush.msra.mxu0 %v78
  %3344 = vmatpush.msra.mxu0 %v70
  %3345 = vmatpush.msra.mxu0 %v62
  %3346 = vmatpush.msra.mxu0 %v54
  %3347 = vmatpush.msra.mxu0 %v46
  %3348 = vmatpush.msra.mxu0 %v38
  %3349 = vmatpush.msra.mxu0 %v30
  %3350 = vmatmul.f32.gmra.mxu0 %v3133
  %v3351 = vpop.f32.mrf.mxu0
  %v3352 = vadd.f32 0.0, %v3351
  %3353 = vdwg.mxu0
  %3354 = vmatpush.msra.mxu0 %v278
  %3355 = vmatpush.msra.mxu0 %v270
  %3356 = vmatpush.msra.mxu0 %v262
  %3357 = vmatpush.msra.mxu0 %v254
  %3358 = vmatpush.msra.mxu0 %v246
  %3359 = vmatpush.msra.mxu0 %v238
  %3360 = vmatpush.msra.mxu0 %v230
  %3361 = vmatpush.msra.mxu0 %v222
  %3362 = vmatpush.msra.mxu0 %v214
  %3363 = vmatpush.msra.mxu0 %v206
  %3364 = vmatpush.msra.mxu0 %v198
  %3365 = vmatpush.msra.mxu0 %v190
  %3366 = vmatpush.msra.mxu0 %v182
  %3367 = vmatpush.msra.mxu0 %v174
  %3368 = vmatpush.msra.mxu0 %v166
  %3369 = vmatpush.msra.mxu0 %v158
  %3370 = vmatmul.f32.gmra.mxu0 %v3059
  %v3371 = vpop.f32.mrf.mxu0
  %v3372 = vadd.f32 %v3352, %v3371
  %3373 = vdwg.mxu0
  %3374 = vmatpush.msra.mxu0 %v151
  %3375 = vmatpush.msra.mxu0 %v143
  %3376 = vmatpush.msra.mxu0 %v135
  %3377 = vmatpush.msra.mxu0 %v127
  %3378 = vmatpush.msra.mxu0 %v119
  %3379 = vmatpush.msra.mxu0 %v111
  %3380 = vmatpush.msra.mxu0 %v103
  %3381 = vmatpush.msra.mxu0 %v95
  %3382 = vmatpush.msra.mxu0 %v87
  %3383 = vmatpush.msra.mxu0 %v79
  %3384 = vmatpush.msra.mxu0 %v71
  %3385 = vmatpush.msra.mxu0 %v63
  %3386 = vmatpush.msra.mxu0 %v55
  %3387 = vmatpush.msra.mxu0 %v47
  %3388 = vmatpush.msra.mxu0 %v39
  %3389 = vmatpush.msra.mxu0 %v31
  %3390 = vmatmul.f32.gmra.mxu0 %v3133
  %v3391 = vpop.f32.mrf.mxu0
  %v3392 = vadd.f32 0.0, %v3391
  %3393 = vdwg.mxu0
  %3394 = vmatpush.msra.mxu0 %v279
  %3395 = vmatpush.msra.mxu0 %v271
  %3396 = vmatpush.msra.mxu0 %v263
  %3397 = vmatpush.msra.mxu0 %v255
  %3398 = vmatpush.msra.mxu0 %v247
  %3399 = vmatpush.msra.mxu0 %v239
  %3400 = vmatpush.msra.mxu0 %v231
  %3401 = vmatpush.msra.mxu0 %v223
  %3402 = vmatpush.msra.mxu0 %v215
  %3403 = vmatpush.msra.mxu0 %v207
  %3404 = vmatpush.msra.mxu0 %v199
  %3405 = vmatpush.msra.mxu0 %v191
  %3406 = vmatpush.msra.mxu0 %v183
  %3407 = vmatpush.msra.mxu0 %v175
  %3408 = vmatpush.msra.mxu0 %v167
  %3409 = vmatpush.msra.mxu0 %v159
  %3410 = vmatmul.f32.gmra.mxu0 %v3059
  %v3411 = vpop.f32.mrf.mxu0
  %v3412 = vadd.f32 %v3392, %v3411
  %3413 = vdwg.mxu0
  %3414 = vmatpush.msra.mxu0 %v152
  %3415 = vmatpush.msra.mxu0 %v144
  %3416 = vmatpush.msra.mxu0 %v136
  %3417 = vmatpush.msra.mxu0 %v128
  %3418 = vmatpush.msra.mxu0 %v120
  %3419 = vmatpush.msra.mxu0 %v112
  %3420 = vmatpush.msra.mxu0 %v104
  %3421 = vmatpush.msra.mxu0 %v96
  %3422 = vmatpush.msra.mxu0 %v88
  %3423 = vmatpush.msra.mxu0 %v80
  %3424 = vmatpush.msra.mxu0 %v72
  %3425 = vmatpush.msra.mxu0 %v64
  %3426 = vmatpush.msra.mxu0 %v56
  %3427 = vmatpush.msra.mxu0 %v48
  %3428 = vmatpush.msra.mxu0 %v40
  %3429 = vmatpush.msra.mxu0 %v32
  %3430 = vmatmul.f32.gmra.mxu0 %v3133
  %v3431 = vpop.f32.mrf.mxu0
  %v3432 = vadd.f32 0.0, %v3431
  %3433 = vdwg.mxu0
  %3434 = vmatpush.msra.mxu0 %v280
  %3435 = vmatpush.msra.mxu0 %v272
  %3436 = vmatpush.msra.mxu0 %v264
  %3437 = vmatpush.msra.mxu0 %v256
  %3438 = vmatpush.msra.mxu0 %v248
  %3439 = vmatpush.msra.mxu0 %v240
  %3440 = vmatpush.msra.mxu0 %v232
  %3441 = vmatpush.msra.mxu0 %v224
  %3442 = vmatpush.msra.mxu0 %v216
  %3443 = vmatpush.msra.mxu0 %v208
  %3444 = vmatpush.msra.mxu0 %v200
  %3445 = vmatpush.msra.mxu0 %v192
  %3446 = vmatpush.msra.mxu0 %v184
  %3447 = vmatpush.msra.mxu0 %v176
  %3448 = vmatpush.msra.mxu0 %v168
  %3449 = vmatpush.msra.mxu0 %v160
  %3450 = vmatmul.f32.gmra.mxu0 %v3059
  %v3451 = vpop.f32.mrf.mxu0
  %v3452 = vadd.f32 %v3432, %v3451
  %3453 = vdwg.mxu0
  %v3454 = vadd.f32 %v3332, %v283
  %v3455 = vadd.f32 %v3372, %v284
  %v3456 = vadd.f32 %v3412, %v285
  %v3457 = vadd.f32 %v3452, %v286
  %v3458 = vxor.u32 %v3454, 2147483648
  %v3459 = vxor.u32 %v3455, 2147483648
  %v3460 = vxor.u32 %v3456, 2147483648
  %v3461 = vmul.f32 %v3458, 1.442695
  %v3462 = vpow.pop %v3461
  %v3463 = vmul.f32 %v3459, 1.442695
  %v3464 = vpow.pop %v3463
  %v3465 = vmul.f32 %v3460, 1.442695
  %v3466 = vpow.pop %v3465
  %v3467 = vadd.f32 %v3462, 1.0
  %v3468 = vadd.f32 %v3464, 1.0
  %v3469 = vadd.f32 %v3466, 1.0
  %v3470 = vrcp.pop %v3467
  %v3471 = vmul.f32 %v3467, %v3470
  %v3472 = vsub.f32 1.0, %v3471
  %v3473 = vmul.f32 %v3470, %v3472
  %v3474 = vadd.f32 %v3470, %v3473
  %vm3475 = vweird.f32 %v3467
  %vm3476 = vweird.f32 %v3470
  %vm3477 = vmor %vm3475, %vm3476
  %v3478 = vsel %vm3477, %v3470, %v3474
  %v3479 = vand.u32 2147483647, %v3467
  %vm3480 = vcmp.eq.f32.partialorder %v3479, 8.507059e+37
  %v3481 = vand.u32 %v3467, 2147483648
  %v3482 = vor.u32 1.1754944e-38, %v3481
  %v3483 = vsel %vm3480, %v3482, %v3478
  %v3484 = vmul.f32 1.0, %v3483
  %v3485 = vrcp.pop %v3468
  %v3486 = vmul.f32 %v3468, %v3485
  %v3487 = vsub.f32 1.0, %v3486
  %v3488 = vmul.f32 %v3485, %v3487
  %v3489 = vadd.f32 %v3485, %v3488
  %vm3490 = vweird.f32 %v3468
  %vm3491 = vweird.f32 %v3485
  %vm3492 = vmor %vm3490, %vm3491
  %v3493 = vsel %vm3492, %v3485, %v3489
  %v3494 = vand.u32 2147483647, %v3468
  %vm3495 = vcmp.eq.f32.partialorder %v3494, 8.507059e+37
  %v3496 = vand.u32 %v3468, 2147483648
  %v3497 = vor.u32 1.1754944e-38, %v3496
  %v3498 = vsel %vm3495, %v3497, %v3493
  %v3499 = vmul.f32 1.0, %v3498
  %v3500 = vrcp.pop %v3469
  %v3501 = vmul.f32 %v3469, %v3500
  %v3502 = vsub.f32 1.0, %v3501
  %v3503 = vmul.f32 %v3500, %v3502
  %v3504 = vadd.f32 %v3500, %v3503
  %vm3505 = vweird.f32 %v3469
  %vm3506 = vweird.f32 %v3500
  %vm3507 = vmor %vm3505, %vm3506
  %v3508 = vsel %vm3507, %v3500, %v3504
  %v3509 = vand.u32 2147483647, %v3469
  %vm3510 = vcmp.eq.f32.partialorder %v3509, 8.507059e+37
  %v3511 = vand.u32 %v3469, 2147483648
  %v3512 = vor.u32 1.1754944e-38, %v3511
  %v3513 = vsel %vm3510, %v3512, %v3508
  %v3514 = vmul.f32 1.0, %v3513
  %v3515 = vtanh.pop %v3457
  %v3516 = vmul.f32 %v3499, %v3057
  %v3517 = vmul.f32 %v3484, %v3515
  %v3518 = vadd.f32 %v3516, %v3517
  %v3519 = vtanh.pop %v3518
  %v3520 = vmul.f32 %v3514, %v3519
  %s3521 = scalar_lea.vmem %s3, 48
  %3522 = vst [vmem:[%s3521] sm:$0xff] %v3520
  %s3523 = scalar_lea.vmem %s0, 224
  %v3524 = vld [vmem:[%s3523] sm:$0xff]
  %v3525 = vld [vmem:[%s3523 + $0x8] sm:$0xff]
  %v3526 = vld [vmem:[%s3523 + $0x10] sm:$0xff]
  %v3527 = vld [vmem:[%s3523 + $0x18] sm:$0xff]
  %v3528 = vadd.f32 %v3524, %v3172
  %v3529 = vadd.f32 %v3525, %v3212
  %v3530 = vadd.f32 %v3526, %v3252
  %v3531 = vadd.f32 %v3527, %v3292
  %v3532 = vxor.u32 %v3528, 2147483648
  %v3533 = vxor.u32 %v3529, 2147483648
  %v3534 = vxor.u32 %v3530, 2147483648
  %v3535 = vmul.f32 %v3532, 1.442695
  %v3536 = vpow.pop %v3535
  %v3537 = vmul.f32 %v3533, 1.442695
  %v3538 = vpow.pop %v3537
  %v3539 = vmul.f32 %v3534, 1.442695
  %v3540 = vpow.pop %v3539
  %v3541 = vadd.f32 %v3536, 1.0
  %v3542 = vadd.f32 %v3538, 1.0
  %v3543 = vadd.f32 %v3540, 1.0
  %v3544 = vrcp.pop %v3541
  %v3545 = vmul.f32 %v3541, %v3544
  %v3546 = vsub.f32 1.0, %v3545
  %v3547 = vmul.f32 %v3544, %v3546
  %v3548 = vadd.f32 %v3544, %v3547
  %vm3549 = vweird.f32 %v3541
  %vm3550 = vweird.f32 %v3544
  %vm3551 = vmor %vm3549, %vm3550
  %v3552 = vsel %vm3551, %v3544, %v3548
  %v3553 = vand.u32 2147483647, %v3541
  %vm3554 = vcmp.eq.f32.partialorder %v3553, 8.507059e+37
  %v3555 = vand.u32 %v3541, 2147483648
  %v3556 = vor.u32 1.1754944e-38, %v3555
  %v3557 = vsel %vm3554, %v3556, %v3552
  %v3558 = vmul.f32 1.0, %v3557
  %v3559 = vrcp.pop %v3542
  %v3560 = vmul.f32 %v3542, %v3559
  %v3561 = vsub.f32 1.0, %v3560
  %v3562 = vmul.f32 %v3559, %v3561
  %v3563 = vadd.f32 %v3559, %v3562
  %vm3564 = vweird.f32 %v3542
  %vm3565 = vweird.f32 %v3559
  %vm3566 = vmor %vm3564, %vm3565
  %v3567 = vsel %vm3566, %v3559, %v3563
  %v3568 = vand.u32 2147483647, %v3542
  %vm3569 = vcmp.eq.f32.partialorder %v3568, 8.507059e+37
  %v3570 = vand.u32 %v3542, 2147483648
  %v3571 = vor.u32 1.1754944e-38, %v3570
  %v3572 = vsel %vm3569, %v3571, %v3567
  %v3573 = vmul.f32 1.0, %v3572
  %v3574 = vrcp.pop %v3543
  %v3575 = vmul.f32 %v3543, %v3574
  %v3576 = vsub.f32 1.0, %v3575
  %v3577 = vmul.f32 %v3574, %v3576
  %v3578 = vadd.f32 %v3574, %v3577
  %vm3579 = vweird.f32 %v3543
  %vm3580 = vweird.f32 %v3574
  %vm3581 = vmor %vm3579, %vm3580
  %v3582 = vsel %vm3581, %v3574, %v3578
  %v3583 = vand.u32 2147483647, %v3543
  %vm3584 = vcmp.eq.f32.partialorder %v3583, 8.507059e+37
  %v3585 = vand.u32 %v3543, 2147483648
  %v3586 = vor.u32 1.1754944e-38, %v3585
  %v3587 = vsel %vm3584, %v3586, %v3582
  %v3588 = vmul.f32 1.0, %v3587
  %v3589 = vtanh.pop %v3531
  %v3590 = vmul.f32 %v3573, %v3131
  %v3591 = vmul.f32 %v3558, %v3589
  %v3592 = vadd.f32 %v3590, %v3591
  %v3593 = vtanh.pop %v3592
  %v3594 = vmul.f32 %v3588, %v3593
  %3595 = vmatpush.msra.mxu0 %v145
  %3596 = vmatpush.msra.mxu0 %v137
  %3597 = vmatpush.msra.mxu0 %v129
  %3598 = vmatpush.msra.mxu0 %v121
  %3599 = vmatpush.msra.mxu0 %v113
  %3600 = vmatpush.msra.mxu0 %v105
  %3601 = vmatpush.msra.mxu0 %v97
  %3602 = vmatpush.msra.mxu0 %v89
  %3603 = vmatpush.msra.mxu0 %v81
  %3604 = vmatpush.msra.mxu0 %v73
  %3605 = vmatpush.msra.mxu0 %v65
  %3606 = vmatpush.msra.mxu0 %v57
  %3607 = vmatpush.msra.mxu0 %v49
  %3608 = vmatpush.msra.mxu0 %v41
  %3609 = vmatpush.msra.mxu0 %v33
  %3610 = vmatpush.msra.mxu0 %v25
  %3611 = vmatmul.f32.gmra.mxu0 %v3594
  %v3612 = vpop.f32.mrf.mxu0
  %v3613 = vadd.f32 0.0, %v3612
  %3614 = vdwg.mxu0
  %3615 = vmatpush.msra.mxu0 %v273
  %3616 = vmatpush.msra.mxu0 %v265
  %3617 = vmatpush.msra.mxu0 %v257
  %3618 = vmatpush.msra.mxu0 %v249
  %3619 = vmatpush.msra.mxu0 %v241
  %3620 = vmatpush.msra.mxu0 %v233
  %3621 = vmatpush.msra.mxu0 %v225
  %3622 = vmatpush.msra.mxu0 %v217
  %3623 = vmatpush.msra.mxu0 %v209
  %3624 = vmatpush.msra.mxu0 %v201
  %3625 = vmatpush.msra.mxu0 %v193
  %3626 = vmatpush.msra.mxu0 %v185
  %3627 = vmatpush.msra.mxu0 %v177
  %3628 = vmatpush.msra.mxu0 %v169
  %3629 = vmatpush.msra.mxu0 %v161
  %3630 = vmatpush.msra.mxu0 %v153
  %3631 = vmatmul.f32.gmra.mxu0 %v3520
  %v3632 = vpop.f32.mrf.mxu0
  %v3633 = vadd.f32 %v3613, %v3632
  %3634 = vdwg.mxu0
  %3635 = vmatpush.msra.mxu0 %v146
  %3636 = vmatpush.msra.mxu0 %v138
  %3637 = vmatpush.msra.mxu0 %v130
  %3638 = vmatpush.msra.mxu0 %v122
  %3639 = vmatpush.msra.mxu0 %v114
  %3640 = vmatpush.msra.mxu0 %v106
  %3641 = vmatpush.msra.mxu0 %v98
  %3642 = vmatpush.msra.mxu0 %v90
  %3643 = vmatpush.msra.mxu0 %v82
  %3644 = vmatpush.msra.mxu0 %v74
  %3645 = vmatpush.msra.mxu0 %v66
  %3646 = vmatpush.msra.mxu0 %v58
  %3647 = vmatpush.msra.mxu0 %v50
  %3648 = vmatpush.msra.mxu0 %v42
  %3649 = vmatpush.msra.mxu0 %v34
  %3650 = vmatpush.msra.mxu0 %v26
  %3651 = vmatmul.f32.gmra.mxu0 %v3594
  %v3652 = vpop.f32.mrf.mxu0
  %v3653 = vadd.f32 0.0, %v3652
  %3654 = vdwg.mxu0
  %3655 = vmatpush.msra.mxu0 %v274
  %3656 = vmatpush.msra.mxu0 %v266
  %3657 = vmatpush.msra.mxu0 %v258
  %3658 = vmatpush.msra.mxu0 %v250
  %3659 = vmatpush.msra.mxu0 %v242
  %3660 = vmatpush.msra.mxu0 %v234
  %3661 = vmatpush.msra.mxu0 %v226
  %3662 = vmatpush.msra.mxu0 %v218
  %3663 = vmatpush.msra.mxu0 %v210
  %3664 = vmatpush.msra.mxu0 %v202
  %3665 = vmatpush.msra.mxu0 %v194
  %3666 = vmatpush.msra.mxu0 %v186
  %3667 = vmatpush.msra.mxu0 %v178
  %3668 = vmatpush.msra.mxu0 %v170
  %3669 = vmatpush.msra.mxu0 %v162
  %3670 = vmatpush.msra.mxu0 %v154
  %3671 = vmatmul.f32.gmra.mxu0 %v3520
  %v3672 = vpop.f32.mrf.mxu0
  %v3673 = vadd.f32 %v3653, %v3672
  %3674 = vdwg.mxu0
  %3675 = vmatpush.msra.mxu0 %v147
  %3676 = vmatpush.msra.mxu0 %v139
  %3677 = vmatpush.msra.mxu0 %v131
  %3678 = vmatpush.msra.mxu0 %v123
  %3679 = vmatpush.msra.mxu0 %v115
  %3680 = vmatpush.msra.mxu0 %v107
  %3681 = vmatpush.msra.mxu0 %v99
  %3682 = vmatpush.msra.mxu0 %v91
  %3683 = vmatpush.msra.mxu0 %v83
  %3684 = vmatpush.msra.mxu0 %v75
  %3685 = vmatpush.msra.mxu0 %v67
  %3686 = vmatpush.msra.mxu0 %v59
  %3687 = vmatpush.msra.mxu0 %v51
  %3688 = vmatpush.msra.mxu0 %v43
  %3689 = vmatpush.msra.mxu0 %v35
  %3690 = vmatpush.msra.mxu0 %v27
  %3691 = vmatmul.f32.gmra.mxu0 %v3594
  %v3692 = vpop.f32.mrf.mxu0
  %v3693 = vadd.f32 0.0, %v3692
  %3694 = vdwg.mxu0
  %3695 = vmatpush.msra.mxu0 %v275
  %3696 = vmatpush.msra.mxu0 %v267
  %3697 = vmatpush.msra.mxu0 %v259
  %3698 = vmatpush.msra.mxu0 %v251
  %3699 = vmatpush.msra.mxu0 %v243
  %3700 = vmatpush.msra.mxu0 %v235
  %3701 = vmatpush.msra.mxu0 %v227
  %3702 = vmatpush.msra.mxu0 %v219
  %3703 = vmatpush.msra.mxu0 %v211
  %3704 = vmatpush.msra.mxu0 %v203
  %3705 = vmatpush.msra.mxu0 %v195
  %3706 = vmatpush.msra.mxu0 %v187
  %3707 = vmatpush.msra.mxu0 %v179
  %3708 = vmatpush.msra.mxu0 %v171
  %3709 = vmatpush.msra.mxu0 %v163
  %3710 = vmatpush.msra.mxu0 %v155
  %3711 = vmatmul.f32.gmra.mxu0 %v3520
  %v3712 = vpop.f32.mrf.mxu0
  %v3713 = vadd.f32 %v3693, %v3712
  %3714 = vdwg.mxu0
  %3715 = vmatpush.msra.mxu0 %v148
  %3716 = vmatpush.msra.mxu0 %v140
  %3717 = vmatpush.msra.mxu0 %v132
  %3718 = vmatpush.msra.mxu0 %v124
  %3719 = vmatpush.msra.mxu0 %v116
  %3720 = vmatpush.msra.mxu0 %v108
  %3721 = vmatpush.msra.mxu0 %v100
  %3722 = vmatpush.msra.mxu0 %v92
  %3723 = vmatpush.msra.mxu0 %v84
  %3724 = vmatpush.msra.mxu0 %v76
  %3725 = vmatpush.msra.mxu0 %v68
  %3726 = vmatpush.msra.mxu0 %v60
  %3727 = vmatpush.msra.mxu0 %v52
  %3728 = vmatpush.msra.mxu0 %v44
  %3729 = vmatpush.msra.mxu0 %v36
  %3730 = vmatpush.msra.mxu0 %v28
  %3731 = vmatmul.f32.gmra.mxu0 %v3594
  %v3732 = vpop.f32.mrf.mxu0
  %v3733 = vadd.f32 0.0, %v3732
  %3734 = vdwg.mxu0
  %3735 = vmatpush.msra.mxu0 %v276
  %3736 = vmatpush.msra.mxu0 %v268
  %3737 = vmatpush.msra.mxu0 %v260
  %3738 = vmatpush.msra.mxu0 %v252
  %3739 = vmatpush.msra.mxu0 %v244
  %3740 = vmatpush.msra.mxu0 %v236
  %3741 = vmatpush.msra.mxu0 %v228
  %3742 = vmatpush.msra.mxu0 %v220
  %3743 = vmatpush.msra.mxu0 %v212
  %3744 = vmatpush.msra.mxu0 %v204
  %3745 = vmatpush.msra.mxu0 %v196
  %3746 = vmatpush.msra.mxu0 %v188
  %3747 = vmatpush.msra.mxu0 %v180
  %3748 = vmatpush.msra.mxu0 %v172
  %3749 = vmatpush.msra.mxu0 %v164
  %3750 = vmatpush.msra.mxu0 %v156
  %3751 = vmatmul.f32.gmra.mxu0 %v3520
  %v3752 = vpop.f32.mrf.mxu0
  %v3753 = vadd.f32 %v3733, %v3752
  %3754 = vdwg.mxu0
  %3755 = vmatpush.msra.mxu0 %v149
  %3756 = vmatpush.msra.mxu0 %v141
  %3757 = vmatpush.msra.mxu0 %v133
  %3758 = vmatpush.msra.mxu0 %v125
  %3759 = vmatpush.msra.mxu0 %v117
  %3760 = vmatpush.msra.mxu0 %v109
  %3761 = vmatpush.msra.mxu0 %v101
  %3762 = vmatpush.msra.mxu0 %v93
  %3763 = vmatpush.msra.mxu0 %v85
  %3764 = vmatpush.msra.mxu0 %v77
  %3765 = vmatpush.msra.mxu0 %v69
  %3766 = vmatpush.msra.mxu0 %v61
  %3767 = vmatpush.msra.mxu0 %v53
  %3768 = vmatpush.msra.mxu0 %v45
  %3769 = vmatpush.msra.mxu0 %v37
  %3770 = vmatpush.msra.mxu0 %v29
  %3771 = vmatmul.f32.gmra.mxu0 %v3594
  %v3772 = vpop.f32.mrf.mxu0
  %v3773 = vadd.f32 0.0, %v3772
  %3774 = vdwg.mxu0
  %3775 = vmatpush.msra.mxu0 %v277
  %3776 = vmatpush.msra.mxu0 %v269
  %3777 = vmatpush.msra.mxu0 %v261
  %3778 = vmatpush.msra.mxu0 %v253
  %3779 = vmatpush.msra.mxu0 %v245
  %3780 = vmatpush.msra.mxu0 %v237
  %3781 = vmatpush.msra.mxu0 %v229
  %3782 = vmatpush.msra.mxu0 %v221
  %3783 = vmatpush.msra.mxu0 %v213
  %3784 = vmatpush.msra.mxu0 %v205
  %3785 = vmatpush.msra.mxu0 %v197
  %3786 = vmatpush.msra.mxu0 %v189
  %3787 = vmatpush.msra.mxu0 %v181
  %3788 = vmatpush.msra.mxu0 %v173
  %3789 = vmatpush.msra.mxu0 %v165
  %3790 = vmatpush.msra.mxu0 %v157
  %3791 = vmatmul.f32.gmra.mxu0 %v3520
  %v3792 = vpop.f32.mrf.mxu0
  %v3793 = vadd.f32 %v3773, %v3792
  %3794 = vdwg.mxu0
  %3795 = vmatpush.msra.mxu0 %v150
  %3796 = vmatpush.msra.mxu0 %v142
  %3797 = vmatpush.msra.mxu0 %v134
  %3798 = vmatpush.msra.mxu0 %v126
  %3799 = vmatpush.msra.mxu0 %v118
  %3800 = vmatpush.msra.mxu0 %v110
  %3801 = vmatpush.msra.mxu0 %v102
  %3802 = vmatpush.msra.mxu0 %v94
  %3803 = vmatpush.msra.mxu0 %v86
  %3804 = vmatpush.msra.mxu0 %v78
  %3805 = vmatpush.msra.mxu0 %v70
  %3806 = vmatpush.msra.mxu0 %v62
  %3807 = vmatpush.msra.mxu0 %v54
  %3808 = vmatpush.msra.mxu0 %v46
  %3809 = vmatpush.msra.mxu0 %v38
  %3810 = vmatpush.msra.mxu0 %v30
  %3811 = vmatmul.f32.gmra.mxu0 %v3594
  %v3812 = vpop.f32.mrf.mxu0
  %v3813 = vadd.f32 0.0, %v3812
  %3814 = vdwg.mxu0
  %3815 = vmatpush.msra.mxu0 %v278
  %3816 = vmatpush.msra.mxu0 %v270
  %3817 = vmatpush.msra.mxu0 %v262
  %3818 = vmatpush.msra.mxu0 %v254
  %3819 = vmatpush.msra.mxu0 %v246
  %3820 = vmatpush.msra.mxu0 %v238
  %3821 = vmatpush.msra.mxu0 %v230
  %3822 = vmatpush.msra.mxu0 %v222
  %3823 = vmatpush.msra.mxu0 %v214
  %3824 = vmatpush.msra.mxu0 %v206
  %3825 = vmatpush.msra.mxu0 %v198
  %3826 = vmatpush.msra.mxu0 %v190
  %3827 = vmatpush.msra.mxu0 %v182
  %3828 = vmatpush.msra.mxu0 %v174
  %3829 = vmatpush.msra.mxu0 %v166
  %3830 = vmatpush.msra.mxu0 %v158
  %3831 = vmatmul.f32.gmra.mxu0 %v3520
  %v3832 = vpop.f32.mrf.mxu0
  %v3833 = vadd.f32 %v3813, %v3832
  %3834 = vdwg.mxu0
  %3835 = vmatpush.msra.mxu0 %v151
  %3836 = vmatpush.msra.mxu0 %v143
  %3837 = vmatpush.msra.mxu0 %v135
  %3838 = vmatpush.msra.mxu0 %v127
  %3839 = vmatpush.msra.mxu0 %v119
  %3840 = vmatpush.msra.mxu0 %v111
  %3841 = vmatpush.msra.mxu0 %v103
  %3842 = vmatpush.msra.mxu0 %v95
  %3843 = vmatpush.msra.mxu0 %v87
  %3844 = vmatpush.msra.mxu0 %v79
  %3845 = vmatpush.msra.mxu0 %v71
  %3846 = vmatpush.msra.mxu0 %v63
  %3847 = vmatpush.msra.mxu0 %v55
  %3848 = vmatpush.msra.mxu0 %v47
  %3849 = vmatpush.msra.mxu0 %v39
  %3850 = vmatpush.msra.mxu0 %v31
  %3851 = vmatmul.f32.gmra.mxu0 %v3594
  %v3852 = vpop.f32.mrf.mxu0
  %v3853 = vadd.f32 0.0, %v3852
  %3854 = vdwg.mxu0
  %3855 = vmatpush.msra.mxu0 %v279
  %3856 = vmatpush.msra.mxu0 %v271
  %3857 = vmatpush.msra.mxu0 %v263
  %3858 = vmatpush.msra.mxu0 %v255
  %3859 = vmatpush.msra.mxu0 %v247
  %3860 = vmatpush.msra.mxu0 %v239
  %3861 = vmatpush.msra.mxu0 %v231
  %3862 = vmatpush.msra.mxu0 %v223
  %3863 = vmatpush.msra.mxu0 %v215
  %3864 = vmatpush.msra.mxu0 %v207
  %3865 = vmatpush.msra.mxu0 %v199
  %3866 = vmatpush.msra.mxu0 %v191
  %3867 = vmatpush.msra.mxu0 %v183
  %3868 = vmatpush.msra.mxu0 %v175
  %3869 = vmatpush.msra.mxu0 %v167
  %3870 = vmatpush.msra.mxu0 %v159
  %3871 = vmatmul.f32.gmra.mxu0 %v3520
  %v3872 = vpop.f32.mrf.mxu0
  %v3873 = vadd.f32 %v3853, %v3872
  %3874 = vdwg.mxu0
  %3875 = vmatpush.msra.mxu0 %v152
  %3876 = vmatpush.msra.mxu0 %v144
  %3877 = vmatpush.msra.mxu0 %v136
  %3878 = vmatpush.msra.mxu0 %v128
  %3879 = vmatpush.msra.mxu0 %v120
  %3880 = vmatpush.msra.mxu0 %v112
  %3881 = vmatpush.msra.mxu0 %v104
  %3882 = vmatpush.msra.mxu0 %v96
  %3883 = vmatpush.msra.mxu0 %v88
  %3884 = vmatpush.msra.mxu0 %v80
  %3885 = vmatpush.msra.mxu0 %v72
  %3886 = vmatpush.msra.mxu0 %v64
  %3887 = vmatpush.msra.mxu0 %v56
  %3888 = vmatpush.msra.mxu0 %v48
  %3889 = vmatpush.msra.mxu0 %v40
  %3890 = vmatpush.msra.mxu0 %v32
  %3891 = vmatmul.f32.gmra.mxu0 %v3594
  %v3892 = vpop.f32.mrf.mxu0
  %v3893 = vadd.f32 0.0, %v3892
  %3894 = vdwg.mxu0
  %3895 = vmatpush.msra.mxu0 %v280
  %3896 = vmatpush.msra.mxu0 %v272
  %3897 = vmatpush.msra.mxu0 %v264
  %3898 = vmatpush.msra.mxu0 %v256
  %3899 = vmatpush.msra.mxu0 %v248
  %3900 = vmatpush.msra.mxu0 %v240
  %3901 = vmatpush.msra.mxu0 %v232
  %3902 = vmatpush.msra.mxu0 %v224
  %3903 = vmatpush.msra.mxu0 %v216
  %3904 = vmatpush.msra.mxu0 %v208
  %3905 = vmatpush.msra.mxu0 %v200
  %3906 = vmatpush.msra.mxu0 %v192
  %3907 = vmatpush.msra.mxu0 %v184
  %3908 = vmatpush.msra.mxu0 %v176
  %3909 = vmatpush.msra.mxu0 %v168
  %3910 = vmatpush.msra.mxu0 %v160
  %3911 = vmatmul.f32.gmra.mxu0 %v3520
  %v3912 = vpop.f32.mrf.mxu0
  %v3913 = vadd.f32 %v3893, %v3912
  %3914 = vdwg.mxu0
  %v3915 = vadd.f32 %v3793, %v283
  %v3916 = vadd.f32 %v3833, %v284
  %v3917 = vadd.f32 %v3873, %v285
  %v3918 = vadd.f32 %v3913, %v286
  %v3919 = vxor.u32 %v3915, 2147483648
  %v3920 = vxor.u32 %v3916, 2147483648
  %v3921 = vxor.u32 %v3917, 2147483648
  %v3922 = vmul.f32 %v3919, 1.442695
  %v3923 = vpow.pop %v3922
  %v3924 = vmul.f32 %v3920, 1.442695
  %v3925 = vpow.pop %v3924
  %v3926 = vmul.f32 %v3921, 1.442695
  %v3927 = vpow.pop %v3926
  %v3928 = vadd.f32 %v3923, 1.0
  %v3929 = vadd.f32 %v3925, 1.0
  %v3930 = vadd.f32 %v3927, 1.0
  %v3931 = vrcp.pop %v3928
  %v3932 = vmul.f32 %v3928, %v3931
  %v3933 = vsub.f32 1.0, %v3932
  %v3934 = vmul.f32 %v3931, %v3933
  %v3935 = vadd.f32 %v3931, %v3934
  %vm3936 = vweird.f32 %v3928
  %vm3937 = vweird.f32 %v3931
  %vm3938 = vmor %vm3936, %vm3937
  %v3939 = vsel %vm3938, %v3931, %v3935
  %v3940 = vand.u32 2147483647, %v3928
  %vm3941 = vcmp.eq.f32.partialorder %v3940, 8.507059e+37
  %v3942 = vand.u32 %v3928, 2147483648
  %v3943 = vor.u32 1.1754944e-38, %v3942
  %v3944 = vsel %vm3941, %v3943, %v3939
  %v3945 = vmul.f32 1.0, %v3944
  %v3946 = vrcp.pop %v3929
  %v3947 = vmul.f32 %v3929, %v3946
  %v3948 = vsub.f32 1.0, %v3947
  %v3949 = vmul.f32 %v3946, %v3948
  %v3950 = vadd.f32 %v3946, %v3949
  %vm3951 = vweird.f32 %v3929
  %vm3952 = vweird.f32 %v3946
  %vm3953 = vmor %vm3951, %vm3952
  %v3954 = vsel %vm3953, %v3946, %v3950
  %v3955 = vand.u32 2147483647, %v3929
  %vm3956 = vcmp.eq.f32.partialorder %v3955, 8.507059e+37
  %v3957 = vand.u32 %v3929, 2147483648
  %v3958 = vor.u32 1.1754944e-38, %v3957
  %v3959 = vsel %vm3956, %v3958, %v3954
  %v3960 = vmul.f32 1.0, %v3959
  %v3961 = vrcp.pop %v3930
  %v3962 = vmul.f32 %v3930, %v3961
  %v3963 = vsub.f32 1.0, %v3962
  %v3964 = vmul.f32 %v3961, %v3963
  %v3965 = vadd.f32 %v3961, %v3964
  %vm3966 = vweird.f32 %v3930
  %vm3967 = vweird.f32 %v3961
  %vm3968 = vmor %vm3966, %vm3967
  %v3969 = vsel %vm3968, %v3961, %v3965
  %v3970 = vand.u32 2147483647, %v3930
  %vm3971 = vcmp.eq.f32.partialorder %v3970, 8.507059e+37
  %v3972 = vand.u32 %v3930, 2147483648
  %v3973 = vor.u32 1.1754944e-38, %v3972
  %v3974 = vsel %vm3971, %v3973, %v3969
  %v3975 = vmul.f32 1.0, %v3974
  %v3976 = vtanh.pop %v3918
  %v3977 = vmul.f32 %v3960, %v3518
  %v3978 = vmul.f32 %v3945, %v3976
  %v3979 = vadd.f32 %v3977, %v3978
  %v3980 = vtanh.pop %v3979
  %v3981 = vmul.f32 %v3975, %v3980
  %s3982 = scalar_lea.vmem %s3, 56
  %3983 = vst [vmem:[%s3982] sm:$0xff] %v3981
  %3984 = vst [vmem:[#allocation2] sm:$0xff] %v3633
  %3985 = vst [vmem:[#allocation2 + $0x8] sm:$0xff] %v3673
  %3986 = vst [vmem:[#allocation2 + $0x10] sm:$0xff] %v3713
  %3987 = vst [vmem:[#allocation2 + $0x18] sm:$0xff] %v3753
  %3988 = vst [vmem:[#allocation3] sm:$0xff] %v3592
  %3989 = vst [vmem:[#allocation4] sm:$0xff] %v3981
  %3990 = vst [vmem:[#allocation5] sm:$0xff] %v3979
  // Predicated region
  $region18: #{decoder_rnn_forward.4} parent=0 // pred_check
    _
  $region19: #{decoder_rnn_forward.4} parent=0 // pred_check_branch
    %3992 = sbr.rel (0) target = $region21
  $region20: #{decoder_rnn_forward.4} parent=0 // pred_region
    _
  $region21: #{decoder_rnn_forward.4} parent=0 // pred_fallthru
    _
  // Predicated region
  $region22: #{decoder_rnn_forward.4} parent=0 // pred_check
    _
  $region23: #{decoder_rnn_forward.4} parent=0 // pred_check_branch
    %3994 = sbr.rel (0) target = $region25
  $region24: #{decoder_rnn_forward.4} parent=0 // pred_region
    _
  $region25: #{decoder_rnn_forward.4} parent=0 // pred_fallthru
    _

</llo_original>
